<compile_context>
chip_gen: v6e
topology: v6e:2x2x1
jax: 0.10.0
libtpu: 0.0.40
codegen_flags: <defaults>
</compile_context>

<pallas_src>
import math
import functools

import jax
import jax.numpy as jnp
from jax import lax
from jax.experimental import pallas as pl
from jax.experimental.pallas import tpu as pltpu
import numpy as np


_VMEM_LIMIT = 32 * 1024 * 1024


# ------------------------------ fused kernel -------------------------------

def _block_kernel(g1_ref, s1_ref, g2_ref, s2_ref, x_ref, cond_ref,
                  wqkv_ref, bqkv_ref, wcq_ref, bcq_ref, wckv_ref, bckv_ref,
                  ln2w_ref, ln2b_ref, wmlp_ref, bmlp_ref, bias_ref, o_ref,
                  *, heads, hd, eps):
    """Whole NCA2D-diffusion block for one batch element."""
    C = heads * hd

    def layernorm(v):
        mu = jnp.mean(v, axis=-1, keepdims=True)
        var = jnp.mean((v - mu) ** 2, axis=-1, keepdims=True)
        return (v - mu) * lax.rsqrt(var + eps)

    def mm(a, w_ref, b_ref):
        # bf16 MXU matmul, f32 accumulate, f32 bias add.
        return jnp.dot(a.astype(jnp.bfloat16), w_ref[...],
                       preferred_element_type=jnp.float32) + b_ref[...]

    def neighborhood_attn(q, k, v):
        # q/k/v: (HW, C) f32 (q already carries the 1/sqrt(hd) scale).
        outs = []
        for h in range(heads):
            sl = slice(h * hd, (h + 1) * hd)
            qh = q[:, sl].astype(jnp.bfloat16)
            kh = k[:, sl].astype(jnp.bfloat16)
            vh = v[:, sl].astype(jnp.bfloat16)
            s = lax.dot_general(qh, kh, (((1,), (1,)), ((), ())),
                                preferred_element_type=jnp.float32)   # (HW, HW)
            s = s + bias_ref[h]            # precomputed masked rpb (-1e30 outside)
            s = s - jnp.max(s, axis=-1, keepdims=True)
            p = jnp.exp(s)
            p = p * pl.reciprocal(jnp.sum(p, axis=-1, keepdims=True), approx=True)
            outs.append(jnp.dot(p.astype(jnp.bfloat16), vh,
                                preferred_element_type=jnp.float32))
        return jnp.concatenate(outs, axis=-1)                         # (HW, C)

    x = x_ref[0].astype(jnp.float32)                                  # (HW, C)

    # ---- AdaLN(ln1) + self_qkv + neighborhood self-attention + residual ----
    xn = layernorm(x) * g1_ref[0] + s1_ref[0]
    qkv = mm(xn, wqkv_ref, bqkv_ref)                                  # (HW, 3C)
    x = x + neighborhood_attn(qkv[:, :C], qkv[:, C:2 * C], qkv[:, 2 * C:])

    # ---- AdaLN(ln1_1) + cross_q / cross_kv + neighborhood cross-attn + res --
    xn = layernorm(x) * g2_ref[0] + s2_ref[0]
    q = mm(xn, wcq_ref, bcq_ref)                                      # (HW, C)
    kv = mm(cond_ref[0], wckv_ref, bckv_ref)                          # (HW, 2C)
    x = x + neighborhood_attn(q, kv[:, :C], kv[:, C:])

    # ---- LayerNorm(ln2, affine) + MLP (dropout = identity) -----------------
    xn = layernorm(x) * ln2w_ref[...] + ln2b_ref[...]
    o_ref[0] = mm(xn, wmlp_ref, bmlp_ref).astype(o_ref.dtype)


def fused_block(x3, cond3, g1, s1, g2, s2, prep, *, num_heads):
    """x3: (B, HW, C); cond3: (B, HW, 128); g/s: (B, 1, C) AdaLN scale/shift."""
    B, HW, C = x3.shape
    Dc = cond3.shape[-1]
    heads = num_heads
    hd = C // heads

    perb = lambda b: (b, 0, 0)
    const2 = lambda b: (0, 0)
    const3 = lambda b: (0, 0, 0)

    in_specs = [
        pl.BlockSpec((1, 1, C), perb),            # g1 = 1 + scale(ln1)
        pl.BlockSpec((1, 1, C), perb),            # s1 = shift(ln1)
        pl.BlockSpec((1, 1, C), perb),            # g2 = 1 + scale(ln1_1)
        pl.BlockSpec((1, 1, C), perb),            # s2 = shift(ln1_1)
        pl.BlockSpec((1, HW, C), perb),           # x  (aliased to the output)
        pl.BlockSpec((1, HW, Dc), perb),          # cond
        pl.BlockSpec((C, 3 * C), const2),         # self_qkv W (bf16, q-scaled)
        pl.BlockSpec((1, 3 * C), const2),         # self_qkv b
        pl.BlockSpec((C, C), const2),             # cross_q W (bf16, scaled)
        pl.BlockSpec((1, C), const2),             # cross_q b
        pl.BlockSpec((Dc, 2 * C), const2),        # cross_kv W (bf16)
        pl.BlockSpec((1, 2 * C), const2),         # cross_kv b
        pl.BlockSpec((1, C), const2),             # ln2 gamma
        pl.BlockSpec((1, C), const2),             # ln2 beta
        pl.BlockSpec((C, C), const2),             # mlp W (bf16)
        pl.BlockSpec((1, C), const2),             # mlp b
        pl.BlockSpec((heads, HW, HW), const3),    # dense masked rpb bias
    ]
    return pl.pallas_call(
        functools.partial(_block_kernel, heads=heads, hd=hd, eps=1e-5),
        out_shape=jax.ShapeDtypeStruct((B, HW, C), x3.dtype),
        grid=(B,),
        in_specs=in_specs,
        out_specs=pl.BlockSpec((1, HW, C), perb),
        input_output_aliases={4: 0},   # residual input x3 is dead after the call
        compiler_params=pltpu.CompilerParams(
            dimension_semantics=("parallel",),
            vmem_limit_bytes=_VMEM_LIMIT),
    )(g1, s1, g2, s2, x3, cond3,
      prep["self_qkv_w"], prep["self_qkv_b"],
      prep["cross_q_w"], prep["cross_q_b"],
      prep["cross_kv_w"], prep["cross_kv_b"],
      prep["ln2_w"], prep["ln2_b"],
      prep["mlp_w"], prep["mlp_b"],
      prep["attn_bias"])


# ----------------------- setup / glue (plain JAX) --------------------------

def _na_window_starts(L, ks):
    nh = ks // 2
    idx = np.arange(L)
    ni = np.maximum(idx - nh, 0) + (idx + nh >= L) * (L - idx - nh - 1)
    pi = nh + (idx < nh) * (nh - idx) + (idx + nh >= L) * (L - idx - 1 - nh)
    return ni.astype(np.int32), pi.astype(np.int32)


def precompute(params, H, W, num_heads, kernel_size):
    """Shape/parameter-dependent tables + scale-folded, pre-cast weights,
    computed ONCE outside the per-step jitted forward."""
    ks = kernel_size
    C = params["cross_q_w"].shape[1]
    hd = C // num_heads
    scale = hd ** (-0.5)
    HW = H * W

    ni_h, pi_h = _na_window_starts(H, ks)
    nj_w, pj_w = _na_window_starts(W, ks)
    lin = np.arange(HW)
    row = lin // W
    col = lin % W

    # Dense additive neighborhood bias: rpb value where key (ki,kj) lies inside
    # query (i,j)'s ks x ks window, -1e30 elsewhere.  (heads, HW, HW) f32.
    ki = row[None, :]
    kj = col[None, :]
    di = ki - ni_h[row][:, None]                  # window-relative key row
    dj = kj - nj_w[col][:, None]                  # window-relative key col
    valid = (di >= 0) & (di < ks) & (dj >= 0) & (dj < ks)
    ri = np.clip(pi_h[row][:, None] + di, 0, 2 * ks - 2)
    rj = np.clip(pj_w[col][:, None] + dj, 0, 2 * ks - 2)
    rpb = np.asarray(params["rpb"]).astype(np.float32)
    attn_bias = np.where(valid[None, :, :], rpb[:, ri, rj],
                         np.float32(-1e30)).astype(np.float32)

    # Fold the 1/sqrt(hd) query scale into the q projection weights/biases and
    # pre-cast MXU-side weights to bf16 (they are consumed as bf16 anyway).
    colscale = np.concatenate([np.full((C,), scale, np.float32),
                               np.ones((2 * C,), np.float32)])
    qkv_w = np.asarray(params["self_qkv_w"]) * colscale[None, :]
    qkv_b = np.asarray(params["self_qkv_b"]) * colscale

    return dict(
        attn_bias=jnp.asarray(attn_bias),
        self_qkv_w=jnp.asarray(qkv_w, jnp.bfloat16),
        self_qkv_b=jnp.asarray(qkv_b, jnp.float32).reshape(1, 3 * C),
        cross_q_w=jnp.asarray(np.asarray(params["cross_q_w"]) * scale, jnp.bfloat16),
        cross_q_b=jnp.asarray(np.asarray(params["cross_q_b"]) * scale,
                              jnp.float32).reshape(1, C),
        cross_kv_w=jnp.asarray(params["cross_kv_w"], jnp.bfloat16),
        cross_kv_b=jnp.asarray(params["cross_kv_b"], jnp.float32).reshape(1, 2 * C),
        ln2_w=jnp.asarray(params["ln2_w"], jnp.float32).reshape(1, C),
        ln2_b=jnp.asarray(params["ln2_b"], jnp.float32).reshape(1, C),
        mlp_w=jnp.asarray(params["mlp_w"], jnp.bfloat16),
        mlp_b=jnp.asarray(params["mlp_b"], jnp.float32).reshape(1, C),
    )


def adaln_scale_shift(lin_w, lin_b, t, dim, num_steps, rescale=4000.0):
    """SinusoidalPosEmb -> SiLU -> Linear(dim, 2*dim).  Tiny; plain JAX."""
    tf = t.astype(jnp.float32) / float(num_steps) * rescale
    half = dim // 2
    freq = jnp.exp(jnp.arange(half, dtype=jnp.float32)
                   * -(math.log(10000.0) / (half - 1)))
    emb = tf[:, None] * freq[None, :]
    emb = jnp.concatenate([jnp.sin(emb), jnp.cos(emb)], axis=-1)    # (B, dim)
    emb = emb * jax.nn.sigmoid(emb)                                 # SiLU
    emb = emb @ lin_w + lin_b                                       # (B, 2*dim)
    return emb[:, :dim], emb[:, dim:]


def nca2d_diffusion_forward(params, prep, x, cond, t, *, num_heads, kernel_size,
                            diffusion_step):
    del kernel_size  # baked into prep["attn_bias"]
    B, H, W, C = x.shape
    HW = H * W
    x3 = x.reshape(B, HW, C)
    cond3 = cond.reshape(B, HW, cond.shape[-1])

    sc1, sh1 = adaln_scale_shift(params["ln1_w"], params["ln1_b"], t, C, diffusion_step)
    sc2, sh2 = adaln_scale_shift(params["ln1_1_w"], params["ln1_1_b"], t, C, diffusion_step)
    g1, s1 = (1.0 + sc1)[:, None, :], sh1[:, None, :]
    g2, s2 = (1.0 + sc2)[:, None, :], sh2[:, None, :]

    out3 = fused_block(x3, cond3, g1, s1, g2, s2, prep, num_heads=num_heads)
    return out3.reshape(B, H, W, C), cond, t


def init_params(key, dim, num_heads, kernel_size, cond_dim=128):
    ks = jax.random.split(key, 12)

    def w(k_, shape):
        return jax.random.normal(k_, shape, jnp.float32) * 0.02

    return dict(
        ln1_w=w(ks[0], (dim, 2 * dim)),   ln1_b=w(ks[1], (2 * dim,)),
        ln1_1_w=w(ks[2], (dim, 2 * dim)), ln1_1_b=w(ks[3], (2 * dim,)),
        ln2_w=jnp.ones((dim,), jnp.float32), ln2_b=jnp.zeros((dim,), jnp.float32),
        self_qkv_w=w(ks[4], (dim, 3 * dim)), self_qkv_b=w(ks[5], (3 * dim,)),
        cross_kv_w=w(ks[6], (cond_dim, 2 * dim)), cross_kv_b=w(ks[7], (2 * dim,)),
        cross_q_w=w(ks[8], (dim, dim)), cross_q_b=w(ks[9], (dim,)),
        rpb=w(ks[10], (num_heads, 2 * kernel_size - 1, 2 * kernel_size - 1)),
        mlp_w=w(ks[11], (dim, dim)), mlp_b=jnp.zeros((dim,), jnp.float32),
    )


# ------------------------- pure reference (NATTEN loops) -------------------

def _ref_na_attention(q, k, v, rpb, kernel_size, scale):
    q = np.asarray(q); k = np.asarray(k); v = np.asarray(v); rpb = np.asarray(rpb)
    B, heads, H, W, hd = q.shape
    ks = kernel_size
    nh = ks // 2

    def win(i, L):
        ni = max(i - nh, 0) + ((L - i - nh - 1) if (i + nh >= L) else 0)
        pi = nh + ((nh - i) if (i < nh) else 0) + ((L - i - 1 - nh) if (i + nh >= L) else 0)
        return ni, pi

    out = np.zeros_like(q)
    for b in range(B):
        for h in range(heads):
            for i in range(H):
                ni, pi = win(i, H)
                for j in range(W):
                    nj, pj = win(j, W)
                    logits = np.zeros((ks, ks), np.float32)
                    for a in range(ks):
                        for c in range(ks):
                            logits[a, c] = (q[b, h, i, j] * scale) @ k[b, h, ni + a, nj + c] \
                                           + rpb[h, pi + a, pj + c]
                    p = logits.reshape(-1)
                    p = np.exp(p - p.max()); p = p / p.sum()
                    acc = np.zeros((hd,), np.float32)
                    idx = 0
                    for a in range(ks):
                        for c in range(ks):
                            acc += p[idx] * v[b, h, ni + a, nj + c]
                            idx += 1
                    out[b, h, i, j] = acc
    return out


def ref_forward(params, x, cond, t, *, num_heads, kernel_size, diffusion_step):
    B, H, W, C = x.shape
    hd = C // num_heads
    scale = hd ** (-0.5)
    HW = H * W

    def ln(v_, eps=1e-5):
        mu = v_.mean(-1, keepdims=True)
        var = ((v_ - mu) ** 2).mean(-1, keepdims=True)
        return (v_ - mu) / jnp.sqrt(var + eps)

    def adaln(x2d, lw, lb):
        half = C // 2
        tf = t.astype(jnp.float32) / float(diffusion_step) * 4000.0
        freq = jnp.exp(jnp.arange(half, dtype=jnp.float32) * -(math.log(10000.0) / (half - 1)))
        e = tf[:, None] * freq[None, :]
        e = jnp.concatenate([jnp.sin(e), jnp.cos(e)], -1)
        e = e * jax.nn.sigmoid(e)
        e = e @ lw + lb
        sc, sh = e[:, :C], e[:, C:]
        return ln(x2d) * (1.0 + sc[:, None, :]) + sh[:, None, :]

    def merge(a):
        return jnp.transpose(a, (0, 2, 3, 1, 4)).reshape(B, H, W, C)

    res = x
    x1 = adaln(x.reshape(B, HW, C), params["ln1_w"], params["ln1_b"]).reshape(B, H, W, C)
    qkv = (x1 @ params["self_qkv_w"] + params["self_qkv_b"]).reshape(B, H, W, 3, num_heads, hd)
    q = jnp.transpose(qkv[:, :, :, 0], (0, 3, 1, 2, 4))
    k = jnp.transpose(qkv[:, :, :, 1], (0, 3, 1, 2, 4))
    v = jnp.transpose(qkv[:, :, :, 2], (0, 3, 1, 2, 4))
    x = merge(jnp.asarray(_ref_na_attention(q, k, v, params["rpb"], kernel_size, scale))) + res

    res = x
    x2 = adaln(x.reshape(B, HW, C), params["ln1_1_w"], params["ln1_1_b"]).reshape(B, H, W, C)
    kv = (cond @ params["cross_kv_w"] + params["cross_kv_b"]).reshape(B, H, W, 2, num_heads, hd)
    k = jnp.transpose(kv[:, :, :, 0], (0, 3, 1, 2, 4))
    v = jnp.transpose(kv[:, :, :, 1], (0, 3, 1, 2, 4))
    q = jnp.transpose((x2 @ params["cross_q_w"] + params["cross_q_b"])
                      .reshape(B, H, W, num_heads, hd), (0, 3, 1, 2, 4))
    x = merge(jnp.asarray(_ref_na_attention(q, k, v, params["rpb"], kernel_size, scale))) + res

    xf = ln(x.reshape(B, HW, C)) * params["ln2_w"] + params["ln2_b"]
    return xf.reshape(B, H, W, C) @ params["mlp_w"] + params["mlp_b"]


# ---------------------------------- main ------------------------------------

if __name__ == "__main__":
    B, H, W = 2, 8, 8
    dim, num_heads, kernel_size = 32, 4, 3
    diffusion_step = 100

    key = jax.random.PRNGKey(0)
    kp, kx, kc, kt = jax.random.split(key, 4)
    params = init_params(kp, dim, num_heads, kernel_size)
    x = jax.random.normal(kx, (B, H, W, dim), jnp.float32)
    cond = jax.random.normal(kc, (B, H, W, 128), jnp.float32)
    t = jax.random.randint(kt, (B,), 0, diffusion_step)

    # hoisted: dense masked rpb bias, scale-folded + bf16-cast weights
    prep = precompute(params, H, W, num_heads, kernel_size)

    fwd = jax.jit(functools.partial(
        nca2d_diffusion_forward,
        num_heads=num_heads, kernel_size=kernel_size, diffusion_step=diffusion_step))

    out, cond_out, t_out = fwd(params, prep, x, cond, t)
    jax.block_until_ready(out)

    ref = ref_forward(params, x, cond, t, num_heads=num_heads,
                      kernel_size=kernel_size, diffusion_step=diffusion_step)
    np.testing.assert_allclose(np.asarray(out), np.asarray(ref), atol=5e-3, rtol=3e-2)

    print("KERNEL_OK")
</pallas_src>

<mosaic_0001>
module attributes {stable_mosaic.version = 11 : i64} {
  func.func @_block_kernel(%arg0: i32, %arg1: memref<1x1x32xf32, #tpu.memory_space<vmem>>, %arg2: memref<1x1x32xf32, #tpu.memory_space<vmem>>, %arg3: memref<1x1x32xf32, #tpu.memory_space<vmem>>, %arg4: memref<1x1x32xf32, #tpu.memory_space<vmem>>, %arg5: memref<1x64x32xf32, #tpu.memory_space<vmem>>, %arg6: memref<1x64x128xf32, #tpu.memory_space<vmem>>, %arg7: memref<32x96xbf16, #tpu.memory_space<vmem>>, %arg8: memref<1x96xf32, #tpu.memory_space<vmem>>, %arg9: memref<32x32xbf16, #tpu.memory_space<vmem>>, %arg10: memref<1x32xf32, #tpu.memory_space<vmem>>, %arg11: memref<128x64xbf16, #tpu.memory_space<vmem>>, %arg12: memref<1x64xf32, #tpu.memory_space<vmem>>, %arg13: memref<1x32xf32, #tpu.memory_space<vmem>>, %arg14: memref<1x32xf32, #tpu.memory_space<vmem>>, %arg15: memref<32x32xbf16, #tpu.memory_space<vmem>>, %arg16: memref<1x32xf32, #tpu.memory_space<vmem>>, %arg17: memref<4x64x64xf32, #tpu.memory_space<vmem>>, %arg18: memref<1x64x32xf32, #tpu.memory_space<vmem>>) attributes {dimension_semantics = [#tpu.dimension_semantics<parallel>], iteration_bounds = array<i64: 2>, scalar_prefetch = 0 : i64, scratch_operands = 0 : i64, tpu.core_type = #tpu.core_type<tc>, window_params = [{transform_indices = @transform_0, window_bounds = array<i64: 1, 1, 32>}, {transform_indices = @transform_1, window_bounds = array<i64: 1, 1, 32>}, {transform_indices = @transform_2, window_bounds = array<i64: 1, 1, 32>}, {transform_indices = @transform_3, window_bounds = array<i64: 1, 1, 32>}, {transform_indices = @transform_4, window_bounds = array<i64: 1, 64, 32>}, {transform_indices = @transform_5, window_bounds = array<i64: 1, 64, 128>}, {pipeline_mode = #tpu.pipeline_mode<synchronous>, transform_indices = @transform_6, window_bounds = array<i64: 32, 96>}, {pipeline_mode = #tpu.pipeline_mode<synchronous>, transform_indices = @transform_7, window_bounds = array<i64: 1, 96>}, {pipeline_mode = #tpu.pipeline_mode<synchronous>, transform_indices = @transform_8, window_bounds = array<i64: 32, 32>}, {pipeline_mode = #tpu.pipeline_mode<synchronous>, transform_indices = @transform_9, window_bounds = array<i64: 1, 32>}, {pipeline_mode = #tpu.pipeline_mode<synchronous>, transform_indices = @transform_10, window_bounds = array<i64: 128, 64>}, {pipeline_mode = #tpu.pipeline_mode<synchronous>, transform_indices = @transform_11, window_bounds = array<i64: 1, 64>}, {pipeline_mode = #tpu.pipeline_mode<synchronous>, transform_indices = @transform_12, window_bounds = array<i64: 1, 32>}, {pipeline_mode = #tpu.pipeline_mode<synchronous>, transform_indices = @transform_13, window_bounds = array<i64: 1, 32>}, {pipeline_mode = #tpu.pipeline_mode<synchronous>, transform_indices = @transform_14, window_bounds = array<i64: 32, 32>}, {pipeline_mode = #tpu.pipeline_mode<synchronous>, transform_indices = @transform_15, window_bounds = array<i64: 1, 32>}, {pipeline_mode = #tpu.pipeline_mode<synchronous>, transform_indices = @transform_16, window_bounds = array<i64: 4, 64, 64>}, {transform_indices = @transform_17, window_bounds = array<i64: 1, 64, 32>}]} {
    %c0 = arith.constant 0 : index
    %c0_0 = arith.constant 0 : index
    %c0_1 = arith.constant 0 : index
    %0 = vector.load %arg5[%c0, %c0_0, %c0_1] : memref<1x64x32xf32, #tpu.memory_space<vmem>>, vector<1x64x32xf32>
    %1 = vector.shape_cast %0 : vector<1x64x32xf32> to vector<64x32xf32>
    %cst = arith.constant dense<0.000000e+00> : vector<64xf32>
    %2 = vector.multi_reduction <add>, %1, %cst [1] : vector<64x32xf32> to vector<64xf32>
    %3 = vector.shape_cast %2 : vector<64xf32> to vector<64x1xf32>
    %cst_2 = arith.constant 3.200000e+01 : f32
    %4 = vector.broadcast %cst_2 : f32 to vector<64x1xf32>
    %5 = arith.divf %3, %4 : vector<64x1xf32>
    %6 = vector.broadcast %5 : vector<64x1xf32> to vector<64x32xf32>
    %7 = arith.subf %1, %6 : vector<64x32xf32>
    %8 = arith.mulf %7, %7 : vector<64x32xf32>
    %cst_3 = arith.constant dense<0.000000e+00> : vector<64xf32>
    %9 = vector.multi_reduction <add>, %8, %cst_3 [1] : vector<64x32xf32> to vector<64xf32>
    %10 = vector.shape_cast %9 : vector<64xf32> to vector<64x1xf32>
    %cst_4 = arith.constant 3.200000e+01 : f32
    %11 = vector.broadcast %cst_4 : f32 to vector<64x1xf32>
    %12 = arith.divf %10, %11 : vector<64x1xf32>
    %13 = vector.broadcast %5 : vector<64x1xf32> to vector<64x32xf32>
    %14 = arith.subf %1, %13 : vector<64x32xf32>
    %cst_5 = arith.constant 9.99999974E-6 : f32
    %15 = vector.broadcast %cst_5 : f32 to vector<64x1xf32>
    %16 = arith.addf %12, %15 : vector<64x1xf32>
    %17 = math.rsqrt %16 : vector<64x1xf32>
    %18 = vector.broadcast %17 : vector<64x1xf32> to vector<64x32xf32>
    %19 = arith.mulf %14, %18 : vector<64x32xf32>
    %c0_6 = arith.constant 0 : index
    %c0_7 = arith.constant 0 : index
    %c0_8 = arith.constant 0 : index
    %20 = vector.load %arg1[%c0_6, %c0_7, %c0_8] : memref<1x1x32xf32, #tpu.memory_space<vmem>>, vector<1x1x32xf32>
    %21 = vector.shape_cast %20 : vector<1x1x32xf32> to vector<1x32xf32>
    %22 = vector.broadcast %21 : vector<1x32xf32> to vector<64x32xf32>
    %23 = arith.mulf %19, %22 : vector<64x32xf32>
    %c0_9 = arith.constant 0 : index
    %c0_10 = arith.constant 0 : index
    %c0_11 = arith.constant 0 : index
    %24 = vector.load %arg2[%c0_9, %c0_10, %c0_11] : memref<1x1x32xf32, #tpu.memory_space<vmem>>, vector<1x1x32xf32>
    %25 = vector.shape_cast %24 : vector<1x1x32xf32> to vector<1x32xf32>
    %26 = vector.broadcast %25 : vector<1x32xf32> to vector<64x32xf32>
    %27 = arith.addf %23, %26 : vector<64x32xf32>
    %28 = arith.truncf %27 : vector<64x32xf32> to vector<64x32xbf16>
    %c0_12 = arith.constant 0 : index
    %c0_13 = arith.constant 0 : index
    %29 = vector.load %arg7[%c0_12, %c0_13] : memref<32x96xbf16, #tpu.memory_space<vmem>>, vector<32x96xbf16>
    %cst_14 = arith.constant dense<0.000000e+00> : vector<64x96xf32>
    %30 = tpu.matmul %28, %29, %cst_14 {dimension_numbers = #tpu.dot_dimension_numbers<[1], [0], [0], [1], [0, 0, 1, 1], [], []>} : vector<64x32xbf16>, vector<32x96xbf16>, vector<64x96xf32> -> vector<64x96xf32>
    %c0_15 = arith.constant 0 : index
    %c0_16 = arith.constant 0 : index
    %31 = vector.load %arg8[%c0_15, %c0_16] : memref<1x96xf32, #tpu.memory_space<vmem>>, vector<1x96xf32>
    %32 = vector.broadcast %31 : vector<1x96xf32> to vector<64x96xf32>
    %33 = arith.addf %30, %32 : vector<64x96xf32>
    %34 = vector.extract_strided_slice %33 {offsets = [0, 0], sizes = [64, 32], strides = [1, 1]} : vector<64x96xf32> to vector<64x32xf32>
    %35 = vector.extract_strided_slice %33 {offsets = [0, 32], sizes = [64, 32], strides = [1, 1]} : vector<64x96xf32> to vector<64x32xf32>
    %36 = vector.extract_strided_slice %33 {offsets = [0, 64], sizes = [64, 32], strides = [1, 1]} : vector<64x96xf32> to vector<64x32xf32>
    %37 = vector.extract_strided_slice %34 {offsets = [0, 0], sizes = [64, 8], strides = [1, 1]} : vector<64x32xf32> to vector<64x8xf32>
    %38 = arith.truncf %37 : vector<64x8xf32> to vector<64x8xbf16>
    %39 = vector.extract_strided_slice %35 {offsets = [0, 0], sizes = [64, 8], strides = [1, 1]} : vector<64x32xf32> to vector<64x8xf32>
    %40 = arith.truncf %39 : vector<64x8xf32> to vector<64x8xbf16>
    %41 = vector.extract_strided_slice %36 {offsets = [0, 0], sizes = [64, 8], strides = [1, 1]} : vector<64x32xf32> to vector<64x8xf32>
    %42 = arith.truncf %41 : vector<64x8xf32> to vector<64x8xbf16>
    %cst_17 = arith.constant dense<0.000000e+00> : vector<64x64xf32>
    %43 = tpu.matmul %38, %40, %cst_17 {dimension_numbers = #tpu.dot_dimension_numbers<[1], [1], [0], [0], [0, 0, 1, 0], [], []>} : vector<64x8xbf16>, vector<64x8xbf16>, vector<64x64xf32> -> vector<64x64xf32>
    %c0_18 = arith.constant 0 : index
    %c0_19 = arith.constant 0 : index
    %c0_20 = arith.constant 0 : index
    %44 = vector.load %arg17[%c0_18, %c0_19, %c0_20] : memref<4x64x64xf32, #tpu.memory_space<vmem>>, vector<1x64x64xf32>
    %45 = vector.shape_cast %44 : vector<1x64x64xf32> to vector<64x64xf32>
    %46 = arith.addf %43, %45 : vector<64x64xf32>
    %cst_21 = arith.constant dense<0xFF800000> : vector<64xf32>
    %47 = vector.multi_reduction <maximumf>, %46, %cst_21 [1] : vector<64x64xf32> to vector<64xf32>
    %48 = vector.shape_cast %47 : vector<64xf32> to vector<64x1xf32>
    %49 = vector.broadcast %48 : vector<64x1xf32> to vector<64x64xf32>
    %50 = arith.subf %46, %49 : vector<64x64xf32>
    %51 = math.exp %50 : vector<64x64xf32>
    %cst_22 = arith.constant dense<0.000000e+00> : vector<64xf32>
    %52 = vector.multi_reduction <add>, %51, %cst_22 [1] : vector<64x64xf32> to vector<64xf32>
    %53 = vector.shape_cast %52 : vector<64xf32> to vector<64x1xf32>
    %54 = tpu.reciprocal %53 {approx = true} : vector<64x1xf32> -> vector<64x1xf32>
    %55 = vector.broadcast %54 : vector<64x1xf32> to vector<64x64xf32>
    %56 = arith.mulf %51, %55 : vector<64x64xf32>
    %57 = arith.truncf %56 : vector<64x64xf32> to vector<64x64xbf16>
    %cst_23 = arith.constant dense<0.000000e+00> : vector<64x8xf32>
    %58 = tpu.matmul %57, %42, %cst_23 {dimension_numbers = #tpu.dot_dimension_numbers<[1], [0], [0], [1], [0, 0, 1, 1], [], []>} : vector<64x64xbf16>, vector<64x8xbf16>, vector<64x8xf32> -> vector<64x8xf32>
    %59 = vector.extract_strided_slice %34 {offsets = [0, 8], sizes = [64, 8], strides = [1, 1]} : vector<64x32xf32> to vector<64x8xf32>
    %60 = arith.truncf %59 : vector<64x8xf32> to vector<64x8xbf16>
    %61 = vector.extract_strided_slice %35 {offsets = [0, 8], sizes = [64, 8], strides = [1, 1]} : vector<64x32xf32> to vector<64x8xf32>
    %62 = arith.truncf %61 : vector<64x8xf32> to vector<64x8xbf16>
    %63 = vector.extract_strided_slice %36 {offsets = [0, 8], sizes = [64, 8], strides = [1, 1]} : vector<64x32xf32> to vector<64x8xf32>
    %64 = arith.truncf %63 : vector<64x8xf32> to vector<64x8xbf16>
    %cst_24 = arith.constant dense<0.000000e+00> : vector<64x64xf32>
    %65 = tpu.matmul %60, %62, %cst_24 {dimension_numbers = #tpu.dot_dimension_numbers<[1], [1], [0], [0], [0, 0, 1, 0], [], []>} : vector<64x8xbf16>, vector<64x8xbf16>, vector<64x64xf32> -> vector<64x64xf32>
    %c1 = arith.constant 1 : index
    %c0_25 = arith.constant 0 : index
    %c0_26 = arith.constant 0 : index
    %66 = vector.load %arg17[%c1, %c0_25, %c0_26] : memref<4x64x64xf32, #tpu.memory_space<vmem>>, vector<1x64x64xf32>
    %67 = vector.shape_cast %66 : vector<1x64x64xf32> to vector<64x64xf32>
    %68 = arith.addf %65, %67 : vector<64x64xf32>
    %cst_27 = arith.constant dense<0xFF800000> : vector<64xf32>
    %69 = vector.multi_reduction <maximumf>, %68, %cst_27 [1] : vector<64x64xf32> to vector<64xf32>
    %70 = vector.shape_cast %69 : vector<64xf32> to vector<64x1xf32>
    %71 = vector.broadcast %70 : vector<64x1xf32> to vector<64x64xf32>
    %72 = arith.subf %68, %71 : vector<64x64xf32>
    %73 = math.exp %72 : vector<64x64xf32>
    %cst_28 = arith.constant dense<0.000000e+00> : vector<64xf32>
    %74 = vector.multi_reduction <add>, %73, %cst_28 [1] : vector<64x64xf32> to vector<64xf32>
    %75 = vector.shape_cast %74 : vector<64xf32> to vector<64x1xf32>
    %76 = tpu.reciprocal %75 {approx = true} : vector<64x1xf32> -> vector<64x1xf32>
    %77 = vector.broadcast %76 : vector<64x1xf32> to vector<64x64xf32>
    %78 = arith.mulf %73, %77 : vector<64x64xf32>
    %79 = arith.truncf %78 : vector<64x64xf32> to vector<64x64xbf16>
    %cst_29 = arith.constant dense<0.000000e+00> : vector<64x8xf32>
    %80 = tpu.matmul %79, %64, %cst_29 {dimension_numbers = #tpu.dot_dimension_numbers<[1], [0], [0], [1], [0, 0, 1, 1], [], []>} : vector<64x64xbf16>, vector<64x8xbf16>, vector<64x8xf32> -> vector<64x8xf32>
    %81 = vector.extract_strided_slice %34 {offsets = [0, 16], sizes = [64, 8], strides = [1, 1]} : vector<64x32xf32> to vector<64x8xf32>
    %82 = arith.truncf %81 : vector<64x8xf32> to vector<64x8xbf16>
    %83 = vector.extract_strided_slice %35 {offsets = [0, 16], sizes = [64, 8], strides = [1, 1]} : vector<64x32xf32> to vector<64x8xf32>
    %84 = arith.truncf %83 : vector<64x8xf32> to vector<64x8xbf16>
    %85 = vector.extract_strided_slice %36 {offsets = [0, 16], sizes = [64, 8], strides = [1, 1]} : vector<64x32xf32> to vector<64x8xf32>
    %86 = arith.truncf %85 : vector<64x8xf32> to vector<64x8xbf16>
    %cst_30 = arith.constant dense<0.000000e+00> : vector<64x64xf32>
    %87 = tpu.matmul %82, %84, %cst_30 {dimension_numbers = #tpu.dot_dimension_numbers<[1], [1], [0], [0], [0, 0, 1, 0], [], []>} : vector<64x8xbf16>, vector<64x8xbf16>, vector<64x64xf32> -> vector<64x64xf32>
    %c2 = arith.constant 2 : index
    %c0_31 = arith.constant 0 : index
    %c0_32 = arith.constant 0 : index
    %88 = vector.load %arg17[%c2, %c0_31, %c0_32] : memref<4x64x64xf32, #tpu.memory_space<vmem>>, vector<1x64x64xf32>
    %89 = vector.shape_cast %88 : vector<1x64x64xf32> to vector<64x64xf32>
    %90 = arith.addf %87, %89 : vector<64x64xf32>
    %cst_33 = arith.constant dense<0xFF800000> : vector<64xf32>
    %91 = vector.multi_reduction <maximumf>, %90, %cst_33 [1] : vector<64x64xf32> to vector<64xf32>
    %92 = vector.shape_cast %91 : vector<64xf32> to vector<64x1xf32>
    %93 = vector.broadcast %92 : vector<64x1xf32> to vector<64x64xf32>
    %94 = arith.subf %90, %93 : vector<64x64xf32>
    %95 = math.exp %94 : vector<64x64xf32>
    %cst_34 = arith.constant dense<0.000000e+00> : vector<64xf32>
    %96 = vector.multi_reduction <add>, %95, %cst_34 [1] : vector<64x64xf32> to vector<64xf32>
    %97 = vector.shape_cast %96 : vector<64xf32> to vector<64x1xf32>
    %98 = tpu.reciprocal %97 {approx = true} : vector<64x1xf32> -> vector<64x1xf32>
    %99 = vector.broadcast %98 : vector<64x1xf32> to vector<64x64xf32>
    %100 = arith.mulf %95, %99 : vector<64x64xf32>
    %101 = arith.truncf %100 : vector<64x64xf32> to vector<64x64xbf16>
    %cst_35 = arith.constant dense<0.000000e+00> : vector<64x8xf32>
    %102 = tpu.matmul %101, %86, %cst_35 {dimension_numbers = #tpu.dot_dimension_numbers<[1], [0], [0], [1], [0, 0, 1, 1], [], []>} : vector<64x64xbf16>, vector<64x8xbf16>, vector<64x8xf32> -> vector<64x8xf32>
    %103 = vector.extract_strided_slice %34 {offsets = [0, 24], sizes = [64, 8], strides = [1, 1]} : vector<64x32xf32> to vector<64x8xf32>
    %104 = arith.truncf %103 : vector<64x8xf32> to vector<64x8xbf16>
    %105 = vector.extract_strided_slice %35 {offsets = [0, 24], sizes = [64, 8], strides = [1, 1]} : vector<64x32xf32> to vector<64x8xf32>
    %106 = arith.truncf %105 : vector<64x8xf32> to vector<64x8xbf16>
    %107 = vector.extract_strided_slice %36 {offsets = [0, 24], sizes = [64, 8], strides = [1, 1]} : vector<64x32xf32> to vector<64x8xf32>
    %108 = arith.truncf %107 : vector<64x8xf32> to vector<64x8xbf16>
    %cst_36 = arith.constant dense<0.000000e+00> : vector<64x64xf32>
    %109 = tpu.matmul %104, %106, %cst_36 {dimension_numbers = #tpu.dot_dimension_numbers<[1], [1], [0], [0], [0, 0, 1, 0], [], []>} : vector<64x8xbf16>, vector<64x8xbf16>, vector<64x64xf32> -> vector<64x64xf32>
    %c3 = arith.constant 3 : index
    %c0_37 = arith.constant 0 : index
    %c0_38 = arith.constant 0 : index
    %110 = vector.load %arg17[%c3, %c0_37, %c0_38] : memref<4x64x64xf32, #tpu.memory_space<vmem>>, vector<1x64x64xf32>
    %111 = vector.shape_cast %110 : vector<1x64x64xf32> to vector<64x64xf32>
    %112 = arith.addf %109, %111 : vector<64x64xf32>
    %cst_39 = arith.constant dense<0xFF800000> : vector<64xf32>
    %113 = vector.multi_reduction <maximumf>, %112, %cst_39 [1] : vector<64x64xf32> to vector<64xf32>
    %114 = vector.shape_cast %113 : vector<64xf32> to vector<64x1xf32>
    %115 = vector.broadcast %114 : vector<64x1xf32> to vector<64x64xf32>
    %116 = arith.subf %112, %115 : vector<64x64xf32>
    %117 = math.exp %116 : vector<64x64xf32>
    %cst_40 = arith.constant dense<0.000000e+00> : vector<64xf32>
    %118 = vector.multi_reduction <add>, %117, %cst_40 [1] : vector<64x64xf32> to vector<64xf32>
    %119 = vector.shape_cast %118 : vector<64xf32> to vector<64x1xf32>
    %120 = tpu.reciprocal %119 {approx = true} : vector<64x1xf32> -> vector<64x1xf32>
    %121 = vector.broadcast %120 : vector<64x1xf32> to vector<64x64xf32>
    %122 = arith.mulf %117, %121 : vector<64x64xf32>
    %123 = arith.truncf %122 : vector<64x64xf32> to vector<64x64xbf16>
    %cst_41 = arith.constant dense<0.000000e+00> : vector<64x8xf32>
    %124 = tpu.matmul %123, %108, %cst_41 {dimension_numbers = #tpu.dot_dimension_numbers<[1], [0], [0], [1], [0, 0, 1, 1], [], []>} : vector<64x64xbf16>, vector<64x8xbf16>, vector<64x8xf32> -> vector<64x8xf32>
    %125 = tpu.concatenate %58, %80, %102, %124 in 1 : vector<64x8xf32>, vector<64x8xf32>, vector<64x8xf32>, vector<64x8xf32> -> vector<64x32xf32>
    %126 = arith.addf %1, %125 : vector<64x32xf32>
    %cst_42 = arith.constant dense<0.000000e+00> : vector<64xf32>
    %127 = vector.multi_reduction <add>, %126, %cst_42 [1] : vector<64x32xf32> to vector<64xf32>
    %128 = vector.shape_cast %127 : vector<64xf32> to vector<64x1xf32>
    %cst_43 = arith.constant 3.200000e+01 : f32
    %129 = vector.broadcast %cst_43 : f32 to vector<64x1xf32>
    %130 = arith.divf %128, %129 : vector<64x1xf32>
    %131 = vector.broadcast %130 : vector<64x1xf32> to vector<64x32xf32>
    %132 = arith.subf %126, %131 : vector<64x32xf32>
    %133 = arith.mulf %132, %132 : vector<64x32xf32>
    %cst_44 = arith.constant dense<0.000000e+00> : vector<64xf32>
    %134 = vector.multi_reduction <add>, %133, %cst_44 [1] : vector<64x32xf32> to vector<64xf32>
    %135 = vector.shape_cast %134 : vector<64xf32> to vector<64x1xf32>
    %cst_45 = arith.constant 3.200000e+01 : f32
    %136 = vector.broadcast %cst_45 : f32 to vector<64x1xf32>
    %137 = arith.divf %135, %136 : vector<64x1xf32>
    %138 = vector.broadcast %130 : vector<64x1xf32> to vector<64x32xf32>
    %139 = arith.subf %126, %138 : vector<64x32xf32>
    %cst_46 = arith.constant 9.99999974E-6 : f32
    %140 = vector.broadcast %cst_46 : f32 to vector<64x1xf32>
    %141 = arith.addf %137, %140 : vector<64x1xf32>
    %142 = math.rsqrt %141 : vector<64x1xf32>
    %143 = vector.broadcast %142 : vector<64x1xf32> to vector<64x32xf32>
    %144 = arith.mulf %139, %143 : vector<64x32xf32>
    %c0_47 = arith.constant 0 : index
    %c0_48 = arith.constant 0 : index
    %c0_49 = arith.constant 0 : index
    %145 = vector.load %arg3[%c0_47, %c0_48, %c0_49] : memref<1x1x32xf32, #tpu.memory_space<vmem>>, vector<1x1x32xf32>
    %146 = vector.shape_cast %145 : vector<1x1x32xf32> to vector<1x32xf32>
    %147 = vector.broadcast %146 : vector<1x32xf32> to vector<64x32xf32>
    %148 = arith.mulf %144, %147 : vector<64x32xf32>
    %c0_50 = arith.constant 0 : index
    %c0_51 = arith.constant 0 : index
    %c0_52 = arith.constant 0 : index
    %149 = vector.load %arg4[%c0_50, %c0_51, %c0_52] : memref<1x1x32xf32, #tpu.memory_space<vmem>>, vector<1x1x32xf32>
    %150 = vector.shape_cast %149 : vector<1x1x32xf32> to vector<1x32xf32>
    %151 = vector.broadcast %150 : vector<1x32xf32> to vector<64x32xf32>
    %152 = arith.addf %148, %151 : vector<64x32xf32>
    %153 = arith.truncf %152 : vector<64x32xf32> to vector<64x32xbf16>
    %c0_53 = arith.constant 0 : index
    %c0_54 = arith.constant 0 : index
    %154 = vector.load %arg9[%c0_53, %c0_54] : memref<32x32xbf16, #tpu.memory_space<vmem>>, vector<32x32xbf16>
    %cst_55 = arith.constant dense<0.000000e+00> : vector<64x32xf32>
    %155 = tpu.matmul %153, %154, %cst_55 {dimension_numbers = #tpu.dot_dimension_numbers<[1], [0], [0], [1], [0, 0, 1, 1], [], []>} : vector<64x32xbf16>, vector<32x32xbf16>, vector<64x32xf32> -> vector<64x32xf32>
    %c0_56 = arith.constant 0 : index
    %c0_57 = arith.constant 0 : index
    %156 = vector.load %arg10[%c0_56, %c0_57] : memref<1x32xf32, #tpu.memory_space<vmem>>, vector<1x32xf32>
    %157 = vector.broadcast %156 : vector<1x32xf32> to vector<64x32xf32>
    %158 = arith.addf %155, %157 : vector<64x32xf32>
    %c0_58 = arith.constant 0 : index
    %c0_59 = arith.constant 0 : index
    %c0_60 = arith.constant 0 : index
    %159 = vector.load %arg6[%c0_58, %c0_59, %c0_60] : memref<1x64x128xf32, #tpu.memory_space<vmem>>, vector<1x64x128xf32>
    %160 = vector.shape_cast %159 : vector<1x64x128xf32> to vector<64x128xf32>
    %161 = arith.truncf %160 : vector<64x128xf32> to vector<64x128xbf16>
    %c0_61 = arith.constant 0 : index
    %c0_62 = arith.constant 0 : index
    %162 = vector.load %arg11[%c0_61, %c0_62] : memref<128x64xbf16, #tpu.memory_space<vmem>>, vector<128x64xbf16>
    %cst_63 = arith.constant dense<0.000000e+00> : vector<64x64xf32>
    %163 = tpu.matmul %161, %162, %cst_63 {dimension_numbers = #tpu.dot_dimension_numbers<[1], [0], [0], [1], [0, 0, 1, 1], [], []>} : vector<64x128xbf16>, vector<128x64xbf16>, vector<64x64xf32> -> vector<64x64xf32>
    %c0_64 = arith.constant 0 : index
    %c0_65 = arith.constant 0 : index
    %164 = vector.load %arg12[%c0_64, %c0_65] : memref<1x64xf32, #tpu.memory_space<vmem>>, vector<1x64xf32>
    %165 = vector.broadcast %164 : vector<1x64xf32> to vector<64x64xf32>
    %166 = arith.addf %163, %165 : vector<64x64xf32>
    %167 = vector.extract_strided_slice %166 {offsets = [0, 0], sizes = [64, 32], strides = [1, 1]} : vector<64x64xf32> to vector<64x32xf32>
    %168 = vector.extract_strided_slice %166 {offsets = [0, 32], sizes = [64, 32], strides = [1, 1]} : vector<64x64xf32> to vector<64x32xf32>
    %169 = vector.extract_strided_slice %158 {offsets = [0, 0], sizes = [64, 8], strides = [1, 1]} : vector<64x32xf32> to vector<64x8xf32>
    %170 = arith.truncf %169 : vector<64x8xf32> to vector<64x8xbf16>
    %171 = vector.extract_strided_slice %167 {offsets = [0, 0], sizes = [64, 8], strides = [1, 1]} : vector<64x32xf32> to vector<64x8xf32>
    %172 = arith.truncf %171 : vector<64x8xf32> to vector<64x8xbf16>
    %173 = vector.extract_strided_slice %168 {offsets = [0, 0], sizes = [64, 8], strides = [1, 1]} : vector<64x32xf32> to vector<64x8xf32>
    %174 = arith.truncf %173 : vector<64x8xf32> to vector<64x8xbf16>
    %cst_66 = arith.constant dense<0.000000e+00> : vector<64x64xf32>
    %175 = tpu.matmul %170, %172, %cst_66 {dimension_numbers = #tpu.dot_dimension_numbers<[1], [1], [0], [0], [0, 0, 1, 0], [], []>} : vector<64x8xbf16>, vector<64x8xbf16>, vector<64x64xf32> -> vector<64x64xf32>
    %c0_67 = arith.constant 0 : index
    %c0_68 = arith.constant 0 : index
    %c0_69 = arith.constant 0 : index
    %176 = vector.load %arg17[%c0_67, %c0_68, %c0_69] : memref<4x64x64xf32, #tpu.memory_space<vmem>>, vector<1x64x64xf32>
    %177 = vector.shape_cast %176 : vector<1x64x64xf32> to vector<64x64xf32>
    %178 = arith.addf %175, %177 : vector<64x64xf32>
    %cst_70 = arith.constant dense<0xFF800000> : vector<64xf32>
    %179 = vector.multi_reduction <maximumf>, %178, %cst_70 [1] : vector<64x64xf32> to vector<64xf32>
    %180 = vector.shape_cast %179 : vector<64xf32> to vector<64x1xf32>
    %181 = vector.broadcast %180 : vector<64x1xf32> to vector<64x64xf32>
    %182 = arith.subf %178, %181 : vector<64x64xf32>
    %183 = math.exp %182 : vector<64x64xf32>
    %cst_71 = arith.constant dense<0.000000e+00> : vector<64xf32>
    %184 = vector.multi_reduction <add>, %183, %cst_71 [1] : vector<64x64xf32> to vector<64xf32>
    %185 = vector.shape_cast %184 : vector<64xf32> to vector<64x1xf32>
    %186 = tpu.reciprocal %185 {approx = true} : vector<64x1xf32> -> vector<64x1xf32>
    %187 = vector.broadcast %186 : vector<64x1xf32> to vector<64x64xf32>
    %188 = arith.mulf %183, %187 : vector<64x64xf32>
    %189 = arith.truncf %188 : vector<64x64xf32> to vector<64x64xbf16>
    %cst_72 = arith.constant dense<0.000000e+00> : vector<64x8xf32>
    %190 = tpu.matmul %189, %174, %cst_72 {dimension_numbers = #tpu.dot_dimension_numbers<[1], [0], [0], [1], [0, 0, 1, 1], [], []>} : vector<64x64xbf16>, vector<64x8xbf16>, vector<64x8xf32> -> vector<64x8xf32>
    %191 = vector.extract_strided_slice %158 {offsets = [0, 8], sizes = [64, 8], strides = [1, 1]} : vector<64x32xf32> to vector<64x8xf32>
    %192 = arith.truncf %191 : vector<64x8xf32> to vector<64x8xbf16>
    %193 = vector.extract_strided_slice %167 {offsets = [0, 8], sizes = [64, 8], strides = [1, 1]} : vector<64x32xf32> to vector<64x8xf32>
    %194 = arith.truncf %193 : vector<64x8xf32> to vector<64x8xbf16>
    %195 = vector.extract_strided_slice %168 {offsets = [0, 8], sizes = [64, 8], strides = [1, 1]} : vector<64x32xf32> to vector<64x8xf32>
    %196 = arith.truncf %195 : vector<64x8xf32> to vector<64x8xbf16>
    %cst_73 = arith.constant dense<0.000000e+00> : vector<64x64xf32>
    %197 = tpu.matmul %192, %194, %cst_73 {dimension_numbers = #tpu.dot_dimension_numbers<[1], [1], [0], [0], [0, 0, 1, 0], [], []>} : vector<64x8xbf16>, vector<64x8xbf16>, vector<64x64xf32> -> vector<64x64xf32>
    %c1_74 = arith.constant 1 : index
    %c0_75 = arith.constant 0 : index
    %c0_76 = arith.constant 0 : index
    %198 = vector.load %arg17[%c1_74, %c0_75, %c0_76] : memref<4x64x64xf32, #tpu.memory_space<vmem>>, vector<1x64x64xf32>
    %199 = vector.shape_cast %198 : vector<1x64x64xf32> to vector<64x64xf32>
    %200 = arith.addf %197, %199 : vector<64x64xf32>
    %cst_77 = arith.constant dense<0xFF800000> : vector<64xf32>
    %201 = vector.multi_reduction <maximumf>, %200, %cst_77 [1] : vector<64x64xf32> to vector<64xf32>
    %202 = vector.shape_cast %201 : vector<64xf32> to vector<64x1xf32>
    %203 = vector.broadcast %202 : vector<64x1xf32> to vector<64x64xf32>
    %204 = arith.subf %200, %203 : vector<64x64xf32>
    %205 = math.exp %204 : vector<64x64xf32>
    %cst_78 = arith.constant dense<0.000000e+00> : vector<64xf32>
    %206 = vector.multi_reduction <add>, %205, %cst_78 [1] : vector<64x64xf32> to vector<64xf32>
    %207 = vector.shape_cast %206 : vector<64xf32> to vector<64x1xf32>
    %208 = tpu.reciprocal %207 {approx = true} : vector<64x1xf32> -> vector<64x1xf32>
    %209 = vector.broadcast %208 : vector<64x1xf32> to vector<64x64xf32>
    %210 = arith.mulf %205, %209 : vector<64x64xf32>
    %211 = arith.truncf %210 : vector<64x64xf32> to vector<64x64xbf16>
    %cst_79 = arith.constant dense<0.000000e+00> : vector<64x8xf32>
    %212 = tpu.matmul %211, %196, %cst_79 {dimension_numbers = #tpu.dot_dimension_numbers<[1], [0], [0], [1], [0, 0, 1, 1], [], []>} : vector<64x64xbf16>, vector<64x8xbf16>, vector<64x8xf32> -> vector<64x8xf32>
    %213 = vector.extract_strided_slice %158 {offsets = [0, 16], sizes = [64, 8], strides = [1, 1]} : vector<64x32xf32> to vector<64x8xf32>
    %214 = arith.truncf %213 : vector<64x8xf32> to vector<64x8xbf16>
    %215 = vector.extract_strided_slice %167 {offsets = [0, 16], sizes = [64, 8], strides = [1, 1]} : vector<64x32xf32> to vector<64x8xf32>
    %216 = arith.truncf %215 : vector<64x8xf32> to vector<64x8xbf16>
    %217 = vector.extract_strided_slice %168 {offsets = [0, 16], sizes = [64, 8], strides = [1, 1]} : vector<64x32xf32> to vector<64x8xf32>
    %218 = arith.truncf %217 : vector<64x8xf32> to vector<64x8xbf16>
    %cst_80 = arith.constant dense<0.000000e+00> : vector<64x64xf32>
    %219 = tpu.matmul %214, %216, %cst_80 {dimension_numbers = #tpu.dot_dimension_numbers<[1], [1], [0], [0], [0, 0, 1, 0], [], []>} : vector<64x8xbf16>, vector<64x8xbf16>, vector<64x64xf32> -> vector<64x64xf32>
    %c2_81 = arith.constant 2 : index
    %c0_82 = arith.constant 0 : index
    %c0_83 = arith.constant 0 : index
    %220 = vector.load %arg17[%c2_81, %c0_82, %c0_83] : memref<4x64x64xf32, #tpu.memory_space<vmem>>, vector<1x64x64xf32>
    %221 = vector.shape_cast %220 : vector<1x64x64xf32> to vector<64x64xf32>
    %222 = arith.addf %219, %221 : vector<64x64xf32>
    %cst_84 = arith.constant dense<0xFF800000> : vector<64xf32>
    %223 = vector.multi_reduction <maximumf>, %222, %cst_84 [1] : vector<64x64xf32> to vector<64xf32>
    %224 = vector.shape_cast %223 : vector<64xf32> to vector<64x1xf32>
    %225 = vector.broadcast %224 : vector<64x1xf32> to vector<64x64xf32>
    %226 = arith.subf %222, %225 : vector<64x64xf32>
    %227 = math.exp %226 : vector<64x64xf32>
    %cst_85 = arith.constant dense<0.000000e+00> : vector<64xf32>
    %228 = vector.multi_reduction <add>, %227, %cst_85 [1] : vector<64x64xf32> to vector<64xf32>
    %229 = vector.shape_cast %228 : vector<64xf32> to vector<64x1xf32>
    %230 = tpu.reciprocal %229 {approx = true} : vector<64x1xf32> -> vector<64x1xf32>
    %231 = vector.broadcast %230 : vector<64x1xf32> to vector<64x64xf32>
    %232 = arith.mulf %227, %231 : vector<64x64xf32>
    %233 = arith.truncf %232 : vector<64x64xf32> to vector<64x64xbf16>
    %cst_86 = arith.constant dense<0.000000e+00> : vector<64x8xf32>
    %234 = tpu.matmul %233, %218, %cst_86 {dimension_numbers = #tpu.dot_dimension_numbers<[1], [0], [0], [1], [0, 0, 1, 1], [], []>} : vector<64x64xbf16>, vector<64x8xbf16>, vector<64x8xf32> -> vector<64x8xf32>
    %235 = vector.extract_strided_slice %158 {offsets = [0, 24], sizes = [64, 8], strides = [1, 1]} : vector<64x32xf32> to vector<64x8xf32>
    %236 = arith.truncf %235 : vector<64x8xf32> to vector<64x8xbf16>
    %237 = vector.extract_strided_slice %167 {offsets = [0, 24], sizes = [64, 8], strides = [1, 1]} : vector<64x32xf32> to vector<64x8xf32>
    %238 = arith.truncf %237 : vector<64x8xf32> to vector<64x8xbf16>
    %239 = vector.extract_strided_slice %168 {offsets = [0, 24], sizes = [64, 8], strides = [1, 1]} : vector<64x32xf32> to vector<64x8xf32>
    %240 = arith.truncf %239 : vector<64x8xf32> to vector<64x8xbf16>
    %cst_87 = arith.constant dense<0.000000e+00> : vector<64x64xf32>
    %241 = tpu.matmul %236, %238, %cst_87 {dimension_numbers = #tpu.dot_dimension_numbers<[1], [1], [0], [0], [0, 0, 1, 0], [], []>} : vector<64x8xbf16>, vector<64x8xbf16>, vector<64x64xf32> -> vector<64x64xf32>
    %c3_88 = arith.constant 3 : index
    %c0_89 = arith.constant 0 : index
    %c0_90 = arith.constant 0 : index
    %242 = vector.load %arg17[%c3_88, %c0_89, %c0_90] : memref<4x64x64xf32, #tpu.memory_space<vmem>>, vector<1x64x64xf32>
    %243 = vector.shape_cast %242 : vector<1x64x64xf32> to vector<64x64xf32>
    %244 = arith.addf %241, %243 : vector<64x64xf32>
    %cst_91 = arith.constant dense<0xFF800000> : vector<64xf32>
    %245 = vector.multi_reduction <maximumf>, %244, %cst_91 [1] : vector<64x64xf32> to vector<64xf32>
    %246 = vector.shape_cast %245 : vector<64xf32> to vector<64x1xf32>
    %247 = vector.broadcast %246 : vector<64x1xf32> to vector<64x64xf32>
    %248 = arith.subf %244, %247 : vector<64x64xf32>
    %249 = math.exp %248 : vector<64x64xf32>
    %cst_92 = arith.constant dense<0.000000e+00> : vector<64xf32>
    %250 = vector.multi_reduction <add>, %249, %cst_92 [1] : vector<64x64xf32> to vector<64xf32>
    %251 = vector.shape_cast %250 : vector<64xf32> to vector<64x1xf32>
    %252 = tpu.reciprocal %251 {approx = true} : vector<64x1xf32> -> vector<64x1xf32>
    %253 = vector.broadcast %252 : vector<64x1xf32> to vector<64x64xf32>
    %254 = arith.mulf %249, %253 : vector<64x64xf32>
    %255 = arith.truncf %254 : vector<64x64xf32> to vector<64x64xbf16>
    %cst_93 = arith.constant dense<0.000000e+00> : vector<64x8xf32>
    %256 = tpu.matmul %255, %240, %cst_93 {dimension_numbers = #tpu.dot_dimension_numbers<[1], [0], [0], [1], [0, 0, 1, 1], [], []>} : vector<64x64xbf16>, vector<64x8xbf16>, vector<64x8xf32> -> vector<64x8xf32>
    %257 = tpu.concatenate %190, %212, %234, %256 in 1 : vector<64x8xf32>, vector<64x8xf32>, vector<64x8xf32>, vector<64x8xf32> -> vector<64x32xf32>
    %258 = arith.addf %126, %257 : vector<64x32xf32>
    %cst_94 = arith.constant dense<0.000000e+00> : vector<64xf32>
    %259 = vector.multi_reduction <add>, %258, %cst_94 [1] : vector<64x32xf32> to vector<64xf32>
    %260 = vector.shape_cast %259 : vector<64xf32> to vector<64x1xf32>
    %cst_95 = arith.constant 3.200000e+01 : f32
    %261 = vector.broadcast %cst_95 : f32 to vector<64x1xf32>
    %262 = arith.divf %260, %261 : vector<64x1xf32>
    %263 = vector.broadcast %262 : vector<64x1xf32> to vector<64x32xf32>
    %264 = arith.subf %258, %263 : vector<64x32xf32>
    %265 = arith.mulf %264, %264 : vector<64x32xf32>
    %cst_96 = arith.constant dense<0.000000e+00> : vector<64xf32>
    %266 = vector.multi_reduction <add>, %265, %cst_96 [1] : vector<64x32xf32> to vector<64xf32>
    %267 = vector.shape_cast %266 : vector<64xf32> to vector<64x1xf32>
    %cst_97 = arith.constant 3.200000e+01 : f32
    %268 = vector.broadcast %cst_97 : f32 to vector<64x1xf32>
    %269 = arith.divf %267, %268 : vector<64x1xf32>
    %270 = vector.broadcast %262 : vector<64x1xf32> to vector<64x32xf32>
    %271 = arith.subf %258, %270 : vector<64x32xf32>
    %cst_98 = arith.constant 9.99999974E-6 : f32
    %272 = vector.broadcast %cst_98 : f32 to vector<64x1xf32>
    %273 = arith.addf %269, %272 : vector<64x1xf32>
    %274 = math.rsqrt %273 : vector<64x1xf32>
    %275 = vector.broadcast %274 : vector<64x1xf32> to vector<64x32xf32>
    %276 = arith.mulf %271, %275 : vector<64x32xf32>
    %c0_99 = arith.constant 0 : index
    %c0_100 = arith.constant 0 : index
    %277 = vector.load %arg13[%c0_99, %c0_100] : memref<1x32xf32, #tpu.memory_space<vmem>>, vector<1x32xf32>
    %278 = vector.broadcast %277 : vector<1x32xf32> to vector<64x32xf32>
    %279 = arith.mulf %276, %278 : vector<64x32xf32>
    %c0_101 = arith.constant 0 : index
    %c0_102 = arith.constant 0 : index
    %280 = vector.load %arg14[%c0_101, %c0_102] : memref<1x32xf32, #tpu.memory_space<vmem>>, vector<1x32xf32>
    %281 = vector.broadcast %280 : vector<1x32xf32> to vector<64x32xf32>
    %282 = arith.addf %279, %281 : vector<64x32xf32>
    %283 = arith.truncf %282 : vector<64x32xf32> to vector<64x32xbf16>
    %c0_103 = arith.constant 0 : index
    %c0_104 = arith.constant 0 : index
    %284 = vector.load %arg15[%c0_103, %c0_104] : memref<32x32xbf16, #tpu.memory_space<vmem>>, vector<32x32xbf16>
    %cst_105 = arith.constant dense<0.000000e+00> : vector<64x32xf32>
    %285 = tpu.matmul %283, %284, %cst_105 {dimension_numbers = #tpu.dot_dimension_numbers<[1], [0], [0], [1], [0, 0, 1, 1], [], []>} : vector<64x32xbf16>, vector<32x32xbf16>, vector<64x32xf32> -> vector<64x32xf32>
    %c0_106 = arith.constant 0 : index
    %c0_107 = arith.constant 0 : index
    %286 = vector.load %arg16[%c0_106, %c0_107] : memref<1x32xf32, #tpu.memory_space<vmem>>, vector<1x32xf32>
    %287 = vector.broadcast %286 : vector<1x32xf32> to vector<64x32xf32>
    %288 = arith.addf %285, %287 : vector<64x32xf32>
    %c0_108 = arith.constant 0 : index
    %c0_109 = arith.constant 0 : index
    %c0_110 = arith.constant 0 : index
    %289 = vector.load %arg18[%c0_108, %c0_109, %c0_110] : memref<1x64x32xf32, #tpu.memory_space<vmem>>, vector<1x64x32xf32>
    %290 = vector.shape_cast %289 : vector<1x64x32xf32> to vector<64x32xf32>
    %291 = vector.shape_cast %288 : vector<64x32xf32> to vector<1x64x32xf32>
    tpu.vector_store %arg18[%c0_108, %c0_109, %c0_110], %291 {strides = array<i32>} : memref<1x64x32xf32, #tpu.memory_space<vmem>>, vector<1x64x32xf32>,
    return
  }
  func.func @transform_0(%arg0: i32) -> (i32, i32, i32) {
    %c0_i32 = arith.constant 0 : i32
    %c0_i32_0 = arith.constant 0 : i32
    %c0_i32_1 = arith.constant 0 : i32
    return %arg0, %c0_i32, %c0_i32_0 : i32, i32, i32
  }
  func.func @transform_1(%arg0: i32) -> (i32, i32, i32) {
    %c0_i32 = arith.constant 0 : i32
    %c0_i32_0 = arith.constant 0 : i32
    %c0_i32_1 = arith.constant 0 : i32
    return %arg0, %c0_i32, %c0_i32_0 : i32, i32, i32
  }
  func.func @transform_2(%arg0: i32) -> (i32, i32, i32) {
    %c0_i32 = arith.constant 0 : i32
    %c0_i32_0 = arith.constant 0 : i32
    %c0_i32_1 = arith.constant 0 : i32
    return %arg0, %c0_i32, %c0_i32_0 : i32, i32, i32
  }
  func.func @transform_3(%arg0: i32) -> (i32, i32, i32) {
    %c0_i32 = arith.constant 0 : i32
    %c0_i32_0 = arith.constant 0 : i32
    %c0_i32_1 = arith.constant 0 : i32
    return %arg0, %c0_i32, %c0_i32_0 : i32, i32, i32
  }
  func.func @transform_4(%arg0: i32) -> (i32, i32, i32) {
    %c0_i32 = arith.constant 0 : i32
    %c0_i32_0 = arith.constant 0 : i32
    %c0_i32_1 = arith.constant 0 : i32
    return %arg0, %c0_i32, %c0_i32_0 : i32, i32, i32
  }
  func.func @transform_5(%arg0: i32) -> (i32, i32, i32) {
    %c0_i32 = arith.constant 0 : i32
    %c0_i32_0 = arith.constant 0 : i32
    %c0_i32_1 = arith.constant 0 : i32
    return %arg0, %c0_i32, %c0_i32_0 : i32, i32, i32
  }
  func.func @transform_6(%arg0: i32) -> (i32, i32) {
    %c0_i32 = arith.constant 0 : i32
    %c0_i32_0 = arith.constant 0 : i32
    %c0_i32_1 = arith.constant 0 : i32
    return %c0_i32, %c0_i32_0 : i32, i32
  }
  func.func @transform_7(%arg0: i32) -> (i32, i32) {
    %c0_i32 = arith.constant 0 : i32
    %c0_i32_0 = arith.constant 0 : i32
    %c0_i32_1 = arith.constant 0 : i32
    return %c0_i32, %c0_i32_0 : i32, i32
  }
  func.func @transform_8(%arg0: i32) -> (i32, i32) {
    %c0_i32 = arith.constant 0 : i32
    %c0_i32_0 = arith.constant 0 : i32
    %c0_i32_1 = arith.constant 0 : i32
    return %c0_i32, %c0_i32_0 : i32, i32
  }
  func.func @transform_9(%arg0: i32) -> (i32, i32) {
    %c0_i32 = arith.constant 0 : i32
    %c0_i32_0 = arith.constant 0 : i32
    %c0_i32_1 = arith.constant 0 : i32
    return %c0_i32, %c0_i32_0 : i32, i32
  }
  func.func @transform_10(%arg0: i32) -> (i32, i32) {
    %c0_i32 = arith.constant 0 : i32
    %c0_i32_0 = arith.constant 0 : i32
    %c0_i32_1 = arith.constant 0 : i32
    return %c0_i32, %c0_i32_0 : i32, i32
  }
  func.func @transform_11(%arg0: i32) -> (i32, i32) {
    %c0_i32 = arith.constant 0 : i32
    %c0_i32_0 = arith.constant 0 : i32
    %c0_i32_1 = arith.constant 0 : i32
    return %c0_i32, %c0_i32_0 : i32, i32
  }
  func.func @transform_12(%arg0: i32) -> (i32, i32) {
    %c0_i32 = arith.constant 0 : i32
    %c0_i32_0 = arith.constant 0 : i32
    %c0_i32_1 = arith.constant 0 : i32
    return %c0_i32, %c0_i32_0 : i32, i32
  }
  func.func @transform_13(%arg0: i32) -> (i32, i32) {
    %c0_i32 = arith.constant 0 : i32
    %c0_i32_0 = arith.constant 0 : i32
    %c0_i32_1 = arith.constant 0 : i32
    return %c0_i32, %c0_i32_0 : i32, i32
  }
  func.func @transform_14(%arg0: i32) -> (i32, i32) {
    %c0_i32 = arith.constant 0 : i32
    %c0_i32_0 = arith.constant 0 : i32
    %c0_i32_1 = arith.constant 0 : i32
    return %c0_i32, %c0_i32_0 : i32, i32
  }
  func.func @transform_15(%arg0: i32) -> (i32, i32) {
    %c0_i32 = arith.constant 0 : i32
    %c0_i32_0 = arith.constant 0 : i32
    %c0_i32_1 = arith.constant 0 : i32
    return %c0_i32, %c0_i32_0 : i32, i32
  }
  func.func @transform_16(%arg0: i32) -> (i32, i32, i32) {
    %c0_i32 = arith.constant 0 : i32
    %c0_i32_0 = arith.constant 0 : i32
    %c0_i32_1 = arith.constant 0 : i32
    %c0_i32_2 = arith.constant 0 : i32
    return %c0_i32, %c0_i32_0, %c0_i32_1 : i32, i32, i32
  }
  func.func @transform_17(%arg0: i32) -> (i32, i32, i32) {
    %c0_i32 = arith.constant 0 : i32
    %c0_i32_0 = arith.constant 0 : i32
    %c0_i32_1 = arith.constant 0 : i32
    return %arg0, %c0_i32, %c0_i32_0 : i32, i32, i32
  }
}

</mosaic_0001>

<llo_original>
// kernel: nca2d_diffusion_forward.1
$region0: #{nca2d_diffusion_forward.1}
  #allocation0 [shape = 'u32[]', space=smem, size = 0x4, offset = 0x4, fixed_abs, tag = 'smem constant byte address 0x4 - core index']
  #allocation1 [shape = 'u32[144,128]{1,0:T(1,128)}', space=vmem, size = 0x12000, scoped, tag = 'internal scratch']
  %s0 = inlined_call_operand.vmem [shape: f32[2,1,32], index: 0, kind: input, shape index: {}]
  %s1 = inlined_call_operand.vmem [shape: f32[2,1,32], index: 1, kind: input, shape index: {}]
  %s2 = inlined_call_operand.vmem [shape: f32[2,1,32], index: 2, kind: input, shape index: {}]
  %s3 = inlined_call_operand.vmem [shape: f32[2,1,32], index: 3, kind: input, shape index: {}]
  %s4 = inlined_call_operand.vmem [shape: f32[2,64,32], index: 4, kind: input, shape index: {}, may-alias: {4,17}]
  %s5 = inlined_call_operand.vmem [shape: f32[2,64,128], index: 5, kind: input, shape index: {}]
  %s6 = inlined_call_operand.vmem [shape: bf16[32,96], index: 6, kind: input, shape index: {}]
  %s7 = inlined_call_operand.vmem [shape: f32[1,96], index: 7, kind: input, shape index: {}]
  %s8 = inlined_call_operand.vmem [shape: bf16[32,32], index: 8, kind: input, shape index: {}]
  %s9 = inlined_call_operand.vmem [shape: f32[1,32], index: 9, kind: input, shape index: {}]
  %s10 = inlined_call_operand.vmem [shape: bf16[128,64], index: 10, kind: input, shape index: {}]
  %s11 = inlined_call_operand.vmem [shape: f32[1,64], index: 11, kind: input, shape index: {}]
  %s12 = inlined_call_operand.vmem [shape: f32[1,32], index: 12, kind: input, shape index: {}]
  %s13 = inlined_call_operand.vmem [shape: f32[1,32], index: 13, kind: input, shape index: {}]
  %s14 = inlined_call_operand.vmem [shape: bf16[32,32], index: 14, kind: input, shape index: {}]
  %s15 = inlined_call_operand.vmem [shape: f32[1,32], index: 15, kind: input, shape index: {}]
  %s16 = inlined_call_operand.hbm [shape: f32[4,64,64], index: 16, kind: input, shape index: {}]
  %s17 = inlined_call_operand.vmem [shape: f32[2,64,32], index: 17, kind: output, shape index: {}, may-alias: {4,17}]
  %s18 = sld [smem:[#allocation0]]
  $region105: #{nca2d_diffusion_forward.1} parent=0
    _
  %s20 = ssub.s32 1, %s18
  %s21 = scalar_select 0, %s20, %s18
  $region1: #{nca2d_diffusion_forward.1} parent=0
    #allocation2 [shape = 'u8[131072]{0}', space=vmem, size = 0x20000, scoped, tag = 'input window, operand 16, single buffered']
    #allocation3 [shape = 's32[2]{0}', space=sflag, size = 0x8, scoped, tag = 'scoped memory for nca2d_diffusion_forward.1']
    %22 = vsyncpa [#allocation3], 0
    loop: start=0, step=1, limit=4
    $region2: #{nca2d_diffusion_forward.1} parent=1 // loop_pre_header
      _
    $region3: #{nca2d_diffusion_forward.1} parent=1 // loop_header
      %s24 = sphi 0, %s28
      %p25 = scmp.ge.s32.totalorder %s24, 4
      %s34 = sphi 0, %s36
      %s37 = sphi 0, %s34
      %s38 = sphi 0, %s37
      %s54 = sphi 0, %s38
      %s60 = sphi 0, %s62
      %s63 = sphi 0, %s60
      %s64 = sphi 0, %s63
      %s80 = sphi 0, %s64
      %s86 = sphi 0, %s88
      %s89 = sphi 0, %s86
      %s90 = sphi 0, %s89
      %s106 = sphi 0, %s90
      %s112 = sphi 0, %s114
      %s115 = sphi 0, %s112
      %s116 = sphi 0, %s115
      %s132 = sphi 0, %s116
      %s138 = sphi 0, %s140
      %s141 = sphi 0, %s138
      %s142 = sphi 0, %s141
      %s158 = sphi 0, %s142
      %s164 = sphi 0, %s166
      %s167 = sphi 0, %s164
      %s168 = sphi 0, %s167
      %s184 = sphi 0, %s168
      %s188 = sphi 0, %s188
      %s190 = sphi 0, %s188
      %s191 = sphi 0, %s190
      %s205 = sphi 0, %s191
      %s209 = sphi 0, %s209
      %s211 = sphi 0, %s209
      %s212 = sphi 0, %s211
      %s226 = sphi 0, %s212
      %s230 = sphi 0, %s230
      %s232 = sphi 0, %s230
      %s233 = sphi 0, %s232
      %s247 = sphi 0, %s233
      %s251 = sphi 0, %s251
      %s253 = sphi 0, %s251
      %s254 = sphi 0, %s253
      %s268 = sphi 0, %s254
      %s272 = sphi 0, %s272
      %s274 = sphi 0, %s272
      %s275 = sphi 0, %s274
      %s289 = sphi 0, %s275
      %s293 = sphi 0, %s293
      %s295 = sphi 0, %s293
      %s296 = sphi 0, %s295
      %s310 = sphi 0, %s296
      %s314 = sphi 0, %s314
      %s316 = sphi 0, %s314
      %s317 = sphi 0, %s316
      %s331 = sphi 0, %s317
      %s335 = sphi 0, %s335
      %s337 = sphi 0, %s335
      %s338 = sphi 0, %s337
      %s352 = sphi 0, %s338
      %s356 = sphi 0, %s356
      %s358 = sphi 0, %s356
      %s359 = sphi 0, %s358
      %s373 = sphi 0, %s359
      %s377 = sphi 0, %s377
      %s379 = sphi 0, %s377
      %s380 = sphi 0, %s379
      %s394 = sphi 0, %s380
      %s398 = sphi 0, %s398
      %s400 = sphi 0, %s398
      %s401 = sphi 0, %s400
      %s415 = sphi 0, %s401
      %s421 = sphi 0, %s423
      %s424 = sphi 0, %s421
      %s425 = sphi 0, %s424
      %s441 = sphi 0, %s425
    $region4: #{nca2d_diffusion_forward.1} parent=1 // loop_header_branch
      %27 = sbr.rel (%p25) target = $region8
    $region5: #{nca2d_diffusion_forward.1} parent=1 // loop_body
      %s29 = ssub.s32 %s24, 1
      %s30 = ssub.s32 %s24, 2
      %s31 = sadd.s32 %s24, 1
      %s32 = ssub.s32 %s24, %s31
      %p33 = scmp.eq.s32.totalorder %s32, 0
      %s35 = sadd.s32 %s34, 1
      %s36 = scalar_select %p33, %s34, %s35
      %p39 = pneg %p33
      %p40 = scmp.eq.s32.totalorder %s24, 1
      %p41 = por %p39, %p40
      %p42 = scmp.ne.s32.totalorder %s34, %s37
      %p43 = scmp.eq.s32.totalorder %s24, 0
      %p44 = por %p42, %p43
      %p45 = scmp.ne.s32.totalorder %s34, %s37
      %p46 = scmp.eq.s32.totalorder %s29, 1
      %p47 = por %p45, %p46
      %p48 = scmp.ne.s32.totalorder %s37, %s38
      %p49 = scmp.eq.s32.totalorder %s29, 0
      %p50 = por %p48, %p49
      %p51 = scmp.ne.s32.totalorder %s37, %s38
      %p52 = scmp.eq.s32.totalorder %s30, 1
      %p53 = por %p51, %p52
      %p55 = scmp.ne.s32.totalorder %s38, %s54
      %p56 = scmp.eq.s32.totalorder %s30, 0
      %p57 = por %p55, %p56
      %s58 = ssub.s32 %s24, %s31
      %p59 = scmp.eq.s32.totalorder %s58, 0
      %s61 = sadd.s32 %s60, 1
      %s62 = scalar_select %p59, %s60, %s61
      %p65 = pneg %p59
      %p66 = scmp.eq.s32.totalorder %s24, 1
      %p67 = por %p65, %p66
      %p68 = scmp.ne.s32.totalorder %s60, %s63
      %p69 = scmp.eq.s32.totalorder %s24, 0
      %p70 = por %p68, %p69
      %p71 = scmp.ne.s32.totalorder %s60, %s63
      %p72 = scmp.eq.s32.totalorder %s29, 1
      %p73 = por %p71, %p72
      %p74 = scmp.ne.s32.totalorder %s63, %s64
      %p75 = scmp.eq.s32.totalorder %s29, 0
      %p76 = por %p74, %p75
      %p77 = scmp.ne.s32.totalorder %s63, %s64
      %p78 = scmp.eq.s32.totalorder %s30, 1
      %p79 = por %p77, %p78
      %p81 = scmp.ne.s32.totalorder %s64, %s80
      %p82 = scmp.eq.s32.totalorder %s30, 0
      %p83 = por %p81, %p82
      %s84 = ssub.s32 %s24, %s31
      %p85 = scmp.eq.s32.totalorder %s84, 0
      %s87 = sadd.s32 %s86, 1
      %s88 = scalar_select %p85, %s86, %s87
      %p91 = pneg %p85
      %p92 = scmp.eq.s32.totalorder %s24, 1
      %p93 = por %p91, %p92
      %p94 = scmp.ne.s32.totalorder %s86, %s89
      %p95 = scmp.eq.s32.totalorder %s24, 0
      %p96 = por %p94, %p95
      %p97 = scmp.ne.s32.totalorder %s86, %s89
      %p98 = scmp.eq.s32.totalorder %s29, 1
      %p99 = por %p97, %p98
      %p100 = scmp.ne.s32.totalorder %s89, %s90
      %p101 = scmp.eq.s32.totalorder %s29, 0
      %p102 = por %p100, %p101
      %p103 = scmp.ne.s32.totalorder %s89, %s90
      %p104 = scmp.eq.s32.totalorder %s30, 1
      %p105 = por %p103, %p104
      %p107 = scmp.ne.s32.totalorder %s90, %s106
      %p108 = scmp.eq.s32.totalorder %s30, 0
      %p109 = por %p107, %p108
      %s110 = ssub.s32 %s24, %s31
      %p111 = scmp.eq.s32.totalorder %s110, 0
      %s113 = sadd.s32 %s112, 1
      %s114 = scalar_select %p111, %s112, %s113
      %p117 = pneg %p111
      %p118 = scmp.eq.s32.totalorder %s24, 1
      %p119 = por %p117, %p118
      %p120 = scmp.ne.s32.totalorder %s112, %s115
      %p121 = scmp.eq.s32.totalorder %s24, 0
      %p122 = por %p120, %p121
      %p123 = scmp.ne.s32.totalorder %s112, %s115
      %p124 = scmp.eq.s32.totalorder %s29, 1
      %p125 = por %p123, %p124
      %p126 = scmp.ne.s32.totalorder %s115, %s116
      %p127 = scmp.eq.s32.totalorder %s29, 0
      %p128 = por %p126, %p127
      %p129 = scmp.ne.s32.totalorder %s115, %s116
      %p130 = scmp.eq.s32.totalorder %s30, 1
      %p131 = por %p129, %p130
      %p133 = scmp.ne.s32.totalorder %s116, %s132
      %p134 = scmp.eq.s32.totalorder %s30, 0
      %p135 = por %p133, %p134
      %s136 = ssub.s32 %s24, %s31
      %p137 = scmp.eq.s32.totalorder %s136, 0
      %s139 = sadd.s32 %s138, 1
      %s140 = scalar_select %p137, %s138, %s139
      %p143 = pneg %p137
      %p144 = scmp.eq.s32.totalorder %s24, 1
      %p145 = por %p143, %p144
      %p146 = scmp.ne.s32.totalorder %s138, %s141
      %p147 = scmp.eq.s32.totalorder %s24, 0
      %p148 = por %p146, %p147
      %p149 = scmp.ne.s32.totalorder %s138, %s141
      %p150 = scmp.eq.s32.totalorder %s29, 1
      %p151 = por %p149, %p150
      %p152 = scmp.ne.s32.totalorder %s141, %s142
      %p153 = scmp.eq.s32.totalorder %s29, 0
      %p154 = por %p152, %p153
      %p155 = scmp.ne.s32.totalorder %s141, %s142
      %p156 = scmp.eq.s32.totalorder %s30, 1
      %p157 = por %p155, %p156
      %p159 = scmp.ne.s32.totalorder %s142, %s158
      %p160 = scmp.eq.s32.totalorder %s30, 0
      %p161 = por %p159, %p160
      %s162 = ssub.s32 %s24, %s31
      %p163 = scmp.eq.s32.totalorder %s162, 0
      %s165 = sadd.s32 %s164, 1
      %s166 = scalar_select %p163, %s164, %s165
      %p169 = pneg %p163
      %p170 = scmp.eq.s32.totalorder %s24, 1
      %p171 = por %p169, %p170
      %p172 = scmp.ne.s32.totalorder %s164, %s167
      %p173 = scmp.eq.s32.totalorder %s24, 0
      %p174 = por %p172, %p173
      %p175 = scmp.ne.s32.totalorder %s164, %s167
      %p176 = scmp.eq.s32.totalorder %s29, 1
      %p177 = por %p175, %p176
      %p178 = scmp.ne.s32.totalorder %s167, %s168
      %p179 = scmp.eq.s32.totalorder %s29, 0
      %p180 = por %p178, %p179
      %p181 = scmp.ne.s32.totalorder %s167, %s168
      %p182 = scmp.eq.s32.totalorder %s30, 1
      %p183 = por %p181, %p182
      %p185 = scmp.ne.s32.totalorder %s168, %s184
      %p186 = scmp.eq.s32.totalorder %s30, 0
      %p187 = por %p185, %p186
      %s189 = sadd.s32 %s188, 1
      %p192 = scmp.eq.s32.totalorder %s24, 1
      %p193 = scmp.ne.s32.totalorder %s188, %s190
      %p194 = scmp.eq.s32.totalorder %s24, 0
      %p195 = por %p193, %p194
      %p196 = scmp.ne.s32.totalorder %s188, %s190
      %p197 = scmp.eq.s32.totalorder %s29, 1
      %p198 = por %p196, %p197
      %p199 = scmp.ne.s32.totalorder %s190, %s191
      %p200 = scmp.eq.s32.totalorder %s29, 0
      %p201 = por %p199, %p200
      %p202 = scmp.ne.s32.totalorder %s190, %s191
      %p203 = scmp.eq.s32.totalorder %s30, 1
      %p204 = por %p202, %p203
      %p206 = scmp.ne.s32.totalorder %s191, %s205
      %p207 = scmp.eq.s32.totalorder %s30, 0
      %p208 = por %p206, %p207
      %s210 = sadd.s32 %s209, 1
      %p213 = scmp.eq.s32.totalorder %s24, 1
      %p214 = scmp.ne.s32.totalorder %s209, %s211
      %p215 = scmp.eq.s32.totalorder %s24, 0
      %p216 = por %p214, %p215
      %p217 = scmp.ne.s32.totalorder %s209, %s211
      %p218 = scmp.eq.s32.totalorder %s29, 1
      %p219 = por %p217, %p218
      %p220 = scmp.ne.s32.totalorder %s211, %s212
      %p221 = scmp.eq.s32.totalorder %s29, 0
      %p222 = por %p220, %p221
      %p223 = scmp.ne.s32.totalorder %s211, %s212
      %p224 = scmp.eq.s32.totalorder %s30, 1
      %p225 = por %p223, %p224
      %p227 = scmp.ne.s32.totalorder %s212, %s226
      %p228 = scmp.eq.s32.totalorder %s30, 0
      %p229 = por %p227, %p228
      %s231 = sadd.s32 %s230, 1
      %p234 = scmp.eq.s32.totalorder %s24, 1
      %p235 = scmp.ne.s32.totalorder %s230, %s232
      %p236 = scmp.eq.s32.totalorder %s24, 0
      %p237 = por %p235, %p236
      %p238 = scmp.ne.s32.totalorder %s230, %s232
      %p239 = scmp.eq.s32.totalorder %s29, 1
      %p240 = por %p238, %p239
      %p241 = scmp.ne.s32.totalorder %s232, %s233
      %p242 = scmp.eq.s32.totalorder %s29, 0
      %p243 = por %p241, %p242
      %p244 = scmp.ne.s32.totalorder %s232, %s233
      %p245 = scmp.eq.s32.totalorder %s30, 1
      %p246 = por %p244, %p245
      %p248 = scmp.ne.s32.totalorder %s233, %s247
      %p249 = scmp.eq.s32.totalorder %s30, 0
      %p250 = por %p248, %p249
      %s252 = sadd.s32 %s251, 1
      %p255 = scmp.eq.s32.totalorder %s24, 1
      %p256 = scmp.ne.s32.totalorder %s251, %s253
      %p257 = scmp.eq.s32.totalorder %s24, 0
      %p258 = por %p256, %p257
      %p259 = scmp.ne.s32.totalorder %s251, %s253
      %p260 = scmp.eq.s32.totalorder %s29, 1
      %p261 = por %p259, %p260
      %p262 = scmp.ne.s32.totalorder %s253, %s254
      %p263 = scmp.eq.s32.totalorder %s29, 0
      %p264 = por %p262, %p263
      %p265 = scmp.ne.s32.totalorder %s253, %s254
      %p266 = scmp.eq.s32.totalorder %s30, 1
      %p267 = por %p265, %p266
      %p269 = scmp.ne.s32.totalorder %s254, %s268
      %p270 = scmp.eq.s32.totalorder %s30, 0
      %p271 = por %p269, %p270
      %s273 = sadd.s32 %s272, 1
      %p276 = scmp.eq.s32.totalorder %s24, 1
      %p277 = scmp.ne.s32.totalorder %s272, %s274
      %p278 = scmp.eq.s32.totalorder %s24, 0
      %p279 = por %p277, %p278
      %p280 = scmp.ne.s32.totalorder %s272, %s274
      %p281 = scmp.eq.s32.totalorder %s29, 1
      %p282 = por %p280, %p281
      %p283 = scmp.ne.s32.totalorder %s274, %s275
      %p284 = scmp.eq.s32.totalorder %s29, 0
      %p285 = por %p283, %p284
      %p286 = scmp.ne.s32.totalorder %s274, %s275
      %p287 = scmp.eq.s32.totalorder %s30, 1
      %p288 = por %p286, %p287
      %p290 = scmp.ne.s32.totalorder %s275, %s289
      %p291 = scmp.eq.s32.totalorder %s30, 0
      %p292 = por %p290, %p291
      %s294 = sadd.s32 %s293, 1
      %p297 = scmp.eq.s32.totalorder %s24, 1
      %p298 = scmp.ne.s32.totalorder %s293, %s295
      %p299 = scmp.eq.s32.totalorder %s24, 0
      %p300 = por %p298, %p299
      %p301 = scmp.ne.s32.totalorder %s293, %s295
      %p302 = scmp.eq.s32.totalorder %s29, 1
      %p303 = por %p301, %p302
      %p304 = scmp.ne.s32.totalorder %s295, %s296
      %p305 = scmp.eq.s32.totalorder %s29, 0
      %p306 = por %p304, %p305
      %p307 = scmp.ne.s32.totalorder %s295, %s296
      %p308 = scmp.eq.s32.totalorder %s30, 1
      %p309 = por %p307, %p308
      %p311 = scmp.ne.s32.totalorder %s296, %s310
      %p312 = scmp.eq.s32.totalorder %s30, 0
      %p313 = por %p311, %p312
      %s315 = sadd.s32 %s314, 1
      %p318 = scmp.eq.s32.totalorder %s24, 1
      %p319 = scmp.ne.s32.totalorder %s314, %s316
      %p320 = scmp.eq.s32.totalorder %s24, 0
      %p321 = por %p319, %p320
      %p322 = scmp.ne.s32.totalorder %s314, %s316
      %p323 = scmp.eq.s32.totalorder %s29, 1
      %p324 = por %p322, %p323
      %p325 = scmp.ne.s32.totalorder %s316, %s317
      %p326 = scmp.eq.s32.totalorder %s29, 0
      %p327 = por %p325, %p326
      %p328 = scmp.ne.s32.totalorder %s316, %s317
      %p329 = scmp.eq.s32.totalorder %s30, 1
      %p330 = por %p328, %p329
      %p332 = scmp.ne.s32.totalorder %s317, %s331
      %p333 = scmp.eq.s32.totalorder %s30, 0
      %p334 = por %p332, %p333
      %s336 = sadd.s32 %s335, 1
      %p339 = scmp.eq.s32.totalorder %s24, 1
      %p340 = scmp.ne.s32.totalorder %s335, %s337
      %p341 = scmp.eq.s32.totalorder %s24, 0
      %p342 = por %p340, %p341
      %p343 = scmp.ne.s32.totalorder %s335, %s337
      %p344 = scmp.eq.s32.totalorder %s29, 1
      %p345 = por %p343, %p344
      %p346 = scmp.ne.s32.totalorder %s337, %s338
      %p347 = scmp.eq.s32.totalorder %s29, 0
      %p348 = por %p346, %p347
      %p349 = scmp.ne.s32.totalorder %s337, %s338
      %p350 = scmp.eq.s32.totalorder %s30, 1
      %p351 = por %p349, %p350
      %p353 = scmp.ne.s32.totalorder %s338, %s352
      %p354 = scmp.eq.s32.totalorder %s30, 0
      %p355 = por %p353, %p354
      %s357 = sadd.s32 %s356, 1
      %p360 = scmp.eq.s32.totalorder %s24, 1
      %p361 = scmp.ne.s32.totalorder %s356, %s358
      %p362 = scmp.eq.s32.totalorder %s24, 0
      %p363 = por %p361, %p362
      %p364 = scmp.ne.s32.totalorder %s356, %s358
      %p365 = scmp.eq.s32.totalorder %s29, 1
      %p366 = por %p364, %p365
      %p367 = scmp.ne.s32.totalorder %s358, %s359
      %p368 = scmp.eq.s32.totalorder %s29, 0
      %p369 = por %p367, %p368
      %p370 = scmp.ne.s32.totalorder %s358, %s359
      %p371 = scmp.eq.s32.totalorder %s30, 1
      %p372 = por %p370, %p371
      %p374 = scmp.ne.s32.totalorder %s359, %s373
      %p375 = scmp.eq.s32.totalorder %s30, 0
      %p376 = por %p374, %p375
      %s378 = sadd.s32 %s377, 1
      %p381 = scmp.eq.s32.totalorder %s24, 1
      %p382 = scmp.ne.s32.totalorder %s377, %s379
      %p383 = scmp.eq.s32.totalorder %s24, 0
      %p384 = por %p382, %p383
      %p385 = scmp.ne.s32.totalorder %s377, %s379
      %p386 = scmp.eq.s32.totalorder %s29, 1
      %p387 = por %p385, %p386
      %p388 = scmp.ne.s32.totalorder %s379, %s380
      %p389 = scmp.eq.s32.totalorder %s29, 0
      %p390 = por %p388, %p389
      %p391 = scmp.ne.s32.totalorder %s379, %s380
      %p392 = scmp.eq.s32.totalorder %s30, 1
      %p393 = por %p391, %p392
      %p395 = scmp.ne.s32.totalorder %s380, %s394
      %p396 = scmp.eq.s32.totalorder %s30, 0
      %p397 = por %p395, %p396
      %s399 = sadd.s32 %s398, 1
      %p402 = scmp.eq.s32.totalorder %s24, 1
      %p403 = scmp.ne.s32.totalorder %s398, %s400
      %p404 = scmp.eq.s32.totalorder %s24, 0
      %p405 = por %p403, %p404
      %p406 = scmp.ne.s32.totalorder %s398, %s400
      %p407 = scmp.eq.s32.totalorder %s29, 1
      %p408 = por %p406, %p407
      %p409 = scmp.ne.s32.totalorder %s400, %s401
      %p410 = scmp.eq.s32.totalorder %s29, 0
      %p411 = por %p409, %p410
      %p412 = scmp.ne.s32.totalorder %s400, %s401
      %p413 = scmp.eq.s32.totalorder %s30, 1
      %p414 = por %p412, %p413
      %p416 = scmp.ne.s32.totalorder %s401, %s415
      %p417 = scmp.eq.s32.totalorder %s30, 0
      %p418 = por %p416, %p417
      %s419 = ssub.s32 %s24, %s31
      %p420 = scmp.eq.s32.totalorder %s419, 0
      %s422 = sadd.s32 %s421, 1
      %s423 = scalar_select %p420, %s421, %s422
      %p426 = pneg %p420
      %p427 = scmp.eq.s32.totalorder %s24, 1
      %p428 = por %p426, %p427
      %p429 = scmp.ne.s32.totalorder %s421, %s424
      %p430 = scmp.eq.s32.totalorder %s24, 0
      %p431 = por %p429, %p430
      %p432 = scmp.ne.s32.totalorder %s421, %s424
      %p433 = scmp.eq.s32.totalorder %s29, 1
      %p434 = por %p432, %p433
      %p435 = scmp.ne.s32.totalorder %s424, %s425
      %p436 = scmp.eq.s32.totalorder %s29, 0
      %p437 = por %p435, %p436
      %p438 = scmp.ne.s32.totalorder %s424, %s425
      %p439 = scmp.eq.s32.totalorder %s30, 1
      %p440 = por %p438, %p439
      %p442 = scmp.ne.s32.totalorder %s425, %s441
      %p443 = scmp.eq.s32.totalorder %s30, 0
      %p444 = por %p442, %p443
      %p445 = scmp.le.s32.totalorder 1, %s24
      %p446 = scmp.lt.s32.totalorder %s24, 3
      %p447 = pnand %p445, %p446
      %p448 = pneg %p447
      // Predicated region
      $region9: #{nca2d_diffusion_forward.1} parent=5 // pred_check
        _
      $region10: #{nca2d_diffusion_forward.1} parent=5 // pred_check_branch
        %450 = sbr.rel (%p447) target = $region12
      $region11: #{nca2d_diffusion_forward.1} parent=5 // pred_region
        %s451 = ssub.s32 %s24, 1
        // Predicated region
        $region13: #{nca2d_diffusion_forward.1} parent=11 // pred_check
          %p452 = pneg %p201
        $region14: #{nca2d_diffusion_forward.1} parent=11 // pred_check_branch
          %454 = sbr.rel (%p452) target = $region16
        $region15: #{nca2d_diffusion_forward.1} parent=11 // pred_region
          _
        $region16: #{nca2d_diffusion_forward.1} parent=11 // pred_fallthru
          _
        // Predicated region
        $region17: #{nca2d_diffusion_forward.1} parent=11 // pred_check
          %p455 = pneg %p222
        $region18: #{nca2d_diffusion_forward.1} parent=11 // pred_check_branch
          %457 = sbr.rel (%p455) target = $region20
        $region19: #{nca2d_diffusion_forward.1} parent=11 // pred_region
          _
        $region20: #{nca2d_diffusion_forward.1} parent=11 // pred_fallthru
          _
        // Predicated region
        $region21: #{nca2d_diffusion_forward.1} parent=11 // pred_check
          %p458 = pneg %p243
        $region22: #{nca2d_diffusion_forward.1} parent=11 // pred_check_branch
          %460 = sbr.rel (%p458) target = $region24
        $region23: #{nca2d_diffusion_forward.1} parent=11 // pred_region
          _
        $region24: #{nca2d_diffusion_forward.1} parent=11 // pred_fallthru
          _
        // Predicated region
        $region25: #{nca2d_diffusion_forward.1} parent=11 // pred_check
          %p461 = pneg %p264
        $region26: #{nca2d_diffusion_forward.1} parent=11 // pred_check_branch
          %463 = sbr.rel (%p461) target = $region28
        $region27: #{nca2d_diffusion_forward.1} parent=11 // pred_region
          _
        $region28: #{nca2d_diffusion_forward.1} parent=11 // pred_fallthru
          _
        // Predicated region
        $region29: #{nca2d_diffusion_forward.1} parent=11 // pred_check
          %p464 = pneg %p285
        $region30: #{nca2d_diffusion_forward.1} parent=11 // pred_check_branch
          %466 = sbr.rel (%p464) target = $region32
        $region31: #{nca2d_diffusion_forward.1} parent=11 // pred_region
          _
        $region32: #{nca2d_diffusion_forward.1} parent=11 // pred_fallthru
          _
        // Predicated region
        $region33: #{nca2d_diffusion_forward.1} parent=11 // pred_check
          %p467 = pneg %p306
        $region34: #{nca2d_diffusion_forward.1} parent=11 // pred_check_branch
          %469 = sbr.rel (%p467) target = $region36
        $region35: #{nca2d_diffusion_forward.1} parent=11 // pred_region
          _
        $region36: #{nca2d_diffusion_forward.1} parent=11 // pred_fallthru
          _
        // Predicated region
        $region37: #{nca2d_diffusion_forward.1} parent=11 // pred_check
          %p470 = pneg %p327
        $region38: #{nca2d_diffusion_forward.1} parent=11 // pred_check_branch
          %472 = sbr.rel (%p470) target = $region40
        $region39: #{nca2d_diffusion_forward.1} parent=11 // pred_region
          _
        $region40: #{nca2d_diffusion_forward.1} parent=11 // pred_fallthru
          _
        // Predicated region
        $region41: #{nca2d_diffusion_forward.1} parent=11 // pred_check
          %p473 = pneg %p348
        $region42: #{nca2d_diffusion_forward.1} parent=11 // pred_check_branch
          %475 = sbr.rel (%p473) target = $region44
        $region43: #{nca2d_diffusion_forward.1} parent=11 // pred_region
          _
        $region44: #{nca2d_diffusion_forward.1} parent=11 // pred_fallthru
          _
        // Predicated region
        $region45: #{nca2d_diffusion_forward.1} parent=11 // pred_check
          %p476 = pneg %p369
        $region46: #{nca2d_diffusion_forward.1} parent=11 // pred_check_branch
          %478 = sbr.rel (%p476) target = $region48
        $region47: #{nca2d_diffusion_forward.1} parent=11 // pred_region
          _
        $region48: #{nca2d_diffusion_forward.1} parent=11 // pred_fallthru
          _
        // Predicated region
        $region49: #{nca2d_diffusion_forward.1} parent=11 // pred_check
          %p479 = pneg %p390
        $region50: #{nca2d_diffusion_forward.1} parent=11 // pred_check_branch
          %481 = sbr.rel (%p479) target = $region52
        $region51: #{nca2d_diffusion_forward.1} parent=11 // pred_region
          _
        $region52: #{nca2d_diffusion_forward.1} parent=11 // pred_fallthru
          _
        // Predicated region
        $region53: #{nca2d_diffusion_forward.1} parent=11 // pred_check
          %p482 = pneg %p411
        $region54: #{nca2d_diffusion_forward.1} parent=11 // pred_check_branch
          %484 = sbr.rel (%p482) target = $region56
        $region55: #{nca2d_diffusion_forward.1} parent=11 // pred_region
          %s486 = ssub.s32 4096, 4096
          %487 = vsyncadd [#allocation3], %s486
          %s488 = sshll.u32 [#allocation2], 4
          %s489 = int_to_ptr.vmem [resolvable:$true] %s488
          %494 = dma.hbm_to_vmem [thread:$0]  %s16, 4096, %s489, [#allocation3], 128, 128, 8
        $region56: #{nca2d_diffusion_forward.1} parent=11 // pred_fallthru
          _
      $region12: #{nca2d_diffusion_forward.1} parent=5 // pred_fallthru
        _
      %p495 = scmp.lt.s32.totalorder %s24, 2
      // Predicated region
      $region57: #{nca2d_diffusion_forward.1} parent=5 // pred_check
        %p496 = pneg %p495
      $region58: #{nca2d_diffusion_forward.1} parent=5 // pred_check_branch
        %498 = sbr.rel (%p496) target = $region60
      $region59: #{nca2d_diffusion_forward.1} parent=5 // pred_region
        // Predicated region
        $region61: #{nca2d_diffusion_forward.1} parent=59 // pred_check
          %p499 = pneg %p44
        $region62: #{nca2d_diffusion_forward.1} parent=59 // pred_check_branch
          %501 = sbr.rel (%p499) target = $region64
        $region63: #{nca2d_diffusion_forward.1} parent=59 // pred_region
          %p502 = scmp.lt.s32.totalorder %s24, 1
          %s503 = scalar_select %p502, %s24, 1
          %s504 = scalar_lea.vmem %s0, %s503
        $region64: #{nca2d_diffusion_forward.1} parent=59 // pred_fallthru
          _
        // Predicated region
        $region65: #{nca2d_diffusion_forward.1} parent=59 // pred_check
          %p505 = pneg %p70
        $region66: #{nca2d_diffusion_forward.1} parent=59 // pred_check_branch
          %507 = sbr.rel (%p505) target = $region68
        $region67: #{nca2d_diffusion_forward.1} parent=59 // pred_region
          %p508 = scmp.lt.s32.totalorder %s24, 1
          %s509 = scalar_select %p508, %s24, 1
          %s510 = scalar_lea.vmem %s1, %s509
        $region68: #{nca2d_diffusion_forward.1} parent=59 // pred_fallthru
          _
        // Predicated region
        $region69: #{nca2d_diffusion_forward.1} parent=59 // pred_check
          %p511 = pneg %p96
        $region70: #{nca2d_diffusion_forward.1} parent=59 // pred_check_branch
          %513 = sbr.rel (%p511) target = $region72
        $region71: #{nca2d_diffusion_forward.1} parent=59 // pred_region
          %p514 = scmp.lt.s32.totalorder %s24, 1
          %s515 = scalar_select %p514, %s24, 1
          %s516 = scalar_lea.vmem %s2, %s515
        $region72: #{nca2d_diffusion_forward.1} parent=59 // pred_fallthru
          _
        // Predicated region
        $region73: #{nca2d_diffusion_forward.1} parent=59 // pred_check
          %p517 = pneg %p122
        $region74: #{nca2d_diffusion_forward.1} parent=59 // pred_check_branch
          %519 = sbr.rel (%p517) target = $region76
        $region75: #{nca2d_diffusion_forward.1} parent=59 // pred_region
          %p520 = scmp.lt.s32.totalorder %s24, 1
          %s521 = scalar_select %p520, %s24, 1
          %s522 = scalar_lea.vmem %s3, %s521
        $region76: #{nca2d_diffusion_forward.1} parent=59 // pred_fallthru
          _
        // Predicated region
        $region77: #{nca2d_diffusion_forward.1} parent=59 // pred_check
          %p523 = pneg %p148
        $region78: #{nca2d_diffusion_forward.1} parent=59 // pred_check_branch
          %525 = sbr.rel (%p523) target = $region80
        $region79: #{nca2d_diffusion_forward.1} parent=59 // pred_region
          %p526 = scmp.lt.s32.totalorder %s24, 1
          %s527 = scalar_select %p526, %s24, 1
          %s528 = smul.addr %s527, 8
          %s529 = smul.addr %s528, 8
          %s530 = scalar_lea.vmem %s4, %s529
        $region80: #{nca2d_diffusion_forward.1} parent=59 // pred_fallthru
          _
        // Predicated region
        $region81: #{nca2d_diffusion_forward.1} parent=59 // pred_check
          %p531 = pneg %p174
        $region82: #{nca2d_diffusion_forward.1} parent=59 // pred_check_branch
          %533 = sbr.rel (%p531) target = $region84
        $region83: #{nca2d_diffusion_forward.1} parent=59 // pred_region
          %p534 = scmp.lt.s32.totalorder %s24, 1
          %s535 = scalar_select %p534, %s24, 1
          %s536 = smul.addr %s535, 8
          %s537 = smul.addr %s536, 8
          %s538 = scalar_lea.vmem %s5, %s537
        $region84: #{nca2d_diffusion_forward.1} parent=59 // pred_fallthru
          _
      $region60: #{nca2d_diffusion_forward.1} parent=5 // pred_fallthru
        _
      %p539 = scmp.le.s32.totalorder 1, %s24
      %p540 = scmp.lt.s32.totalorder %s24, 3
      %p541 = pnand %p539, %p540
      %p542 = pneg %p541
      // Predicated region
      $region85: #{nca2d_diffusion_forward.1} parent=5 // pred_check
        _
      $region86: #{nca2d_diffusion_forward.1} parent=5 // pred_check_branch
        %544 = sbr.rel (%p541) target = $region88
      $region87: #{nca2d_diffusion_forward.1} parent=5 // pred_region
        %s545 = ssub.s32 %s24, 1
        // Predicated region
        $region89: #{nca2d_diffusion_forward.1} parent=87 // pred_check
          %p546 = pneg %p411
        $region90: #{nca2d_diffusion_forward.1} parent=87 // pred_check_branch
          %548 = sbr.rel (%p546) target = $region92
        $region91: #{nca2d_diffusion_forward.1} parent=87 // pred_region
          %549 = dma.done [#allocation3], 4096
        $region92: #{nca2d_diffusion_forward.1} parent=87 // pred_fallthru
          _
        %p550 = scmp.lt.s32.totalorder %s29, 1
        %s551 = scalar_select %p550, %s29, 1
        %s552 = scalar_lea.vmem %s0, %s551
        %p553 = pneg %p50
        %p554 = pneg %p47
        %p555 = scmp.lt.s32.totalorder %s29, 1
        %s556 = scalar_select %p555, %s29, 1
        %s557 = scalar_lea.vmem %s1, %s556
        %p558 = pneg %p76
        %p559 = pneg %p73
        %p560 = scmp.lt.s32.totalorder %s29, 1
        %s561 = scalar_select %p560, %s29, 1
        %s562 = scalar_lea.vmem %s2, %s561
        %p563 = pneg %p102
        %p564 = pneg %p99
        %p565 = scmp.lt.s32.totalorder %s29, 1
        %s566 = scalar_select %p565, %s29, 1
        %s567 = scalar_lea.vmem %s3, %s566
        %p568 = pneg %p128
        %p569 = pneg %p125
        %p570 = scmp.lt.s32.totalorder %s29, 1
        %s571 = scalar_select %p570, %s29, 1
        %s572 = smul.addr %s571, 8
        %s573 = smul.addr %s572, 8
        %s574 = scalar_lea.vmem %s4, %s573
        %p575 = pneg %p154
        %p576 = pneg %p151
        %p577 = scmp.lt.s32.totalorder %s29, 1
        %s578 = scalar_select %p577, %s29, 1
        %s579 = smul.addr %s578, 8
        %s580 = smul.addr %s579, 8
        %s581 = scalar_lea.vmem %s5, %s580
        %p582 = pneg %p180
        %p583 = pneg %p177
        %p584 = pneg %p201
        %p585 = pneg %p198
        %p586 = pneg %p222
        %p587 = pneg %p219
        %p588 = pneg %p243
        %p589 = pneg %p240
        %p590 = pneg %p264
        %p591 = pneg %p261
        %p592 = pneg %p285
        %p593 = pneg %p282
        %p594 = pneg %p306
        %p595 = pneg %p303
        %p596 = pneg %p327
        %p597 = pneg %p324
        %p598 = pneg %p348
        %p599 = pneg %p345
        %p600 = pneg %p369
        %p601 = pneg %p366
        %p602 = pneg %p390
        %p603 = pneg %p387
        %p604 = pneg %p411
        %p605 = pneg %p408
        %p606 = pneg %p437
        %p607 = pneg %p434
        %p608 = scmp.lt.s32.totalorder %s29, 1
        %s609 = scalar_select %p608, %s29, 1
        %s610 = smul.addr %s609, 8
        %s611 = smul.addr %s610, 8
        %s612 = scalar_lea.vmem %s17, %s611
        %p613 = scmp.lt.s32.totalorder %s29, 1
        %s614 = scalar_select %p613, %s29, 1
        %s615 = scalar_lea.vmem %s0, %s614
        %p616 = scmp.lt.s32.totalorder %s29, 1
        %s617 = scalar_select %p616, %s29, 1
        %s618 = scalar_lea.vmem %s1, %s617
        %p619 = scmp.lt.s32.totalorder %s29, 1
        %s620 = scalar_select %p619, %s29, 1
        %s621 = scalar_lea.vmem %s2, %s620
        %p622 = scmp.lt.s32.totalorder %s29, 1
        %s623 = scalar_select %p622, %s29, 1
        %s624 = scalar_lea.vmem %s3, %s623
        %p625 = scmp.lt.s32.totalorder %s29, 1
        %s626 = scalar_select %p625, %s29, 1
        %s627 = smul.addr %s626, 8
        %s628 = smul.addr %s627, 8
        %s629 = scalar_lea.vmem %s4, %s628
        %p630 = scmp.lt.s32.totalorder %s29, 1
        %s631 = scalar_select %p630, %s29, 1
        %s632 = smul.addr %s631, 8
        %s633 = smul.addr %s632, 8
        %s634 = scalar_lea.vmem %s5, %s633
        %p635 = scmp.lt.s32.totalorder %s29, 1
        %s636 = scalar_select %p635, %s29, 1
        %s637 = smul.addr %s636, 8
        %s638 = smul.addr %s637, 8
        %s639 = scalar_lea.vmem %s17, %s638
        %v641 = vld [vmem:[%s629] sm:$0xff]
        %v642 = vld [vmem:[%s629 + $0x8] sm:$0xff]
        %v643 = vld [vmem:[%s629 + $0x10] sm:$0xff]
        %v644 = vld [vmem:[%s629 + $0x18] sm:$0xff]
        %v645 = vld [vmem:[%s629 + $0x20] sm:$0xff]
        %v646 = vld [vmem:[%s629 + $0x28] sm:$0xff]
        %v647 = vld [vmem:[%s629 + $0x30] sm:$0xff]
        %v648 = vld [vmem:[%s629 + $0x38] sm:$0xff]
        %vm649 = vcmask 261120
        %v650 = vsel %vm649, %v641, 0.0
        %651 = vadd.xlane.f32.xlu0 %v650
        %v652 = vpop.xlane.xlu0 %651
        %v653 = vsel %vm649, %v642, 0.0
        %654 = vadd.xlane.f32.xlu0 %v653
        %v655 = vpop.xlane.xlu0 %654
        %v656 = vsel %vm649, %v643, 0.0
        %657 = vadd.xlane.f32.xlu0 %v656
        %v658 = vpop.xlane.xlu0 %657
        %v659 = vsel %vm649, %v644, 0.0
        %660 = vadd.xlane.f32.xlu0 %v659
        %v661 = vpop.xlane.xlu0 %660
        %v662 = vsel %vm649, %v645, 0.0
        %663 = vadd.xlane.f32.xlu0 %v662
        %v664 = vpop.xlane.xlu0 %663
        %v665 = vsel %vm649, %v646, 0.0
        %666 = vadd.xlane.f32.xlu0 %v665
        %v667 = vpop.xlane.xlu0 %666
        %v668 = vsel %vm649, %v647, 0.0
        %669 = vadd.xlane.f32.xlu0 %v668
        %v670 = vpop.xlane.xlu0 %669
        %v671 = vsel %vm649, %v648, 0.0
        %672 = vadd.xlane.f32.xlu0 %v671
        %v673 = vpop.xlane.xlu0 %672
        %v674 = vrcp.pop 32.0
        %v675 = vmul.f32 %v652, %v674
        %v676 = vmul.f32 %v655, %v674
        %v677 = vmul.f32 %v658, %v674
        %v678 = vmul.f32 %v661, %v674
        %v679 = vmul.f32 %v664, %v674
        %v680 = vmul.f32 %v667, %v674
        %v681 = vmul.f32 %v670, %v674
        %v682 = vmul.f32 %v673, %v674
        %v683 = vsub.f32 %v641, %v675
        %v684 = vsub.f32 %v642, %v676
        %v685 = vsub.f32 %v643, %v677
        %v686 = vsub.f32 %v644, %v678
        %v687 = vsub.f32 %v645, %v679
        %v688 = vsub.f32 %v646, %v680
        %v689 = vsub.f32 %v647, %v681
        %v690 = vsub.f32 %v648, %v682
        %v691 = vmul.f32 %v683, %v683
        %v692 = vmul.f32 %v684, %v684
        %v693 = vmul.f32 %v685, %v685
        %v694 = vmul.f32 %v686, %v686
        %v695 = vmul.f32 %v687, %v687
        %v696 = vmul.f32 %v688, %v688
        %v697 = vmul.f32 %v689, %v689
        %v698 = vmul.f32 %v690, %v690
        %v699 = vsel %vm649, %v691, 0.0
        %700 = vadd.xlane.f32.xlu0 %v699
        %v701 = vpop.xlane.xlu0 %700
        %v702 = vsel %vm649, %v692, 0.0
        %703 = vadd.xlane.f32.xlu0 %v702
        %v704 = vpop.xlane.xlu0 %703
        %v705 = vsel %vm649, %v693, 0.0
        %706 = vadd.xlane.f32.xlu0 %v705
        %v707 = vpop.xlane.xlu0 %706
        %v708 = vsel %vm649, %v694, 0.0
        %709 = vadd.xlane.f32.xlu0 %v708
        %v710 = vpop.xlane.xlu0 %709
        %v711 = vsel %vm649, %v695, 0.0
        %712 = vadd.xlane.f32.xlu0 %v711
        %v713 = vpop.xlane.xlu0 %712
        %v714 = vsel %vm649, %v696, 0.0
        %715 = vadd.xlane.f32.xlu0 %v714
        %v716 = vpop.xlane.xlu0 %715
        %v717 = vsel %vm649, %v697, 0.0
        %718 = vadd.xlane.f32.xlu0 %v717
        %v719 = vpop.xlane.xlu0 %718
        %v720 = vsel %vm649, %v698, 0.0
        %721 = vadd.xlane.f32.xlu0 %v720
        %v722 = vpop.xlane.xlu0 %721
        %v723 = vmul.f32 %v701, %v674
        %v724 = vmul.f32 %v704, %v674
        %v725 = vmul.f32 %v707, %v674
        %v726 = vmul.f32 %v710, %v674
        %v727 = vmul.f32 %v713, %v674
        %v728 = vmul.f32 %v716, %v674
        %v729 = vmul.f32 %v719, %v674
        %v730 = vmul.f32 %v722, %v674
        %v731 = vadd.f32 %v723, 1e-05
        %v732 = vadd.f32 %v724, 1e-05
        %v733 = vadd.f32 %v725, 1e-05
        %v734 = vadd.f32 %v726, 1e-05
        %v735 = vadd.f32 %v727, 1e-05
        %v736 = vadd.f32 %v728, 1e-05
        %v737 = vadd.f32 %v729, 1e-05
        %v738 = vadd.f32 %v730, 1e-05
        %v739 = vrsqrt.pop %v731
        %v740 = vrsqrt.pop %v732
        %v741 = vrsqrt.pop %v733
        %v742 = vrsqrt.pop %v734
        %v743 = vrsqrt.pop %v735
        %v744 = vrsqrt.pop %v736
        %v745 = vrsqrt.pop %v737
        %v746 = vrsqrt.pop %v738
        %v747 = vmul.f32 %v683, %v739
        %v748 = vmul.f32 %v684, %v740
        %v749 = vmul.f32 %v685, %v741
        %v750 = vmul.f32 %v686, %v742
        %v751 = vmul.f32 %v687, %v743
        %v752 = vmul.f32 %v688, %v744
        %v753 = vmul.f32 %v689, %v745
        %v754 = vmul.f32 %v690, %v746
        %v755 = vld [vmem:[%s615] sm:$0x1]
        %v757 = vlaneseq
        %v758 = vshrl.u32 %v757, 7
        %v759 = vsub.s32 0, %v758
        %v760 = vrot.slane %v755, %v759
        %v762 = vmul.f32 %v747, %v760
        %v763 = vmul.f32 %v748, %v760
        %v764 = vmul.f32 %v749, %v760
        %v765 = vmul.f32 %v750, %v760
        %v766 = vmul.f32 %v751, %v760
        %v767 = vmul.f32 %v752, %v760
        %v768 = vmul.f32 %v753, %v760
        %v769 = vmul.f32 %v754, %v760
        %v770 = vld [vmem:[%s618] sm:$0x1]
        %v772 = vlaneseq
        %v773 = vshrl.u32 %v772, 7
        %v774 = vsub.s32 0, %v773
        %v775 = vrot.slane %v770, %v774
        %v777 = vadd.f32 %v762, %v775
        %v778 = vadd.f32 %v763, %v775
        %v779 = vadd.f32 %v764, %v775
        %v780 = vadd.f32 %v765, %v775
        %v781 = vadd.f32 %v766, %v775
        %v782 = vadd.f32 %v767, %v775
        %v783 = vadd.f32 %v768, %v775
        %v784 = vadd.f32 %v769, %v775
        %v785 = vpack.c.bf16 %v778, %v777
        %v786 = vpack.c.bf16 %v780, %v779
        %v787 = vpack.c.bf16 %v782, %v781
        %v788 = vpack.c.bf16 %v784, %v783
        %v789 = vld [vmem:[%s6] sm:$0xf]
        %v790 = vld [vmem:[%s6 + $0x4] sm:$0xf]
        %v791 = vld [vmem:[%s6 + $0x8] sm:$0xf]
        %v792 = vld [vmem:[%s6 + $0xc] sm:$0xf]
        %v793 = vld [vmem:[%s7] sm:$0x1]
        %v795 = vlaneseq
        %v796 = vshrl.u32 %v795, 7
        %v797 = vsub.s32 0, %v796
        %v798 = vrot.slane %v793, %v797
        %v804 = vunpack.c.l.b16 %v789
        %v805 = vunpack.c.l.b16 %v790
        %v806 = vunpack.c.l.b16 %v791
        %v807 = vunpack.c.l.b16 %v792
        %v808 = vpack.c.b16 %v805, %v804
        %v809 = vpack.c.b16 %v807, %v806
        %v813 = vsel %vm649, %v785, 0
        %v816 = vsel %vm649, %v786, 0
        %v819 = vsel %vm649, %v787, 0
        %v822 = vsel %vm649, %v788, 0
        %824 = vmatprep.subr.bf16.mxu0 0
        %825 = vmatpush1.bf16.msra.mxu0 0
        %826 = vmatprep.subr.bf16.mxu0 0
        %827 = vmatpush1.bf16.msra.mxu0 0
        %828 = vmatprep.subr.bf16.mxu0 0
        %829 = vmatpush1.bf16.msra.mxu0 0
        %830 = vmatprep.subr.bf16.mxu0 0
        %831 = vmatpush1.bf16.msra.mxu0 0
        %832 = vmatprep.subr.bf16.mxu0 0
        %833 = vmatpush1.bf16.msra.mxu0 0
        %834 = vmatprep.subr.bf16.mxu0 0
        %835 = vmatpush1.bf16.msra.mxu0 0
        %836 = vmatprep.subr.bf16.mxu0 0
        %837 = vmatpush1.bf16.msra.mxu0 %v809
        %838 = vmatprep.subr.bf16.mxu0 0
        %839 = vmatpush1.bf16.msra.mxu0 %v808
        %840 = vmatprep.subr.bf16.mxu0 0
        %841 = vmatpush2.bf16.msra.mxu0 0
        %842 = vmatprep.subr.bf16.mxu0 0
        %843 = vmatpush2.bf16.msra.mxu0 0
        %844 = vmatprep.subr.bf16.mxu0 0
        %845 = vmatpush2.bf16.msra.mxu0 0
        %846 = vmatprep.subr.bf16.mxu0 0
        %847 = vmatpush2.bf16.msra.mxu0 0
        %848 = vmatprep.subr.bf16.mxu0 0
        %849 = vmatpush2.bf16.msra.mxu0 0
        %850 = vmatprep.subr.bf16.mxu0 0
        %851 = vmatpush2.bf16.msra.mxu0 0
        %852 = vmatprep.subr.bf16.mxu0 0
        %853 = vmatpush2.bf16.msra.mxu0 0
        %854 = vmatprep.subr.bf16.mxu0 0
        %855 = vmatpush2.bf16.msra.mxu0 0
        %856 = vmatprep.mubr.bf16.mxu0 0
        %857 = vmatmul.mubr.bf16.gmra.mxu0 %v813
        %v858 = vpop.f32.mrf.mxu0
        %v859 = vadd.f32 %v798, %v858
        %v860 = vpop.f32.mrf.mxu0
        %v861 = vpop.f32.mrf.mxu0
        %v862 = vadd.f32 %v798, %v861
        %v863 = vpop.f32.mrf.mxu0
        %864 = vmatprep.mubr.bf16.mxu0 0
        %865 = vmatmul.mubr.bf16.gmra.mxu0 %v816
        %v866 = vpop.f32.mrf.mxu0
        %v867 = vadd.f32 %v798, %v866
        %v868 = vpop.f32.mrf.mxu0
        %v869 = vpop.f32.mrf.mxu0
        %v870 = vadd.f32 %v798, %v869
        %v871 = vpop.f32.mrf.mxu0
        %872 = vmatprep.mubr.bf16.mxu0 0
        %873 = vmatmul.mubr.bf16.gmra.mxu0 %v819
        %v874 = vpop.f32.mrf.mxu0
        %v875 = vadd.f32 %v798, %v874
        %v876 = vpop.f32.mrf.mxu0
        %v877 = vpop.f32.mrf.mxu0
        %v878 = vadd.f32 %v798, %v877
        %v879 = vpop.f32.mrf.mxu0
        %880 = vmatprep.mubr.bf16.mxu0 0
        %881 = vmatmul.mubr.bf16.gmra.mxu0 %v822
        %v882 = vpop.f32.mrf.mxu0
        %v883 = vadd.f32 %v798, %v882
        %v884 = vpop.f32.mrf.mxu0
        %v885 = vpop.f32.mrf.mxu0
        %v886 = vadd.f32 %v798, %v885
        %v887 = vpop.f32.mrf.mxu0
        %888 = vdwg.mxu0
        %v889 = vpack.c.bf16 %v862, %v859
        %v890 = vpack.c.bf16 %v870, %v867
        %v891 = vpack.c.bf16 %v878, %v875
        %v892 = vpack.c.bf16 %v886, %v883
        %v893 = vld [vmem:[#allocation2] sm:$0xff]
        %v894 = vld [vmem:[#allocation2 + $0x8] sm:$0xff]
        %v895 = vld [vmem:[#allocation2 + $0x10] sm:$0xff]
        %v896 = vld [vmem:[#allocation2 + $0x18] sm:$0xff]
        %v897 = vld [vmem:[#allocation2 + $0x20] sm:$0xff]
        %v898 = vld [vmem:[#allocation2 + $0x28] sm:$0xff]
        %v899 = vld [vmem:[#allocation2 + $0x30] sm:$0xff]
        %v900 = vld [vmem:[#allocation2 + $0x38] sm:$0xff]
        %905 = vrot.lane.b32.xlu0 %v889, 96
        %v906 = vpop.permute.xlu0 %905
        %907 = vrot.lane.b32.xlu0 %v890, 96
        %v908 = vpop.permute.xlu0 %907
        %909 = vrot.lane.b32.xlu0 %v891, 96
        %v910 = vpop.permute.xlu0 %909
        %911 = vrot.lane.b32.xlu0 %v892, 96
        %v912 = vpop.permute.xlu0 %911
        %vm913 = vcmask 64512
        %v915 = vsel %vm913, %v889, 0
        %v918 = vsel %vm913, %v890, 0
        %v921 = vsel %vm913, %v891, 0
        %v924 = vsel %vm913, %v892, 0
        %v927 = vsel %vm913, %v906, 0
        %v930 = vsel %vm913, %v908, 0
        %v933 = vsel %vm913, %v910, 0
        %v936 = vsel %vm913, %v912, 0
        %938 = vmatprep.subr.bf16.mxu0 0
        %939 = vmatpush1.bf16.xpose.msra.mxu0 0
        %940 = vmatprep.subr.bf16.mxu0 0
        %941 = vmatpush1.bf16.xpose.msra.mxu0 0
        %942 = vmatprep.subr.bf16.mxu0 0
        %943 = vmatpush1.bf16.xpose.msra.mxu0 0
        %944 = vmatprep.subr.bf16.mxu0 0
        %945 = vmatpush1.bf16.xpose.msra.mxu0 0
        %946 = vmatprep.subr.bf16.mxu0 0
        %947 = vmatpush1.bf16.xpose.msra.mxu0 %v936
        %948 = vmatprep.subr.bf16.mxu0 0
        %949 = vmatpush1.bf16.xpose.msra.mxu0 %v933
        %950 = vmatprep.subr.bf16.mxu0 0
        %951 = vmatpush1.bf16.xpose.msra.mxu0 %v930
        %952 = vmatprep.subr.bf16.mxu0 0
        %953 = vmatpush1.bf16.xpose.msra.mxu0 %v927
        %954 = vmatprep.subr.bf16.mxu0 0
        %955 = vmatpush2.bf16.xpose.msra.mxu0 0
        %956 = vmatprep.subr.bf16.mxu0 0
        %957 = vmatpush2.bf16.xpose.msra.mxu0 0
        %958 = vmatprep.subr.bf16.mxu0 0
        %959 = vmatpush2.bf16.xpose.msra.mxu0 0
        %960 = vmatprep.subr.bf16.mxu0 0
        %961 = vmatpush2.bf16.xpose.msra.mxu0 0
        %962 = vmatprep.subr.bf16.mxu0 0
        %963 = vmatpush2.bf16.xpose.msra.mxu0 0
        %964 = vmatprep.subr.bf16.mxu0 0
        %965 = vmatpush2.bf16.xpose.msra.mxu0 0
        %966 = vmatprep.subr.bf16.mxu0 0
        %967 = vmatpush2.bf16.xpose.msra.mxu0 0
        %968 = vmatprep.subr.bf16.mxu0 0
        %969 = vmatpush2.bf16.xpose.msra.mxu0 0
        %970 = vmatprep.mubr.bf16.mxu0 0
        %971 = vmatmul.mubr.bf16.gmra.mxu0 %v915
        %v972 = vpop.f32.mrf.mxu0
        %v973 = vadd.f32 %v893, %v972
        %v974 = vpop.f32.mrf.mxu0
        %v975 = vpop.f32.mrf.mxu0
        %v976 = vadd.f32 %v894, %v975
        %v977 = vpop.f32.mrf.mxu0
        %978 = vmatprep.mubr.bf16.mxu0 0
        %979 = vmatmul.mubr.bf16.gmra.mxu0 %v918
        %v980 = vpop.f32.mrf.mxu0
        %v981 = vadd.f32 %v895, %v980
        %v982 = vpop.f32.mrf.mxu0
        %v983 = vpop.f32.mrf.mxu0
        %v984 = vadd.f32 %v896, %v983
        %v985 = vpop.f32.mrf.mxu0
        %986 = vmatprep.mubr.bf16.mxu0 0
        %987 = vmatmul.mubr.bf16.gmra.mxu0 %v921
        %v988 = vpop.f32.mrf.mxu0
        %v989 = vadd.f32 %v897, %v988
        %v990 = vpop.f32.mrf.mxu0
        %v991 = vpop.f32.mrf.mxu0
        %v992 = vadd.f32 %v898, %v991
        %v993 = vpop.f32.mrf.mxu0
        %994 = vmatprep.mubr.bf16.mxu0 0
        %995 = vmatmul.mubr.bf16.gmra.mxu0 %v924
        %v996 = vpop.f32.mrf.mxu0
        %v997 = vadd.f32 %v899, %v996
        %v998 = vpop.f32.mrf.mxu0
        %v999 = vpop.f32.mrf.mxu0
        %v1000 = vadd.f32 %v900, %v999
        %v1001 = vpop.f32.mrf.mxu0
        %1002 = vdwg.mxu0
        %vm1003 = vcmask 523264
        %v1004 = vsel %vm1003, %v973, -inf
        %1005 = vmax.xlane.f32.xlu0 %v1004
        %v1006 = vpop.xlane.xlu0 %1005
        %v1007 = vsel %vm1003, %v976, -inf
        %1008 = vmax.xlane.f32.xlu0 %v1007
        %v1009 = vpop.xlane.xlu0 %1008
        %v1010 = vsel %vm1003, %v981, -inf
        %1011 = vmax.xlane.f32.xlu0 %v1010
        %v1012 = vpop.xlane.xlu0 %1011
        %v1013 = vsel %vm1003, %v984, -inf
        %1014 = vmax.xlane.f32.xlu0 %v1013
        %v1015 = vpop.xlane.xlu0 %1014
        %v1016 = vsel %vm1003, %v989, -inf
        %1017 = vmax.xlane.f32.xlu0 %v1016
        %v1018 = vpop.xlane.xlu0 %1017
        %v1019 = vsel %vm1003, %v992, -inf
        %1020 = vmax.xlane.f32.xlu0 %v1019
        %v1021 = vpop.xlane.xlu0 %1020
        %v1022 = vsel %vm1003, %v997, -inf
        %1023 = vmax.xlane.f32.xlu0 %v1022
        %v1024 = vpop.xlane.xlu0 %1023
        %v1025 = vsel %vm1003, %v1000, -inf
        %1026 = vmax.xlane.f32.xlu0 %v1025
        %v1027 = vpop.xlane.xlu0 %1026
        %v1028 = vsub.f32 %v973, %v1006
        %v1029 = vsub.f32 %v976, %v1009
        %v1030 = vsub.f32 %v981, %v1012
        %v1031 = vsub.f32 %v984, %v1015
        %v1032 = vsub.f32 %v989, %v1018
        %v1033 = vsub.f32 %v992, %v1021
        %v1034 = vsub.f32 %v997, %v1024
        %v1035 = vsub.f32 %v1000, %v1027
        %v1036 = vmul.f32 %v1028, 1.442695
        %v1037 = vpow.pop %v1036
        %v1038 = vmul.f32 %v1029, 1.442695
        %v1039 = vpow.pop %v1038
        %v1040 = vmul.f32 %v1030, 1.442695
        %v1041 = vpow.pop %v1040
        %v1042 = vmul.f32 %v1031, 1.442695
        %v1043 = vpow.pop %v1042
        %v1044 = vmul.f32 %v1032, 1.442695
        %v1045 = vpow.pop %v1044
        %v1046 = vmul.f32 %v1033, 1.442695
        %v1047 = vpow.pop %v1046
        %v1048 = vmul.f32 %v1034, 1.442695
        %v1049 = vpow.pop %v1048
        %v1050 = vmul.f32 %v1035, 1.442695
        %v1051 = vpow.pop %v1050
        %v1052 = vsel %vm1003, %v1037, 0.0
        %1053 = vadd.xlane.f32.xlu0 %v1052
        %v1054 = vpop.xlane.xlu0 %1053
        %v1055 = vsel %vm1003, %v1039, 0.0
        %1056 = vadd.xlane.f32.xlu0 %v1055
        %v1057 = vpop.xlane.xlu0 %1056
        %v1058 = vsel %vm1003, %v1041, 0.0
        %1059 = vadd.xlane.f32.xlu0 %v1058
        %v1060 = vpop.xlane.xlu0 %1059
        %v1061 = vsel %vm1003, %v1043, 0.0
        %1062 = vadd.xlane.f32.xlu0 %v1061
        %v1063 = vpop.xlane.xlu0 %1062
        %v1064 = vsel %vm1003, %v1045, 0.0
        %1065 = vadd.xlane.f32.xlu0 %v1064
        %v1066 = vpop.xlane.xlu0 %1065
        %v1067 = vsel %vm1003, %v1047, 0.0
        %1068 = vadd.xlane.f32.xlu0 %v1067
        %v1069 = vpop.xlane.xlu0 %1068
        %v1070 = vsel %vm1003, %v1049, 0.0
        %1071 = vadd.xlane.f32.xlu0 %v1070
        %v1072 = vpop.xlane.xlu0 %1071
        %v1073 = vsel %vm1003, %v1051, 0.0
        %1074 = vadd.xlane.f32.xlu0 %v1073
        %v1075 = vpop.xlane.xlu0 %1074
        %v1076 = vrcp.pop %v1054
        %v1077 = vrcp.pop %v1057
        %v1078 = vrcp.pop %v1060
        %v1079 = vrcp.pop %v1063
        %v1080 = vrcp.pop %v1066
        %v1081 = vrcp.pop %v1069
        %v1082 = vrcp.pop %v1072
        %v1083 = vrcp.pop %v1075
        %v1084 = vmul.f32 %v1037, %v1076
        %v1085 = vmul.f32 %v1039, %v1077
        %v1086 = vmul.f32 %v1041, %v1078
        %v1087 = vmul.f32 %v1043, %v1079
        %v1088 = vmul.f32 %v1045, %v1080
        %v1089 = vmul.f32 %v1047, %v1081
        %v1090 = vmul.f32 %v1049, %v1082
        %v1091 = vmul.f32 %v1051, %v1083
        %v1092 = vpack.c.bf16 %v1085, %v1084
        %v1093 = vpack.c.bf16 %v1087, %v1086
        %v1094 = vpack.c.bf16 %v1089, %v1088
        %v1095 = vpack.c.bf16 %v1091, %v1090
        %1096 = vrot.lane.b32.xlu0 %v889, 64
        %v1097 = vpop.permute.xlu0 %1096
        %1098 = vrot.lane.b32.xlu0 %v890, 64
        %v1099 = vpop.permute.xlu0 %1098
        %1100 = vrot.lane.b32.xlu0 %v891, 64
        %v1101 = vpop.permute.xlu0 %1100
        %1102 = vrot.lane.b32.xlu0 %v892, 64
        %v1103 = vpop.permute.xlu0 %1102
        %v1109 = vsel %vm1003, %v1092, 0
        %v1112 = vsel %vm1003, %v1093, 0
        %v1115 = vsel %vm1003, %v1094, 0
        %v1118 = vsel %vm1003, %v1095, 0
        %1120 = vmatprep.subr.bf16.mxu0 0
        %1121 = vmatpush1.bf16.msra.mxu0 0
        %1122 = vmatprep.subr.bf16.mxu0 0
        %1123 = vmatpush1.bf16.msra.mxu0 0
        %1124 = vmatprep.subr.bf16.mxu0 0
        %1125 = vmatpush1.bf16.msra.mxu0 0
        %1126 = vmatprep.subr.bf16.mxu0 0
        %1127 = vmatpush1.bf16.msra.mxu0 0
        %1128 = vmatprep.subr.bf16.mxu0 0
        %1129 = vmatpush1.bf16.msra.mxu0 %v1103
        %1130 = vmatprep.subr.bf16.mxu0 0
        %1131 = vmatpush1.bf16.msra.mxu0 %v1101
        %1132 = vmatprep.subr.bf16.mxu0 0
        %1133 = vmatpush1.bf16.msra.mxu0 %v1099
        %1134 = vmatprep.subr.bf16.mxu0 0
        %1135 = vmatpush1.bf16.msra.mxu0 %v1097
        %1136 = vmatprep.subr.bf16.mxu0 0
        %1137 = vmatpush2.bf16.msra.mxu0 0
        %1138 = vmatprep.subr.bf16.mxu0 0
        %1139 = vmatpush2.bf16.msra.mxu0 0
        %1140 = vmatprep.subr.bf16.mxu0 0
        %1141 = vmatpush2.bf16.msra.mxu0 0
        %1142 = vmatprep.subr.bf16.mxu0 0
        %1143 = vmatpush2.bf16.msra.mxu0 0
        %1144 = vmatprep.subr.bf16.mxu0 0
        %1145 = vmatpush2.bf16.msra.mxu0 0
        %1146 = vmatprep.subr.bf16.mxu0 0
        %1147 = vmatpush2.bf16.msra.mxu0 0
        %1148 = vmatprep.subr.bf16.mxu0 0
        %1149 = vmatpush2.bf16.msra.mxu0 0
        %1150 = vmatprep.subr.bf16.mxu0 0
        %1151 = vmatpush2.bf16.msra.mxu0 0
        %1152 = vmatprep.mubr.bf16.mxu0 0
        %1153 = vmatmul.mubr.bf16.gmra.mxu0 %v1109
        %v1154 = vpop.f32.mrf.mxu0
        %v1155 = vadd.f32 0.0, %v1154
        %v1156 = vpop.f32.mrf.mxu0
        %v1157 = vpop.f32.mrf.mxu0
        %v1158 = vadd.f32 0.0, %v1157
        %v1159 = vpop.f32.mrf.mxu0
        %1160 = vmatprep.mubr.bf16.mxu0 0
        %1161 = vmatmul.mubr.bf16.gmra.mxu0 %v1112
        %v1162 = vpop.f32.mrf.mxu0
        %v1163 = vadd.f32 0.0, %v1162
        %v1164 = vpop.f32.mrf.mxu0
        %v1165 = vpop.f32.mrf.mxu0
        %v1166 = vadd.f32 0.0, %v1165
        %v1167 = vpop.f32.mrf.mxu0
        %1168 = vmatprep.mubr.bf16.mxu0 0
        %1169 = vmatmul.mubr.bf16.gmra.mxu0 %v1115
        %v1170 = vpop.f32.mrf.mxu0
        %v1171 = vadd.f32 0.0, %v1170
        %v1172 = vpop.f32.mrf.mxu0
        %v1173 = vpop.f32.mrf.mxu0
        %v1174 = vadd.f32 0.0, %v1173
        %v1175 = vpop.f32.mrf.mxu0
        %1176 = vmatprep.mubr.bf16.mxu0 0
        %1177 = vmatmul.mubr.bf16.gmra.mxu0 %v1118
        %v1178 = vpop.f32.mrf.mxu0
        %v1179 = vadd.f32 0.0, %v1178
        %v1180 = vpop.f32.mrf.mxu0
        %v1181 = vpop.f32.mrf.mxu0
        %v1182 = vadd.f32 0.0, %v1181
        %v1183 = vpop.f32.mrf.mxu0
        %1184 = vdwg.mxu0
        %s1185 = scalar_lea.vmem [#allocation2], 64
        %v1186 = vld [vmem:[%s1185] sm:$0xff]
        %v1187 = vld [vmem:[%s1185 + $0x8] sm:$0xff]
        %v1188 = vld [vmem:[%s1185 + $0x10] sm:$0xff]
        %v1189 = vld [vmem:[%s1185 + $0x18] sm:$0xff]
        %v1190 = vld [vmem:[%s1185 + $0x20] sm:$0xff]
        %v1191 = vld [vmem:[%s1185 + $0x28] sm:$0xff]
        %v1192 = vld [vmem:[%s1185 + $0x30] sm:$0xff]
        %v1193 = vld [vmem:[%s1185 + $0x38] sm:$0xff]
        %1194 = vrot.lane.b32.xlu0 %v889, 120
        %v1195 = vpop.permute.xlu0 %1194
        %1196 = vrot.lane.b32.xlu0 %v890, 120
        %v1197 = vpop.permute.xlu0 %1196
        %1198 = vrot.lane.b32.xlu0 %v891, 120
        %v1199 = vpop.permute.xlu0 %1198
        %1200 = vrot.lane.b32.xlu0 %v892, 120
        %v1201 = vpop.permute.xlu0 %1200
        %1202 = vrot.lane.b32.xlu0 %v889, 88
        %v1203 = vpop.permute.xlu0 %1202
        %1204 = vrot.lane.b32.xlu0 %v890, 88
        %v1205 = vpop.permute.xlu0 %1204
        %1206 = vrot.lane.b32.xlu0 %v891, 88
        %v1207 = vpop.permute.xlu0 %1206
        %1208 = vrot.lane.b32.xlu0 %v892, 88
        %v1209 = vpop.permute.xlu0 %1208
        %v1211 = vsel %vm913, %v1195, 0
        %v1214 = vsel %vm913, %v1197, 0
        %v1217 = vsel %vm913, %v1199, 0
        %v1220 = vsel %vm913, %v1201, 0
        %v1223 = vsel %vm913, %v1203, 0
        %v1226 = vsel %vm913, %v1205, 0
        %v1229 = vsel %vm913, %v1207, 0
        %v1232 = vsel %vm913, %v1209, 0
        %1234 = vmatprep.subr.bf16.mxu0 0
        %1235 = vmatpush1.bf16.xpose.msra.mxu0 0
        %1236 = vmatprep.subr.bf16.mxu0 0
        %1237 = vmatpush1.bf16.xpose.msra.mxu0 0
        %1238 = vmatprep.subr.bf16.mxu0 0
        %1239 = vmatpush1.bf16.xpose.msra.mxu0 0
        %1240 = vmatprep.subr.bf16.mxu0 0
        %1241 = vmatpush1.bf16.xpose.msra.mxu0 0
        %1242 = vmatprep.subr.bf16.mxu0 0
        %1243 = vmatpush1.bf16.xpose.msra.mxu0 %v1232
        %1244 = vmatprep.subr.bf16.mxu0 0
        %1245 = vmatpush1.bf16.xpose.msra.mxu0 %v1229
        %1246 = vmatprep.subr.bf16.mxu0 0
        %1247 = vmatpush1.bf16.xpose.msra.mxu0 %v1226
        %1248 = vmatprep.subr.bf16.mxu0 0
        %1249 = vmatpush1.bf16.xpose.msra.mxu0 %v1223
        %1250 = vmatprep.subr.bf16.mxu0 0
        %1251 = vmatpush2.bf16.xpose.msra.mxu0 0
        %1252 = vmatprep.subr.bf16.mxu0 0
        %1253 = vmatpush2.bf16.xpose.msra.mxu0 0
        %1254 = vmatprep.subr.bf16.mxu0 0
        %1255 = vmatpush2.bf16.xpose.msra.mxu0 0
        %1256 = vmatprep.subr.bf16.mxu0 0
        %1257 = vmatpush2.bf16.xpose.msra.mxu0 0
        %1258 = vmatprep.subr.bf16.mxu0 0
        %1259 = vmatpush2.bf16.xpose.msra.mxu0 0
        %1260 = vmatprep.subr.bf16.mxu0 0
        %1261 = vmatpush2.bf16.xpose.msra.mxu0 0
        %1262 = vmatprep.subr.bf16.mxu0 0
        %1263 = vmatpush2.bf16.xpose.msra.mxu0 0
        %1264 = vmatprep.subr.bf16.mxu0 0
        %1265 = vmatpush2.bf16.xpose.msra.mxu0 0
        %1266 = vmatprep.mubr.bf16.mxu0 0
        %1267 = vmatmul.mubr.bf16.gmra.mxu0 %v1211
        %v1268 = vpop.f32.mrf.mxu0
        %v1269 = vadd.f32 %v1186, %v1268
        %v1270 = vpop.f32.mrf.mxu0
        %v1271 = vpop.f32.mrf.mxu0
        %v1272 = vadd.f32 %v1187, %v1271
        %v1273 = vpop.f32.mrf.mxu0
        %1274 = vmatprep.mubr.bf16.mxu0 0
        %1275 = vmatmul.mubr.bf16.gmra.mxu0 %v1214
        %v1276 = vpop.f32.mrf.mxu0
        %v1277 = vadd.f32 %v1188, %v1276
        %v1278 = vpop.f32.mrf.mxu0
        %v1279 = vpop.f32.mrf.mxu0
        %v1280 = vadd.f32 %v1189, %v1279
        %v1281 = vpop.f32.mrf.mxu0
        %1282 = vmatprep.mubr.bf16.mxu0 0
        %1283 = vmatmul.mubr.bf16.gmra.mxu0 %v1217
        %v1284 = vpop.f32.mrf.mxu0
        %v1285 = vadd.f32 %v1190, %v1284
        %v1286 = vpop.f32.mrf.mxu0
        %v1287 = vpop.f32.mrf.mxu0
        %v1288 = vadd.f32 %v1191, %v1287
        %v1289 = vpop.f32.mrf.mxu0
        %1290 = vmatprep.mubr.bf16.mxu0 0
        %1291 = vmatmul.mubr.bf16.gmra.mxu0 %v1220
        %v1292 = vpop.f32.mrf.mxu0
        %v1293 = vadd.f32 %v1192, %v1292
        %v1294 = vpop.f32.mrf.mxu0
        %v1295 = vpop.f32.mrf.mxu0
        %v1296 = vadd.f32 %v1193, %v1295
        %v1297 = vpop.f32.mrf.mxu0
        %1298 = vdwg.mxu0
        %v1299 = vsel %vm1003, %v1269, -inf
        %1300 = vmax.xlane.f32.xlu0 %v1299
        %v1301 = vpop.xlane.xlu0 %1300
        %v1302 = vsel %vm1003, %v1272, -inf
        %1303 = vmax.xlane.f32.xlu0 %v1302
        %v1304 = vpop.xlane.xlu0 %1303
        %v1305 = vsel %vm1003, %v1277, -inf
        %1306 = vmax.xlane.f32.xlu0 %v1305
        %v1307 = vpop.xlane.xlu0 %1306
        %v1308 = vsel %vm1003, %v1280, -inf
        %1309 = vmax.xlane.f32.xlu0 %v1308
        %v1310 = vpop.xlane.xlu0 %1309
        %v1311 = vsel %vm1003, %v1285, -inf
        %1312 = vmax.xlane.f32.xlu0 %v1311
        %v1313 = vpop.xlane.xlu0 %1312
        %v1314 = vsel %vm1003, %v1288, -inf
        %1315 = vmax.xlane.f32.xlu0 %v1314
        %v1316 = vpop.xlane.xlu0 %1315
        %v1317 = vsel %vm1003, %v1293, -inf
        %1318 = vmax.xlane.f32.xlu0 %v1317
        %v1319 = vpop.xlane.xlu0 %1318
        %v1320 = vsel %vm1003, %v1296, -inf
        %1321 = vmax.xlane.f32.xlu0 %v1320
        %v1322 = vpop.xlane.xlu0 %1321
        %v1323 = vsub.f32 %v1269, %v1301
        %v1324 = vsub.f32 %v1272, %v1304
        %v1325 = vsub.f32 %v1277, %v1307
        %v1326 = vsub.f32 %v1280, %v1310
        %v1327 = vsub.f32 %v1285, %v1313
        %v1328 = vsub.f32 %v1288, %v1316
        %v1329 = vsub.f32 %v1293, %v1319
        %v1330 = vsub.f32 %v1296, %v1322
        %v1331 = vmul.f32 %v1323, 1.442695
        %v1332 = vpow.pop %v1331
        %v1333 = vmul.f32 %v1324, 1.442695
        %v1334 = vpow.pop %v1333
        %v1335 = vmul.f32 %v1325, 1.442695
        %v1336 = vpow.pop %v1335
        %v1337 = vmul.f32 %v1326, 1.442695
        %v1338 = vpow.pop %v1337
        %v1339 = vmul.f32 %v1327, 1.442695
        %v1340 = vpow.pop %v1339
        %v1341 = vmul.f32 %v1328, 1.442695
        %v1342 = vpow.pop %v1341
        %v1343 = vmul.f32 %v1329, 1.442695
        %v1344 = vpow.pop %v1343
        %v1345 = vmul.f32 %v1330, 1.442695
        %v1346 = vpow.pop %v1345
        %v1347 = vsel %vm1003, %v1332, 0.0
        %1348 = vadd.xlane.f32.xlu0 %v1347
        %v1349 = vpop.xlane.xlu0 %1348
        %v1350 = vsel %vm1003, %v1334, 0.0
        %1351 = vadd.xlane.f32.xlu0 %v1350
        %v1352 = vpop.xlane.xlu0 %1351
        %v1353 = vsel %vm1003, %v1336, 0.0
        %1354 = vadd.xlane.f32.xlu0 %v1353
        %v1355 = vpop.xlane.xlu0 %1354
        %v1356 = vsel %vm1003, %v1338, 0.0
        %1357 = vadd.xlane.f32.xlu0 %v1356
        %v1358 = vpop.xlane.xlu0 %1357
        %v1359 = vsel %vm1003, %v1340, 0.0
        %1360 = vadd.xlane.f32.xlu0 %v1359
        %v1361 = vpop.xlane.xlu0 %1360
        %v1362 = vsel %vm1003, %v1342, 0.0
        %1363 = vadd.xlane.f32.xlu0 %v1362
        %v1364 = vpop.xlane.xlu0 %1363
        %v1365 = vsel %vm1003, %v1344, 0.0
        %1366 = vadd.xlane.f32.xlu0 %v1365
        %v1367 = vpop.xlane.xlu0 %1366
        %v1368 = vsel %vm1003, %v1346, 0.0
        %1369 = vadd.xlane.f32.xlu0 %v1368
        %v1370 = vpop.xlane.xlu0 %1369
        %v1371 = vrcp.pop %v1349
        %v1372 = vrcp.pop %v1352
        %v1373 = vrcp.pop %v1355
        %v1374 = vrcp.pop %v1358
        %v1375 = vrcp.pop %v1361
        %v1376 = vrcp.pop %v1364
        %v1377 = vrcp.pop %v1367
        %v1378 = vrcp.pop %v1370
        %v1379 = vmul.f32 %v1332, %v1371
        %v1380 = vmul.f32 %v1334, %v1372
        %v1381 = vmul.f32 %v1336, %v1373
        %v1382 = vmul.f32 %v1338, %v1374
        %v1383 = vmul.f32 %v1340, %v1375
        %v1384 = vmul.f32 %v1342, %v1376
        %v1385 = vmul.f32 %v1344, %v1377
        %v1386 = vmul.f32 %v1346, %v1378
        %v1387 = vpack.c.bf16 %v1380, %v1379
        %v1388 = vpack.c.bf16 %v1382, %v1381
        %v1389 = vpack.c.bf16 %v1384, %v1383
        %v1390 = vpack.c.bf16 %v1386, %v1385
        %1391 = vrot.lane.b32.xlu0 %v889, 56
        %v1392 = vpop.permute.xlu0 %1391
        %1393 = vrot.lane.b32.xlu0 %v890, 56
        %v1394 = vpop.permute.xlu0 %1393
        %1395 = vrot.lane.b32.xlu0 %v891, 56
        %v1396 = vpop.permute.xlu0 %1395
        %1397 = vrot.lane.b32.xlu0 %v892, 56
        %v1398 = vpop.permute.xlu0 %1397
        %v1404 = vsel %vm1003, %v1387, 0
        %v1407 = vsel %vm1003, %v1388, 0
        %v1410 = vsel %vm1003, %v1389, 0
        %v1413 = vsel %vm1003, %v1390, 0
        %1415 = vmatprep.subr.bf16.mxu0 0
        %1416 = vmatpush1.bf16.msra.mxu0 0
        %1417 = vmatprep.subr.bf16.mxu0 0
        %1418 = vmatpush1.bf16.msra.mxu0 0
        %1419 = vmatprep.subr.bf16.mxu0 0
        %1420 = vmatpush1.bf16.msra.mxu0 0
        %1421 = vmatprep.subr.bf16.mxu0 0
        %1422 = vmatpush1.bf16.msra.mxu0 0
        %1423 = vmatprep.subr.bf16.mxu0 0
        %1424 = vmatpush1.bf16.msra.mxu0 %v1398
        %1425 = vmatprep.subr.bf16.mxu0 0
        %1426 = vmatpush1.bf16.msra.mxu0 %v1396
        %1427 = vmatprep.subr.bf16.mxu0 0
        %1428 = vmatpush1.bf16.msra.mxu0 %v1394
        %1429 = vmatprep.subr.bf16.mxu0 0
        %1430 = vmatpush1.bf16.msra.mxu0 %v1392
        %1431 = vmatprep.subr.bf16.mxu0 0
        %1432 = vmatpush2.bf16.msra.mxu0 0
        %1433 = vmatprep.subr.bf16.mxu0 0
        %1434 = vmatpush2.bf16.msra.mxu0 0
        %1435 = vmatprep.subr.bf16.mxu0 0
        %1436 = vmatpush2.bf16.msra.mxu0 0
        %1437 = vmatprep.subr.bf16.mxu0 0
        %1438 = vmatpush2.bf16.msra.mxu0 0
        %1439 = vmatprep.subr.bf16.mxu0 0
        %1440 = vmatpush2.bf16.msra.mxu0 0
        %1441 = vmatprep.subr.bf16.mxu0 0
        %1442 = vmatpush2.bf16.msra.mxu0 0
        %1443 = vmatprep.subr.bf16.mxu0 0
        %1444 = vmatpush2.bf16.msra.mxu0 0
        %1445 = vmatprep.subr.bf16.mxu0 0
        %1446 = vmatpush2.bf16.msra.mxu0 0
        %1447 = vmatprep.mubr.bf16.mxu0 0
        %1448 = vmatmul.mubr.bf16.gmra.mxu0 %v1404
        %v1449 = vpop.f32.mrf.mxu0
        %v1450 = vadd.f32 0.0, %v1449
        %v1451 = vpop.f32.mrf.mxu0
        %v1452 = vpop.f32.mrf.mxu0
        %v1453 = vadd.f32 0.0, %v1452
        %v1454 = vpop.f32.mrf.mxu0
        %1455 = vmatprep.mubr.bf16.mxu0 0
        %1456 = vmatmul.mubr.bf16.gmra.mxu0 %v1407
        %v1457 = vpop.f32.mrf.mxu0
        %v1458 = vadd.f32 0.0, %v1457
        %v1459 = vpop.f32.mrf.mxu0
        %v1460 = vpop.f32.mrf.mxu0
        %v1461 = vadd.f32 0.0, %v1460
        %v1462 = vpop.f32.mrf.mxu0
        %1463 = vmatprep.mubr.bf16.mxu0 0
        %1464 = vmatmul.mubr.bf16.gmra.mxu0 %v1410
        %v1465 = vpop.f32.mrf.mxu0
        %v1466 = vadd.f32 0.0, %v1465
        %v1467 = vpop.f32.mrf.mxu0
        %v1468 = vpop.f32.mrf.mxu0
        %v1469 = vadd.f32 0.0, %v1468
        %v1470 = vpop.f32.mrf.mxu0
        %1471 = vmatprep.mubr.bf16.mxu0 0
        %1472 = vmatmul.mubr.bf16.gmra.mxu0 %v1413
        %v1473 = vpop.f32.mrf.mxu0
        %v1474 = vadd.f32 0.0, %v1473
        %v1475 = vpop.f32.mrf.mxu0
        %v1476 = vpop.f32.mrf.mxu0
        %v1477 = vadd.f32 0.0, %v1476
        %v1478 = vpop.f32.mrf.mxu0
        %1479 = vdwg.mxu0
        %s1480 = scalar_lea.vmem [#allocation2], 128
        %v1481 = vld [vmem:[%s1480] sm:$0xff]
        %v1482 = vld [vmem:[%s1480 + $0x8] sm:$0xff]
        %v1483 = vld [vmem:[%s1480 + $0x10] sm:$0xff]
        %v1484 = vld [vmem:[%s1480 + $0x18] sm:$0xff]
        %v1485 = vld [vmem:[%s1480 + $0x20] sm:$0xff]
        %v1486 = vld [vmem:[%s1480 + $0x28] sm:$0xff]
        %v1487 = vld [vmem:[%s1480 + $0x30] sm:$0xff]
        %v1488 = vld [vmem:[%s1480 + $0x38] sm:$0xff]
        %1489 = vrot.lane.b32.xlu0 %v889, 112
        %v1490 = vpop.permute.xlu0 %1489
        %1491 = vrot.lane.b32.xlu0 %v890, 112
        %v1492 = vpop.permute.xlu0 %1491
        %1493 = vrot.lane.b32.xlu0 %v891, 112
        %v1494 = vpop.permute.xlu0 %1493
        %1495 = vrot.lane.b32.xlu0 %v892, 112
        %v1496 = vpop.permute.xlu0 %1495
        %1497 = vrot.lane.b32.xlu0 %v889, 80
        %v1498 = vpop.permute.xlu0 %1497
        %1499 = vrot.lane.b32.xlu0 %v890, 80
        %v1500 = vpop.permute.xlu0 %1499
        %1501 = vrot.lane.b32.xlu0 %v891, 80
        %v1502 = vpop.permute.xlu0 %1501
        %1503 = vrot.lane.b32.xlu0 %v892, 80
        %v1504 = vpop.permute.xlu0 %1503
        %v1506 = vsel %vm913, %v1490, 0
        %v1509 = vsel %vm913, %v1492, 0
        %v1512 = vsel %vm913, %v1494, 0
        %v1515 = vsel %vm913, %v1496, 0
        %v1518 = vsel %vm913, %v1498, 0
        %v1521 = vsel %vm913, %v1500, 0
        %v1524 = vsel %vm913, %v1502, 0
        %v1527 = vsel %vm913, %v1504, 0
        %1529 = vmatprep.subr.bf16.mxu0 0
        %1530 = vmatpush1.bf16.xpose.msra.mxu0 0
        %1531 = vmatprep.subr.bf16.mxu0 0
        %1532 = vmatpush1.bf16.xpose.msra.mxu0 0
        %1533 = vmatprep.subr.bf16.mxu0 0
        %1534 = vmatpush1.bf16.xpose.msra.mxu0 0
        %1535 = vmatprep.subr.bf16.mxu0 0
        %1536 = vmatpush1.bf16.xpose.msra.mxu0 0
        %1537 = vmatprep.subr.bf16.mxu0 0
        %1538 = vmatpush1.bf16.xpose.msra.mxu0 %v1527
        %1539 = vmatprep.subr.bf16.mxu0 0
        %1540 = vmatpush1.bf16.xpose.msra.mxu0 %v1524
        %1541 = vmatprep.subr.bf16.mxu0 0
        %1542 = vmatpush1.bf16.xpose.msra.mxu0 %v1521
        %1543 = vmatprep.subr.bf16.mxu0 0
        %1544 = vmatpush1.bf16.xpose.msra.mxu0 %v1518
        %1545 = vmatprep.subr.bf16.mxu0 0
        %1546 = vmatpush2.bf16.xpose.msra.mxu0 0
        %1547 = vmatprep.subr.bf16.mxu0 0
        %1548 = vmatpush2.bf16.xpose.msra.mxu0 0
        %1549 = vmatprep.subr.bf16.mxu0 0
        %1550 = vmatpush2.bf16.xpose.msra.mxu0 0
        %1551 = vmatprep.subr.bf16.mxu0 0
        %1552 = vmatpush2.bf16.xpose.msra.mxu0 0
        %1553 = vmatprep.subr.bf16.mxu0 0
        %1554 = vmatpush2.bf16.xpose.msra.mxu0 0
        %1555 = vmatprep.subr.bf16.mxu0 0
        %1556 = vmatpush2.bf16.xpose.msra.mxu0 0
        %1557 = vmatprep.subr.bf16.mxu0 0
        %1558 = vmatpush2.bf16.xpose.msra.mxu0 0
        %1559 = vmatprep.subr.bf16.mxu0 0
        %1560 = vmatpush2.bf16.xpose.msra.mxu0 0
        %1561 = vmatprep.mubr.bf16.mxu0 0
        %1562 = vmatmul.mubr.bf16.gmra.mxu0 %v1506
        %v1563 = vpop.f32.mrf.mxu0
        %v1564 = vadd.f32 %v1481, %v1563
        %v1565 = vpop.f32.mrf.mxu0
        %v1566 = vpop.f32.mrf.mxu0
        %v1567 = vadd.f32 %v1482, %v1566
        %v1568 = vpop.f32.mrf.mxu0
        %1569 = vmatprep.mubr.bf16.mxu0 0
        %1570 = vmatmul.mubr.bf16.gmra.mxu0 %v1509
        %v1571 = vpop.f32.mrf.mxu0
        %v1572 = vadd.f32 %v1483, %v1571
        %v1573 = vpop.f32.mrf.mxu0
        %v1574 = vpop.f32.mrf.mxu0
        %v1575 = vadd.f32 %v1484, %v1574
        %v1576 = vpop.f32.mrf.mxu0
        %1577 = vmatprep.mubr.bf16.mxu0 0
        %1578 = vmatmul.mubr.bf16.gmra.mxu0 %v1512
        %v1579 = vpop.f32.mrf.mxu0
        %v1580 = vadd.f32 %v1485, %v1579
        %v1581 = vpop.f32.mrf.mxu0
        %v1582 = vpop.f32.mrf.mxu0
        %v1583 = vadd.f32 %v1486, %v1582
        %v1584 = vpop.f32.mrf.mxu0
        %1585 = vmatprep.mubr.bf16.mxu0 0
        %1586 = vmatmul.mubr.bf16.gmra.mxu0 %v1515
        %v1587 = vpop.f32.mrf.mxu0
        %v1588 = vadd.f32 %v1487, %v1587
        %v1589 = vpop.f32.mrf.mxu0
        %v1590 = vpop.f32.mrf.mxu0
        %v1591 = vadd.f32 %v1488, %v1590
        %v1592 = vpop.f32.mrf.mxu0
        %1593 = vdwg.mxu0
        %v1594 = vsel %vm1003, %v1564, -inf
        %1595 = vmax.xlane.f32.xlu0 %v1594
        %v1596 = vpop.xlane.xlu0 %1595
        %v1597 = vsel %vm1003, %v1567, -inf
        %1598 = vmax.xlane.f32.xlu0 %v1597
        %v1599 = vpop.xlane.xlu0 %1598
        %v1600 = vsel %vm1003, %v1572, -inf
        %1601 = vmax.xlane.f32.xlu0 %v1600
        %v1602 = vpop.xlane.xlu0 %1601
        %v1603 = vsel %vm1003, %v1575, -inf
        %1604 = vmax.xlane.f32.xlu0 %v1603
        %v1605 = vpop.xlane.xlu0 %1604
        %v1606 = vsel %vm1003, %v1580, -inf
        %1607 = vmax.xlane.f32.xlu0 %v1606
        %v1608 = vpop.xlane.xlu0 %1607
        %v1609 = vsel %vm1003, %v1583, -inf
        %1610 = vmax.xlane.f32.xlu0 %v1609
        %v1611 = vpop.xlane.xlu0 %1610
        %v1612 = vsel %vm1003, %v1588, -inf
        %1613 = vmax.xlane.f32.xlu0 %v1612
        %v1614 = vpop.xlane.xlu0 %1613
        %v1615 = vsel %vm1003, %v1591, -inf
        %1616 = vmax.xlane.f32.xlu0 %v1615
        %v1617 = vpop.xlane.xlu0 %1616
        %v1618 = vsub.f32 %v1564, %v1596
        %v1619 = vsub.f32 %v1567, %v1599
        %v1620 = vsub.f32 %v1572, %v1602
        %v1621 = vsub.f32 %v1575, %v1605
        %v1622 = vsub.f32 %v1580, %v1608
        %v1623 = vsub.f32 %v1583, %v1611
        %v1624 = vsub.f32 %v1588, %v1614
        %v1625 = vsub.f32 %v1591, %v1617
        %v1626 = vmul.f32 %v1618, 1.442695
        %v1627 = vpow.pop %v1626
        %v1628 = vmul.f32 %v1619, 1.442695
        %v1629 = vpow.pop %v1628
        %v1630 = vmul.f32 %v1620, 1.442695
        %v1631 = vpow.pop %v1630
        %v1632 = vmul.f32 %v1621, 1.442695
        %v1633 = vpow.pop %v1632
        %v1634 = vmul.f32 %v1622, 1.442695
        %v1635 = vpow.pop %v1634
        %v1636 = vmul.f32 %v1623, 1.442695
        %v1637 = vpow.pop %v1636
        %v1638 = vmul.f32 %v1624, 1.442695
        %v1639 = vpow.pop %v1638
        %v1640 = vmul.f32 %v1625, 1.442695
        %v1641 = vpow.pop %v1640
        %v1642 = vsel %vm1003, %v1627, 0.0
        %1643 = vadd.xlane.f32.xlu0 %v1642
        %v1644 = vpop.xlane.xlu0 %1643
        %v1645 = vsel %vm1003, %v1629, 0.0
        %1646 = vadd.xlane.f32.xlu0 %v1645
        %v1647 = vpop.xlane.xlu0 %1646
        %v1648 = vsel %vm1003, %v1631, 0.0
        %1649 = vadd.xlane.f32.xlu0 %v1648
        %v1650 = vpop.xlane.xlu0 %1649
        %v1651 = vsel %vm1003, %v1633, 0.0
        %1652 = vadd.xlane.f32.xlu0 %v1651
        %v1653 = vpop.xlane.xlu0 %1652
        %v1654 = vsel %vm1003, %v1635, 0.0
        %1655 = vadd.xlane.f32.xlu0 %v1654
        %v1656 = vpop.xlane.xlu0 %1655
        %v1657 = vsel %vm1003, %v1637, 0.0
        %1658 = vadd.xlane.f32.xlu0 %v1657
        %v1659 = vpop.xlane.xlu0 %1658
        %v1660 = vsel %vm1003, %v1639, 0.0
        %1661 = vadd.xlane.f32.xlu0 %v1660
        %v1662 = vpop.xlane.xlu0 %1661
        %v1663 = vsel %vm1003, %v1641, 0.0
        %1664 = vadd.xlane.f32.xlu0 %v1663
        %v1665 = vpop.xlane.xlu0 %1664
        %v1666 = vrcp.pop %v1644
        %v1667 = vrcp.pop %v1647
        %v1668 = vrcp.pop %v1650
        %v1669 = vrcp.pop %v1653
        %v1670 = vrcp.pop %v1656
        %v1671 = vrcp.pop %v1659
        %v1672 = vrcp.pop %v1662
        %v1673 = vrcp.pop %v1665
        %v1674 = vmul.f32 %v1627, %v1666
        %v1675 = vmul.f32 %v1629, %v1667
        %v1676 = vmul.f32 %v1631, %v1668
        %v1677 = vmul.f32 %v1633, %v1669
        %v1678 = vmul.f32 %v1635, %v1670
        %v1679 = vmul.f32 %v1637, %v1671
        %v1680 = vmul.f32 %v1639, %v1672
        %v1681 = vmul.f32 %v1641, %v1673
        %v1682 = vpack.c.bf16 %v1675, %v1674
        %v1683 = vpack.c.bf16 %v1677, %v1676
        %v1684 = vpack.c.bf16 %v1679, %v1678
        %v1685 = vpack.c.bf16 %v1681, %v1680
        %1686 = vrot.lane.b32.xlu0 %v889, 48
        %v1687 = vpop.permute.xlu0 %1686
        %1688 = vrot.lane.b32.xlu0 %v890, 48
        %v1689 = vpop.permute.xlu0 %1688
        %1690 = vrot.lane.b32.xlu0 %v891, 48
        %v1691 = vpop.permute.xlu0 %1690
        %1692 = vrot.lane.b32.xlu0 %v892, 48
        %v1693 = vpop.permute.xlu0 %1692
        %v1699 = vsel %vm1003, %v1682, 0
        %v1702 = vsel %vm1003, %v1683, 0
        %v1705 = vsel %vm1003, %v1684, 0
        %v1708 = vsel %vm1003, %v1685, 0
        %1710 = vmatprep.subr.bf16.mxu0 0
        %1711 = vmatpush1.bf16.msra.mxu0 0
        %1712 = vmatprep.subr.bf16.mxu0 0
        %1713 = vmatpush1.bf16.msra.mxu0 0
        %1714 = vmatprep.subr.bf16.mxu0 0
        %1715 = vmatpush1.bf16.msra.mxu0 0
        %1716 = vmatprep.subr.bf16.mxu0 0
        %1717 = vmatpush1.bf16.msra.mxu0 0
        %1718 = vmatprep.subr.bf16.mxu0 0
        %1719 = vmatpush1.bf16.msra.mxu0 %v1693
        %1720 = vmatprep.subr.bf16.mxu0 0
        %1721 = vmatpush1.bf16.msra.mxu0 %v1691
        %1722 = vmatprep.subr.bf16.mxu0 0
        %1723 = vmatpush1.bf16.msra.mxu0 %v1689
        %1724 = vmatprep.subr.bf16.mxu0 0
        %1725 = vmatpush1.bf16.msra.mxu0 %v1687
        %1726 = vmatprep.subr.bf16.mxu0 0
        %1727 = vmatpush2.bf16.msra.mxu0 0
        %1728 = vmatprep.subr.bf16.mxu0 0
        %1729 = vmatpush2.bf16.msra.mxu0 0
        %1730 = vmatprep.subr.bf16.mxu0 0
        %1731 = vmatpush2.bf16.msra.mxu0 0
        %1732 = vmatprep.subr.bf16.mxu0 0
        %1733 = vmatpush2.bf16.msra.mxu0 0
        %1734 = vmatprep.subr.bf16.mxu0 0
        %1735 = vmatpush2.bf16.msra.mxu0 0
        %1736 = vmatprep.subr.bf16.mxu0 0
        %1737 = vmatpush2.bf16.msra.mxu0 0
        %1738 = vmatprep.subr.bf16.mxu0 0
        %1739 = vmatpush2.bf16.msra.mxu0 0
        %1740 = vmatprep.subr.bf16.mxu0 0
        %1741 = vmatpush2.bf16.msra.mxu0 0
        %1742 = vmatprep.mubr.bf16.mxu0 0
        %1743 = vmatmul.mubr.bf16.gmra.mxu0 %v1699
        %v1744 = vpop.f32.mrf.mxu0
        %v1745 = vadd.f32 0.0, %v1744
        %v1746 = vpop.f32.mrf.mxu0
        %v1747 = vpop.f32.mrf.mxu0
        %v1748 = vadd.f32 0.0, %v1747
        %v1749 = vpop.f32.mrf.mxu0
        %1750 = vmatprep.mubr.bf16.mxu0 0
        %1751 = vmatmul.mubr.bf16.gmra.mxu0 %v1702
        %v1752 = vpop.f32.mrf.mxu0
        %v1753 = vadd.f32 0.0, %v1752
        %v1754 = vpop.f32.mrf.mxu0
        %v1755 = vpop.f32.mrf.mxu0
        %v1756 = vadd.f32 0.0, %v1755
        %v1757 = vpop.f32.mrf.mxu0
        %1758 = vmatprep.mubr.bf16.mxu0 0
        %1759 = vmatmul.mubr.bf16.gmra.mxu0 %v1705
        %v1760 = vpop.f32.mrf.mxu0
        %v1761 = vadd.f32 0.0, %v1760
        %v1762 = vpop.f32.mrf.mxu0
        %v1763 = vpop.f32.mrf.mxu0
        %v1764 = vadd.f32 0.0, %v1763
        %v1765 = vpop.f32.mrf.mxu0
        %1766 = vmatprep.mubr.bf16.mxu0 0
        %1767 = vmatmul.mubr.bf16.gmra.mxu0 %v1708
        %v1768 = vpop.f32.mrf.mxu0
        %v1769 = vadd.f32 0.0, %v1768
        %v1770 = vpop.f32.mrf.mxu0
        %v1771 = vpop.f32.mrf.mxu0
        %v1772 = vadd.f32 0.0, %v1771
        %v1773 = vpop.f32.mrf.mxu0
        %1774 = vdwg.mxu0
        %s1775 = scalar_lea.vmem [#allocation2], 192
        %v1776 = vld [vmem:[%s1775] sm:$0xff]
        %v1777 = vld [vmem:[%s1775 + $0x8] sm:$0xff]
        %v1778 = vld [vmem:[%s1775 + $0x10] sm:$0xff]
        %v1779 = vld [vmem:[%s1775 + $0x18] sm:$0xff]
        %v1780 = vld [vmem:[%s1775 + $0x20] sm:$0xff]
        %v1781 = vld [vmem:[%s1775 + $0x28] sm:$0xff]
        %v1782 = vld [vmem:[%s1775 + $0x30] sm:$0xff]
        %v1783 = vld [vmem:[%s1775 + $0x38] sm:$0xff]
        %1784 = vrot.lane.b32.xlu0 %v889, 104
        %v1785 = vpop.permute.xlu0 %1784
        %1786 = vrot.lane.b32.xlu0 %v890, 104
        %v1787 = vpop.permute.xlu0 %1786
        %1788 = vrot.lane.b32.xlu0 %v891, 104
        %v1789 = vpop.permute.xlu0 %1788
        %1790 = vrot.lane.b32.xlu0 %v892, 104
        %v1791 = vpop.permute.xlu0 %1790
        %1792 = vrot.lane.b32.xlu0 %v889, 72
        %v1793 = vpop.permute.xlu0 %1792
        %1794 = vrot.lane.b32.xlu0 %v890, 72
        %v1795 = vpop.permute.xlu0 %1794
        %1796 = vrot.lane.b32.xlu0 %v891, 72
        %v1797 = vpop.permute.xlu0 %1796
        %1798 = vrot.lane.b32.xlu0 %v892, 72
        %v1799 = vpop.permute.xlu0 %1798
        %v1801 = vsel %vm913, %v1785, 0
        %v1804 = vsel %vm913, %v1787, 0
        %v1807 = vsel %vm913, %v1789, 0
        %v1810 = vsel %vm913, %v1791, 0
        %v1813 = vsel %vm913, %v1793, 0
        %v1816 = vsel %vm913, %v1795, 0
        %v1819 = vsel %vm913, %v1797, 0
        %v1822 = vsel %vm913, %v1799, 0
        %1824 = vmatprep.subr.bf16.mxu0 0
        %1825 = vmatpush1.bf16.xpose.msra.mxu0 0
        %1826 = vmatprep.subr.bf16.mxu0 0
        %1827 = vmatpush1.bf16.xpose.msra.mxu0 0
        %1828 = vmatprep.subr.bf16.mxu0 0
        %1829 = vmatpush1.bf16.xpose.msra.mxu0 0
        %1830 = vmatprep.subr.bf16.mxu0 0
        %1831 = vmatpush1.bf16.xpose.msra.mxu0 0
        %1832 = vmatprep.subr.bf16.mxu0 0
        %1833 = vmatpush1.bf16.xpose.msra.mxu0 %v1822
        %1834 = vmatprep.subr.bf16.mxu0 0
        %1835 = vmatpush1.bf16.xpose.msra.mxu0 %v1819
        %1836 = vmatprep.subr.bf16.mxu0 0
        %1837 = vmatpush1.bf16.xpose.msra.mxu0 %v1816
        %1838 = vmatprep.subr.bf16.mxu0 0
        %1839 = vmatpush1.bf16.xpose.msra.mxu0 %v1813
        %1840 = vmatprep.subr.bf16.mxu0 0
        %1841 = vmatpush2.bf16.xpose.msra.mxu0 0
        %1842 = vmatprep.subr.bf16.mxu0 0
        %1843 = vmatpush2.bf16.xpose.msra.mxu0 0
        %1844 = vmatprep.subr.bf16.mxu0 0
        %1845 = vmatpush2.bf16.xpose.msra.mxu0 0
        %1846 = vmatprep.subr.bf16.mxu0 0
        %1847 = vmatpush2.bf16.xpose.msra.mxu0 0
        %1848 = vmatprep.subr.bf16.mxu0 0
        %1849 = vmatpush2.bf16.xpose.msra.mxu0 0
        %1850 = vmatprep.subr.bf16.mxu0 0
        %1851 = vmatpush2.bf16.xpose.msra.mxu0 0
        %1852 = vmatprep.subr.bf16.mxu0 0
        %1853 = vmatpush2.bf16.xpose.msra.mxu0 0
        %1854 = vmatprep.subr.bf16.mxu0 0
        %1855 = vmatpush2.bf16.xpose.msra.mxu0 0
        %1856 = vmatprep.mubr.bf16.mxu0 0
        %1857 = vmatmul.mubr.bf16.gmra.mxu0 %v1801
        %v1858 = vpop.f32.mrf.mxu0
        %v1859 = vadd.f32 %v1776, %v1858
        %v1860 = vpop.f32.mrf.mxu0
        %v1861 = vpop.f32.mrf.mxu0
        %v1862 = vadd.f32 %v1777, %v1861
        %v1863 = vpop.f32.mrf.mxu0
        %1864 = vmatprep.mubr.bf16.mxu0 0
        %1865 = vmatmul.mubr.bf16.gmra.mxu0 %v1804
        %v1866 = vpop.f32.mrf.mxu0
        %v1867 = vadd.f32 %v1778, %v1866
        %v1868 = vpop.f32.mrf.mxu0
        %v1869 = vpop.f32.mrf.mxu0
        %v1870 = vadd.f32 %v1779, %v1869
        %v1871 = vpop.f32.mrf.mxu0
        %1872 = vmatprep.mubr.bf16.mxu0 0
        %1873 = vmatmul.mubr.bf16.gmra.mxu0 %v1807
        %v1874 = vpop.f32.mrf.mxu0
        %v1875 = vadd.f32 %v1780, %v1874
        %v1876 = vpop.f32.mrf.mxu0
        %v1877 = vpop.f32.mrf.mxu0
        %v1878 = vadd.f32 %v1781, %v1877
        %v1879 = vpop.f32.mrf.mxu0
        %1880 = vmatprep.mubr.bf16.mxu0 0
        %1881 = vmatmul.mubr.bf16.gmra.mxu0 %v1810
        %v1882 = vpop.f32.mrf.mxu0
        %v1883 = vadd.f32 %v1782, %v1882
        %v1884 = vpop.f32.mrf.mxu0
        %v1885 = vpop.f32.mrf.mxu0
        %v1886 = vadd.f32 %v1783, %v1885
        %v1887 = vpop.f32.mrf.mxu0
        %1888 = vdwg.mxu0
        %v1889 = vsel %vm1003, %v1859, -inf
        %1890 = vmax.xlane.f32.xlu0 %v1889
        %v1891 = vpop.xlane.xlu0 %1890
        %v1892 = vsel %vm1003, %v1862, -inf
        %1893 = vmax.xlane.f32.xlu0 %v1892
        %v1894 = vpop.xlane.xlu0 %1893
        %v1895 = vsel %vm1003, %v1867, -inf
        %1896 = vmax.xlane.f32.xlu0 %v1895
        %v1897 = vpop.xlane.xlu0 %1896
        %v1898 = vsel %vm1003, %v1870, -inf
        %1899 = vmax.xlane.f32.xlu0 %v1898
        %v1900 = vpop.xlane.xlu0 %1899
        %v1901 = vsel %vm1003, %v1875, -inf
        %1902 = vmax.xlane.f32.xlu0 %v1901
        %v1903 = vpop.xlane.xlu0 %1902
        %v1904 = vsel %vm1003, %v1878, -inf
        %1905 = vmax.xlane.f32.xlu0 %v1904
        %v1906 = vpop.xlane.xlu0 %1905
        %v1907 = vsel %vm1003, %v1883, -inf
        %1908 = vmax.xlane.f32.xlu0 %v1907
        %v1909 = vpop.xlane.xlu0 %1908
        %v1910 = vsel %vm1003, %v1886, -inf
        %1911 = vmax.xlane.f32.xlu0 %v1910
        %v1912 = vpop.xlane.xlu0 %1911
        %v1913 = vsub.f32 %v1859, %v1891
        %v1914 = vsub.f32 %v1862, %v1894
        %v1915 = vsub.f32 %v1867, %v1897
        %v1916 = vsub.f32 %v1870, %v1900
        %v1917 = vsub.f32 %v1875, %v1903
        %v1918 = vsub.f32 %v1878, %v1906
        %v1919 = vsub.f32 %v1883, %v1909
        %v1920 = vsub.f32 %v1886, %v1912
        %v1921 = vmul.f32 %v1913, 1.442695
        %v1922 = vpow.pop %v1921
        %v1923 = vmul.f32 %v1914, 1.442695
        %v1924 = vpow.pop %v1923
        %v1925 = vmul.f32 %v1915, 1.442695
        %v1926 = vpow.pop %v1925
        %v1927 = vmul.f32 %v1916, 1.442695
        %v1928 = vpow.pop %v1927
        %v1929 = vmul.f32 %v1917, 1.442695
        %v1930 = vpow.pop %v1929
        %v1931 = vmul.f32 %v1918, 1.442695
        %v1932 = vpow.pop %v1931
        %v1933 = vmul.f32 %v1919, 1.442695
        %v1934 = vpow.pop %v1933
        %v1935 = vmul.f32 %v1920, 1.442695
        %v1936 = vpow.pop %v1935
        %v1937 = vsel %vm1003, %v1922, 0.0
        %1938 = vadd.xlane.f32.xlu0 %v1937
        %v1939 = vpop.xlane.xlu0 %1938
        %v1940 = vsel %vm1003, %v1924, 0.0
        %1941 = vadd.xlane.f32.xlu0 %v1940
        %v1942 = vpop.xlane.xlu0 %1941
        %v1943 = vsel %vm1003, %v1926, 0.0
        %1944 = vadd.xlane.f32.xlu0 %v1943
        %v1945 = vpop.xlane.xlu0 %1944
        %v1946 = vsel %vm1003, %v1928, 0.0
        %1947 = vadd.xlane.f32.xlu0 %v1946
        %v1948 = vpop.xlane.xlu0 %1947
        %v1949 = vsel %vm1003, %v1930, 0.0
        %1950 = vadd.xlane.f32.xlu0 %v1949
        %v1951 = vpop.xlane.xlu0 %1950
        %v1952 = vsel %vm1003, %v1932, 0.0
        %1953 = vadd.xlane.f32.xlu0 %v1952
        %v1954 = vpop.xlane.xlu0 %1953
        %v1955 = vsel %vm1003, %v1934, 0.0
        %1956 = vadd.xlane.f32.xlu0 %v1955
        %v1957 = vpop.xlane.xlu0 %1956
        %v1958 = vsel %vm1003, %v1936, 0.0
        %1959 = vadd.xlane.f32.xlu0 %v1958
        %v1960 = vpop.xlane.xlu0 %1959
        %v1961 = vrcp.pop %v1939
        %v1962 = vrcp.pop %v1942
        %v1963 = vrcp.pop %v1945
        %v1964 = vrcp.pop %v1948
        %v1965 = vrcp.pop %v1951
        %v1966 = vrcp.pop %v1954
        %v1967 = vrcp.pop %v1957
        %v1968 = vrcp.pop %v1960
        %v1969 = vmul.f32 %v1922, %v1961
        %v1970 = vmul.f32 %v1924, %v1962
        %v1971 = vmul.f32 %v1926, %v1963
        %v1972 = vmul.f32 %v1928, %v1964
        %v1973 = vmul.f32 %v1930, %v1965
        %v1974 = vmul.f32 %v1932, %v1966
        %v1975 = vmul.f32 %v1934, %v1967
        %v1976 = vmul.f32 %v1936, %v1968
        %v1977 = vpack.c.bf16 %v1970, %v1969
        %v1978 = vpack.c.bf16 %v1972, %v1971
        %v1979 = vpack.c.bf16 %v1974, %v1973
        %v1980 = vpack.c.bf16 %v1976, %v1975
        %1981 = vrot.lane.b32.xlu0 %v889, 40
        %v1982 = vpop.permute.xlu0 %1981
        %1983 = vrot.lane.b32.xlu0 %v890, 40
        %v1984 = vpop.permute.xlu0 %1983
        %1985 = vrot.lane.b32.xlu0 %v891, 40
        %v1986 = vpop.permute.xlu0 %1985
        %1987 = vrot.lane.b32.xlu0 %v892, 40
        %v1988 = vpop.permute.xlu0 %1987
        %v1994 = vsel %vm1003, %v1977, 0
        %v1997 = vsel %vm1003, %v1978, 0
        %v2000 = vsel %vm1003, %v1979, 0
        %v2003 = vsel %vm1003, %v1980, 0
        %2005 = vmatprep.subr.bf16.mxu0 0
        %2006 = vmatpush1.bf16.msra.mxu0 0
        %2007 = vmatprep.subr.bf16.mxu0 0
        %2008 = vmatpush1.bf16.msra.mxu0 0
        %2009 = vmatprep.subr.bf16.mxu0 0
        %2010 = vmatpush1.bf16.msra.mxu0 0
        %2011 = vmatprep.subr.bf16.mxu0 0
        %2012 = vmatpush1.bf16.msra.mxu0 0
        %2013 = vmatprep.subr.bf16.mxu0 0
        %2014 = vmatpush1.bf16.msra.mxu0 %v1988
        %2015 = vmatprep.subr.bf16.mxu0 0
        %2016 = vmatpush1.bf16.msra.mxu0 %v1986
        %2017 = vmatprep.subr.bf16.mxu0 0
        %2018 = vmatpush1.bf16.msra.mxu0 %v1984
        %2019 = vmatprep.subr.bf16.mxu0 0
        %2020 = vmatpush1.bf16.msra.mxu0 %v1982
        %2021 = vmatprep.subr.bf16.mxu0 0
        %2022 = vmatpush2.bf16.msra.mxu0 0
        %2023 = vmatprep.subr.bf16.mxu0 0
        %2024 = vmatpush2.bf16.msra.mxu0 0
        %2025 = vmatprep.subr.bf16.mxu0 0
        %2026 = vmatpush2.bf16.msra.mxu0 0
        %2027 = vmatprep.subr.bf16.mxu0 0
        %2028 = vmatpush2.bf16.msra.mxu0 0
        %2029 = vmatprep.subr.bf16.mxu0 0
        %2030 = vmatpush2.bf16.msra.mxu0 0
        %2031 = vmatprep.subr.bf16.mxu0 0
        %2032 = vmatpush2.bf16.msra.mxu0 0
        %2033 = vmatprep.subr.bf16.mxu0 0
        %2034 = vmatpush2.bf16.msra.mxu0 0
        %2035 = vmatprep.subr.bf16.mxu0 0
        %2036 = vmatpush2.bf16.msra.mxu0 0
        %2037 = vmatprep.mubr.bf16.mxu0 0
        %2038 = vmatmul.mubr.bf16.gmra.mxu0 %v1994
        %v2039 = vpop.f32.mrf.mxu0
        %v2040 = vadd.f32 0.0, %v2039
        %v2041 = vpop.f32.mrf.mxu0
        %v2042 = vpop.f32.mrf.mxu0
        %v2043 = vadd.f32 0.0, %v2042
        %v2044 = vpop.f32.mrf.mxu0
        %2045 = vmatprep.mubr.bf16.mxu0 0
        %2046 = vmatmul.mubr.bf16.gmra.mxu0 %v1997
        %v2047 = vpop.f32.mrf.mxu0
        %v2048 = vadd.f32 0.0, %v2047
        %v2049 = vpop.f32.mrf.mxu0
        %v2050 = vpop.f32.mrf.mxu0
        %v2051 = vadd.f32 0.0, %v2050
        %v2052 = vpop.f32.mrf.mxu0
        %2053 = vmatprep.mubr.bf16.mxu0 0
        %2054 = vmatmul.mubr.bf16.gmra.mxu0 %v2000
        %v2055 = vpop.f32.mrf.mxu0
        %v2056 = vadd.f32 0.0, %v2055
        %v2057 = vpop.f32.mrf.mxu0
        %v2058 = vpop.f32.mrf.mxu0
        %v2059 = vadd.f32 0.0, %v2058
        %v2060 = vpop.f32.mrf.mxu0
        %2061 = vmatprep.mubr.bf16.mxu0 0
        %2062 = vmatmul.mubr.bf16.gmra.mxu0 %v2003
        %v2063 = vpop.f32.mrf.mxu0
        %v2064 = vadd.f32 0.0, %v2063
        %v2065 = vpop.f32.mrf.mxu0
        %v2066 = vpop.f32.mrf.mxu0
        %v2067 = vadd.f32 0.0, %v2066
        %v2068 = vpop.f32.mrf.mxu0
        %2069 = vdwg.mxu0
        %2078 = vrot.lane.b32.xlu0 %v1450, 8
        %v2079 = vpop.permute.xlu0 %2078
        %2080 = vrot.lane.b32.xlu0 %v1453, 8
        %v2081 = vpop.permute.xlu0 %2080
        %2082 = vrot.lane.b32.xlu0 %v1458, 8
        %v2083 = vpop.permute.xlu0 %2082
        %2084 = vrot.lane.b32.xlu0 %v1461, 8
        %v2085 = vpop.permute.xlu0 %2084
        %2086 = vrot.lane.b32.xlu0 %v1466, 8
        %v2087 = vpop.permute.xlu0 %2086
        %2088 = vrot.lane.b32.xlu0 %v1469, 8
        %v2089 = vpop.permute.xlu0 %2088
        %2090 = vrot.lane.b32.xlu0 %v1474, 8
        %v2091 = vpop.permute.xlu0 %2090
        %2092 = vrot.lane.b32.xlu0 %v1477, 8
        %v2093 = vpop.permute.xlu0 %2092
        %2110 = vrot.lane.b32.xlu0 %v1745, 16
        %v2111 = vpop.permute.xlu0 %2110
        %2112 = vrot.lane.b32.xlu0 %v1748, 16
        %v2113 = vpop.permute.xlu0 %2112
        %2114 = vrot.lane.b32.xlu0 %v1753, 16
        %v2115 = vpop.permute.xlu0 %2114
        %2116 = vrot.lane.b32.xlu0 %v1756, 16
        %v2117 = vpop.permute.xlu0 %2116
        %2118 = vrot.lane.b32.xlu0 %v1761, 16
        %v2119 = vpop.permute.xlu0 %2118
        %2120 = vrot.lane.b32.xlu0 %v1764, 16
        %v2121 = vpop.permute.xlu0 %2120
        %2122 = vrot.lane.b32.xlu0 %v1769, 16
        %v2123 = vpop.permute.xlu0 %2122
        %2124 = vrot.lane.b32.xlu0 %v1772, 16
        %v2125 = vpop.permute.xlu0 %2124
        %2142 = vrot.lane.b32.xlu0 %v2040, 24
        %v2143 = vpop.permute.xlu0 %2142
        %2144 = vrot.lane.b32.xlu0 %v2043, 24
        %v2145 = vpop.permute.xlu0 %2144
        %2146 = vrot.lane.b32.xlu0 %v2048, 24
        %v2147 = vpop.permute.xlu0 %2146
        %2148 = vrot.lane.b32.xlu0 %v2051, 24
        %v2149 = vpop.permute.xlu0 %2148
        %2150 = vrot.lane.b32.xlu0 %v2056, 24
        %v2151 = vpop.permute.xlu0 %2150
        %2152 = vrot.lane.b32.xlu0 %v2059, 24
        %v2153 = vpop.permute.xlu0 %2152
        %2154 = vrot.lane.b32.xlu0 %v2064, 24
        %v2155 = vpop.permute.xlu0 %2154
        %2156 = vrot.lane.b32.xlu0 %v2067, 24
        %v2157 = vpop.permute.xlu0 %2156
        %v2166 = vsel %vm913, %v1155, %v2079
        %v2167 = vsel %vm913, %v1158, %v2081
        %v2168 = vsel %vm913, %v1163, %v2083
        %v2169 = vsel %vm913, %v1166, %v2085
        %v2170 = vsel %vm913, %v1171, %v2087
        %v2171 = vsel %vm913, %v1174, %v2089
        %v2172 = vsel %vm913, %v1179, %v2091
        %v2173 = vsel %vm913, %v1182, %v2093
        %vm2174 = vcmask 130048
        %v2175 = vsel %vm2174, %v2166, %v2111
        %v2176 = vsel %vm2174, %v2167, %v2113
        %v2177 = vsel %vm2174, %v2168, %v2115
        %v2178 = vsel %vm2174, %v2169, %v2117
        %v2179 = vsel %vm2174, %v2170, %v2119
        %v2180 = vsel %vm2174, %v2171, %v2121
        %v2181 = vsel %vm2174, %v2172, %v2123
        %v2182 = vsel %vm2174, %v2173, %v2125
        %vm2183 = vcmask 195584
        %v2184 = vsel %vm2183, %v2175, %v2143
        %v2185 = vsel %vm2183, %v2176, %v2145
        %v2186 = vsel %vm2183, %v2177, %v2147
        %v2187 = vsel %vm2183, %v2178, %v2149
        %v2188 = vsel %vm2183, %v2179, %v2151
        %v2189 = vsel %vm2183, %v2180, %v2153
        %v2190 = vsel %vm2183, %v2181, %v2155
        %v2191 = vsel %vm2183, %v2182, %v2157
        %v2192 = vadd.f32 %v641, %v2184
        %v2193 = vadd.f32 %v642, %v2185
        %v2194 = vadd.f32 %v643, %v2186
        %v2195 = vadd.f32 %v644, %v2187
        %v2196 = vadd.f32 %v645, %v2188
        %v2197 = vadd.f32 %v646, %v2189
        %v2198 = vadd.f32 %v647, %v2190
        %v2199 = vadd.f32 %v648, %v2191
        %v2200 = vsel %vm649, %v2192, 0.0
        %2201 = vadd.xlane.f32.xlu0 %v2200
        %v2202 = vpop.xlane.xlu0 %2201
        %v2203 = vsel %vm649, %v2193, 0.0
        %2204 = vadd.xlane.f32.xlu0 %v2203
        %v2205 = vpop.xlane.xlu0 %2204
        %v2206 = vsel %vm649, %v2194, 0.0
        %2207 = vadd.xlane.f32.xlu0 %v2206
        %v2208 = vpop.xlane.xlu0 %2207
        %v2209 = vsel %vm649, %v2195, 0.0
        %2210 = vadd.xlane.f32.xlu0 %v2209
        %v2211 = vpop.xlane.xlu0 %2210
        %v2212 = vsel %vm649, %v2196, 0.0
        %2213 = vadd.xlane.f32.xlu0 %v2212
        %v2214 = vpop.xlane.xlu0 %2213
        %v2215 = vsel %vm649, %v2197, 0.0
        %2216 = vadd.xlane.f32.xlu0 %v2215
        %v2217 = vpop.xlane.xlu0 %2216
        %v2218 = vsel %vm649, %v2198, 0.0
        %2219 = vadd.xlane.f32.xlu0 %v2218
        %v2220 = vpop.xlane.xlu0 %2219
        %v2221 = vsel %vm649, %v2199, 0.0
        %2222 = vadd.xlane.f32.xlu0 %v2221
        %v2223 = vpop.xlane.xlu0 %2222
        %v2224 = vmul.f32 %v2202, %v674
        %v2225 = vmul.f32 %v2205, %v674
        %v2226 = vmul.f32 %v2208, %v674
        %v2227 = vmul.f32 %v2211, %v674
        %v2228 = vmul.f32 %v2214, %v674
        %v2229 = vmul.f32 %v2217, %v674
        %v2230 = vmul.f32 %v2220, %v674
        %v2231 = vmul.f32 %v2223, %v674
        %v2232 = vsub.f32 %v2192, %v2224
        %v2233 = vsub.f32 %v2193, %v2225
        %v2234 = vsub.f32 %v2194, %v2226
        %v2235 = vsub.f32 %v2195, %v2227
        %v2236 = vsub.f32 %v2196, %v2228
        %v2237 = vsub.f32 %v2197, %v2229
        %v2238 = vsub.f32 %v2198, %v2230
        %v2239 = vsub.f32 %v2199, %v2231
        %v2240 = vmul.f32 %v2232, %v2232
        %v2241 = vmul.f32 %v2233, %v2233
        %v2242 = vmul.f32 %v2234, %v2234
        %v2243 = vmul.f32 %v2235, %v2235
        %v2244 = vmul.f32 %v2236, %v2236
        %v2245 = vmul.f32 %v2237, %v2237
        %v2246 = vmul.f32 %v2238, %v2238
        %v2247 = vmul.f32 %v2239, %v2239
        %v2248 = vsel %vm649, %v2240, 0.0
        %2249 = vadd.xlane.f32.xlu0 %v2248
        %v2250 = vpop.xlane.xlu0 %2249
        %v2251 = vsel %vm649, %v2241, 0.0
        %2252 = vadd.xlane.f32.xlu0 %v2251
        %v2253 = vpop.xlane.xlu0 %2252
        %v2254 = vsel %vm649, %v2242, 0.0
        %2255 = vadd.xlane.f32.xlu0 %v2254
        %v2256 = vpop.xlane.xlu0 %2255
        %v2257 = vsel %vm649, %v2243, 0.0
        %2258 = vadd.xlane.f32.xlu0 %v2257
        %v2259 = vpop.xlane.xlu0 %2258
        %v2260 = vsel %vm649, %v2244, 0.0
        %2261 = vadd.xlane.f32.xlu0 %v2260
        %v2262 = vpop.xlane.xlu0 %2261
        %v2263 = vsel %vm649, %v2245, 0.0
        %2264 = vadd.xlane.f32.xlu0 %v2263
        %v2265 = vpop.xlane.xlu0 %2264
        %v2266 = vsel %vm649, %v2246, 0.0
        %2267 = vadd.xlane.f32.xlu0 %v2266
        %v2268 = vpop.xlane.xlu0 %2267
        %v2269 = vsel %vm649, %v2247, 0.0
        %2270 = vadd.xlane.f32.xlu0 %v2269
        %v2271 = vpop.xlane.xlu0 %2270
        %v2272 = vmul.f32 %v2250, %v674
        %v2273 = vmul.f32 %v2253, %v674
        %v2274 = vmul.f32 %v2256, %v674
        %v2275 = vmul.f32 %v2259, %v674
        %v2276 = vmul.f32 %v2262, %v674
        %v2277 = vmul.f32 %v2265, %v674
        %v2278 = vmul.f32 %v2268, %v674
        %v2279 = vmul.f32 %v2271, %v674
        %v2280 = vadd.f32 %v2272, 1e-05
        %v2281 = vadd.f32 %v2273, 1e-05
        %v2282 = vadd.f32 %v2274, 1e-05
        %v2283 = vadd.f32 %v2275, 1e-05
        %v2284 = vadd.f32 %v2276, 1e-05
        %v2285 = vadd.f32 %v2277, 1e-05
        %v2286 = vadd.f32 %v2278, 1e-05
        %v2287 = vadd.f32 %v2279, 1e-05
        %v2288 = vrsqrt.pop %v2280
        %v2289 = vrsqrt.pop %v2281
        %v2290 = vrsqrt.pop %v2282
        %v2291 = vrsqrt.pop %v2283
        %v2292 = vrsqrt.pop %v2284
        %v2293 = vrsqrt.pop %v2285
        %v2294 = vrsqrt.pop %v2286
        %v2295 = vrsqrt.pop %v2287
        %v2296 = vmul.f32 %v2232, %v2288
        %v2297 = vmul.f32 %v2233, %v2289
        %v2298 = vmul.f32 %v2234, %v2290
        %v2299 = vmul.f32 %v2235, %v2291
        %v2300 = vmul.f32 %v2236, %v2292
        %v2301 = vmul.f32 %v2237, %v2293
        %v2302 = vmul.f32 %v2238, %v2294
        %v2303 = vmul.f32 %v2239, %v2295
        %v2304 = vld [vmem:[%s621] sm:$0x1]
        %v2306 = vlaneseq
        %v2307 = vshrl.u32 %v2306, 7
        %v2308 = vsub.s32 0, %v2307
        %v2309 = vrot.slane %v2304, %v2308
        %v2311 = vmul.f32 %v2296, %v2309
        %v2312 = vmul.f32 %v2297, %v2309
        %v2313 = vmul.f32 %v2298, %v2309
        %v2314 = vmul.f32 %v2299, %v2309
        %v2315 = vmul.f32 %v2300, %v2309
        %v2316 = vmul.f32 %v2301, %v2309
        %v2317 = vmul.f32 %v2302, %v2309
        %v2318 = vmul.f32 %v2303, %v2309
        %v2319 = vld [vmem:[%s624] sm:$0x1]
        %v2321 = vlaneseq
        %v2322 = vshrl.u32 %v2321, 7
        %v2323 = vsub.s32 0, %v2322
        %v2324 = vrot.slane %v2319, %v2323
        %v2326 = vadd.f32 %v2311, %v2324
        %v2327 = vadd.f32 %v2312, %v2324
        %v2328 = vadd.f32 %v2313, %v2324
        %v2329 = vadd.f32 %v2314, %v2324
        %v2330 = vadd.f32 %v2315, %v2324
        %v2331 = vadd.f32 %v2316, %v2324
        %v2332 = vadd.f32 %v2317, %v2324
        %v2333 = vadd.f32 %v2318, %v2324
        %v2334 = vpack.c.bf16 %v2327, %v2326
        %v2335 = vpack.c.bf16 %v2329, %v2328
        %v2336 = vpack.c.bf16 %v2331, %v2330
        %v2337 = vpack.c.bf16 %v2333, %v2332
        %v2338 = vld [vmem:[%s8] sm:$0xf]
        %v2339 = vld [vmem:[%s8 + $0x4] sm:$0xf]
        %v2340 = vld [vmem:[%s8 + $0x8] sm:$0xf]
        %v2341 = vld [vmem:[%s8 + $0xc] sm:$0xf]
        %v2342 = vld [vmem:[%s9] sm:$0x1]
        %v2344 = vlaneseq
        %v2345 = vshrl.u32 %v2344, 7
        %v2346 = vsub.s32 0, %v2345
        %v2347 = vrot.slane %v2342, %v2346
        %v2353 = vunpack.c.l.b16 %v2338
        %v2354 = vunpack.c.l.b16 %v2339
        %v2355 = vunpack.c.l.b16 %v2340
        %v2356 = vunpack.c.l.b16 %v2341
        %v2357 = vpack.c.b16 %v2354, %v2353
        %v2358 = vpack.c.b16 %v2356, %v2355
        %v2362 = vsel %vm649, %v2334, 0
        %v2365 = vsel %vm649, %v2335, 0
        %v2368 = vsel %vm649, %v2336, 0
        %v2371 = vsel %vm649, %v2337, 0
        %2373 = vmatprep.subr.bf16.mxu0 0
        %2374 = vmatpush1.bf16.msra.mxu0 0
        %2375 = vmatprep.subr.bf16.mxu0 0
        %2376 = vmatpush1.bf16.msra.mxu0 0
        %2377 = vmatprep.subr.bf16.mxu0 0
        %2378 = vmatpush1.bf16.msra.mxu0 0
        %2379 = vmatprep.subr.bf16.mxu0 0
        %2380 = vmatpush1.bf16.msra.mxu0 0
        %2381 = vmatprep.subr.bf16.mxu0 0
        %2382 = vmatpush1.bf16.msra.mxu0 0
        %2383 = vmatprep.subr.bf16.mxu0 0
        %2384 = vmatpush1.bf16.msra.mxu0 0
        %2385 = vmatprep.subr.bf16.mxu0 0
        %2386 = vmatpush1.bf16.msra.mxu0 %v2358
        %2387 = vmatprep.subr.bf16.mxu0 0
        %2388 = vmatpush1.bf16.msra.mxu0 %v2357
        %2389 = vmatprep.subr.bf16.mxu0 0
        %2390 = vmatpush2.bf16.msra.mxu0 0
        %2391 = vmatprep.subr.bf16.mxu0 0
        %2392 = vmatpush2.bf16.msra.mxu0 0
        %2393 = vmatprep.subr.bf16.mxu0 0
        %2394 = vmatpush2.bf16.msra.mxu0 0
        %2395 = vmatprep.subr.bf16.mxu0 0
        %2396 = vmatpush2.bf16.msra.mxu0 0
        %2397 = vmatprep.subr.bf16.mxu0 0
        %2398 = vmatpush2.bf16.msra.mxu0 0
        %2399 = vmatprep.subr.bf16.mxu0 0
        %2400 = vmatpush2.bf16.msra.mxu0 0
        %2401 = vmatprep.subr.bf16.mxu0 0
        %2402 = vmatpush2.bf16.msra.mxu0 0
        %2403 = vmatprep.subr.bf16.mxu0 0
        %2404 = vmatpush2.bf16.msra.mxu0 0
        %2405 = vmatprep.mubr.bf16.mxu0 0
        %2406 = vmatmul.mubr.bf16.gmra.mxu0 %v2362
        %v2407 = vpop.f32.mrf.mxu0
        %v2408 = vadd.f32 %v2347, %v2407
        %v2409 = vpop.f32.mrf.mxu0
        %v2410 = vpop.f32.mrf.mxu0
        %v2411 = vadd.f32 %v2347, %v2410
        %v2412 = vpop.f32.mrf.mxu0
        %2413 = vmatprep.mubr.bf16.mxu0 0
        %2414 = vmatmul.mubr.bf16.gmra.mxu0 %v2365
        %v2415 = vpop.f32.mrf.mxu0
        %v2416 = vadd.f32 %v2347, %v2415
        %v2417 = vpop.f32.mrf.mxu0
        %v2418 = vpop.f32.mrf.mxu0
        %v2419 = vadd.f32 %v2347, %v2418
        %v2420 = vpop.f32.mrf.mxu0
        %2421 = vmatprep.mubr.bf16.mxu0 0
        %2422 = vmatmul.mubr.bf16.gmra.mxu0 %v2368
        %v2423 = vpop.f32.mrf.mxu0
        %v2424 = vadd.f32 %v2347, %v2423
        %v2425 = vpop.f32.mrf.mxu0
        %v2426 = vpop.f32.mrf.mxu0
        %v2427 = vadd.f32 %v2347, %v2426
        %v2428 = vpop.f32.mrf.mxu0
        %2429 = vmatprep.mubr.bf16.mxu0 0
        %2430 = vmatmul.mubr.bf16.gmra.mxu0 %v2371
        %v2431 = vpop.f32.mrf.mxu0
        %v2432 = vadd.f32 %v2347, %v2431
        %v2433 = vpop.f32.mrf.mxu0
        %v2434 = vpop.f32.mrf.mxu0
        %v2435 = vadd.f32 %v2347, %v2434
        %v2436 = vpop.f32.mrf.mxu0
        %2437 = vdwg.mxu0
        %v2438 = vld [vmem:[%s634] sm:$0xff]
        %v2439 = vld [vmem:[%s634 + $0x8] sm:$0xff]
        %v2440 = vld [vmem:[%s634 + $0x10] sm:$0xff]
        %v2441 = vld [vmem:[%s634 + $0x18] sm:$0xff]
        %v2442 = vld [vmem:[%s634 + $0x20] sm:$0xff]
        %v2443 = vld [vmem:[%s634 + $0x28] sm:$0xff]
        %v2444 = vld [vmem:[%s634 + $0x30] sm:$0xff]
        %v2445 = vld [vmem:[%s634 + $0x38] sm:$0xff]
        %v2446 = vpack.c.bf16 %v2439, %v2438
        %v2447 = vpack.c.bf16 %v2441, %v2440
        %v2448 = vpack.c.bf16 %v2443, %v2442
        %v2449 = vpack.c.bf16 %v2445, %v2444
        %v2450 = vld [vmem:[%s10] sm:$0xf]
        %v2451 = vld [vmem:[%s10 + $0x4] sm:$0xf]
        %v2452 = vld [vmem:[%s10 + $0x8] sm:$0xf]
        %v2453 = vld [vmem:[%s10 + $0xc] sm:$0xf]
        %v2454 = vld [vmem:[%s10 + $0x10] sm:$0xf]
        %v2455 = vld [vmem:[%s10 + $0x14] sm:$0xf]
        %v2456 = vld [vmem:[%s10 + $0x18] sm:$0xf]
        %v2457 = vld [vmem:[%s10 + $0x1c] sm:$0xf]
        %v2458 = vld [vmem:[%s10 + $0x20] sm:$0xf]
        %v2459 = vld [vmem:[%s10 + $0x24] sm:$0xf]
        %v2460 = vld [vmem:[%s10 + $0x28] sm:$0xf]
        %v2461 = vld [vmem:[%s10 + $0x2c] sm:$0xf]
        %v2462 = vld [vmem:[%s10 + $0x30] sm:$0xf]
        %v2463 = vld [vmem:[%s10 + $0x34] sm:$0xf]
        %v2464 = vld [vmem:[%s10 + $0x38] sm:$0xf]
        %v2465 = vld [vmem:[%s10 + $0x3c] sm:$0xf]
        %v2466 = vld [vmem:[%s11] sm:$0x1]
        %v2468 = vlaneseq
        %v2469 = vshrl.u32 %v2468, 7
        %v2470 = vsub.s32 0, %v2469
        %v2471 = vrot.slane %v2466, %v2470
        %v2489 = vunpack.c.l.b16 %v2450
        %v2490 = vunpack.c.l.b16 %v2451
        %v2491 = vunpack.c.l.b16 %v2452
        %v2492 = vunpack.c.l.b16 %v2453
        %v2493 = vunpack.c.l.b16 %v2454
        %v2494 = vunpack.c.l.b16 %v2455
        %v2495 = vunpack.c.l.b16 %v2456
        %v2496 = vunpack.c.l.b16 %v2457
        %v2497 = vunpack.c.l.b16 %v2458
        %v2498 = vunpack.c.l.b16 %v2459
        %v2499 = vunpack.c.l.b16 %v2460
        %v2500 = vunpack.c.l.b16 %v2461
        %v2501 = vunpack.c.l.b16 %v2462
        %v2502 = vunpack.c.l.b16 %v2463
        %v2503 = vunpack.c.l.b16 %v2464
        %v2504 = vunpack.c.l.b16 %v2465
        %v2505 = vpack.c.b16 %v2490, %v2489
        %v2506 = vpack.c.b16 %v2492, %v2491
        %v2507 = vpack.c.b16 %v2494, %v2493
        %v2508 = vpack.c.b16 %v2496, %v2495
        %v2509 = vpack.c.b16 %v2498, %v2497
        %v2510 = vpack.c.b16 %v2500, %v2499
        %v2511 = vpack.c.b16 %v2502, %v2501
        %v2512 = vpack.c.b16 %v2504, %v2503
        %2521 = vmatprep.subr.bf16.mxu0 0
        %2522 = vmatpush1.bf16.msra.mxu0 %v2512
        %2523 = vmatprep.subr.bf16.mxu0 0
        %2524 = vmatpush1.bf16.msra.mxu0 %v2511
        %2525 = vmatprep.subr.bf16.mxu0 0
        %2526 = vmatpush1.bf16.msra.mxu0 %v2510
        %2527 = vmatprep.subr.bf16.mxu0 0
        %2528 = vmatpush1.bf16.msra.mxu0 %v2509
        %2529 = vmatprep.subr.bf16.mxu0 0
        %2530 = vmatpush1.bf16.msra.mxu0 %v2508
        %2531 = vmatprep.subr.bf16.mxu0 0
        %2532 = vmatpush1.bf16.msra.mxu0 %v2507
        %2533 = vmatprep.subr.bf16.mxu0 0
        %2534 = vmatpush1.bf16.msra.mxu0 %v2506
        %2535 = vmatprep.subr.bf16.mxu0 0
        %2536 = vmatpush1.bf16.msra.mxu0 %v2505
        %2537 = vmatprep.subr.bf16.mxu0 0
        %2538 = vmatpush2.bf16.msra.mxu0 0
        %2539 = vmatprep.subr.bf16.mxu0 0
        %2540 = vmatpush2.bf16.msra.mxu0 0
        %2541 = vmatprep.subr.bf16.mxu0 0
        %2542 = vmatpush2.bf16.msra.mxu0 0
        %2543 = vmatprep.subr.bf16.mxu0 0
        %2544 = vmatpush2.bf16.msra.mxu0 0
        %2545 = vmatprep.subr.bf16.mxu0 0
        %2546 = vmatpush2.bf16.msra.mxu0 0
        %2547 = vmatprep.subr.bf16.mxu0 0
        %2548 = vmatpush2.bf16.msra.mxu0 0
        %2549 = vmatprep.subr.bf16.mxu0 0
        %2550 = vmatpush2.bf16.msra.mxu0 0
        %2551 = vmatprep.subr.bf16.mxu0 0
        %2552 = vmatpush2.bf16.msra.mxu0 0
        %2553 = vmatprep.mubr.bf16.mxu0 0
        %2554 = vmatmul.mubr.bf16.gmra.mxu0 %v2446
        %v2555 = vpop.f32.mrf.mxu0
        %v2556 = vadd.f32 %v2471, %v2555
        %v2557 = vpop.f32.mrf.mxu0
        %v2558 = vpop.f32.mrf.mxu0
        %v2559 = vadd.f32 %v2471, %v2558
        %v2560 = vpop.f32.mrf.mxu0
        %2561 = vmatprep.mubr.bf16.mxu0 0
        %2562 = vmatmul.mubr.bf16.gmra.mxu0 %v2447
        %v2563 = vpop.f32.mrf.mxu0
        %v2564 = vadd.f32 %v2471, %v2563
        %v2565 = vpop.f32.mrf.mxu0
        %v2566 = vpop.f32.mrf.mxu0
        %v2567 = vadd.f32 %v2471, %v2566
        %v2568 = vpop.f32.mrf.mxu0
        %2569 = vmatprep.mubr.bf16.mxu0 0
        %2570 = vmatmul.mubr.bf16.gmra.mxu0 %v2448
        %v2571 = vpop.f32.mrf.mxu0
        %v2572 = vadd.f32 %v2471, %v2571
        %v2573 = vpop.f32.mrf.mxu0
        %v2574 = vpop.f32.mrf.mxu0
        %v2575 = vadd.f32 %v2471, %v2574
        %v2576 = vpop.f32.mrf.mxu0
        %2577 = vmatprep.mubr.bf16.mxu0 0
        %2578 = vmatmul.mubr.bf16.gmra.mxu0 %v2449
        %v2579 = vpop.f32.mrf.mxu0
        %v2580 = vadd.f32 %v2471, %v2579
        %v2581 = vpop.f32.mrf.mxu0
        %v2582 = vpop.f32.mrf.mxu0
        %v2583 = vadd.f32 %v2471, %v2582
        %v2584 = vpop.f32.mrf.mxu0
        %2585 = vdwg.mxu0
        %v2586 = vpack.c.bf16 %v2411, %v2408
        %v2587 = vpack.c.bf16 %v2419, %v2416
        %v2588 = vpack.c.bf16 %v2427, %v2424
        %v2589 = vpack.c.bf16 %v2435, %v2432
        %v2590 = vpack.c.bf16 %v2559, %v2556
        %v2591 = vpack.c.bf16 %v2567, %v2564
        %v2592 = vpack.c.bf16 %v2575, %v2572
        %v2593 = vpack.c.bf16 %v2583, %v2580
        %v2595 = vsel %vm913, %v2586, 0
        %v2598 = vsel %vm913, %v2587, 0
        %v2601 = vsel %vm913, %v2588, 0
        %v2604 = vsel %vm913, %v2589, 0
        %v2607 = vsel %vm913, %v2590, 0
        %v2610 = vsel %vm913, %v2591, 0
        %v2613 = vsel %vm913, %v2592, 0
        %v2616 = vsel %vm913, %v2593, 0
        %2618 = vmatprep.subr.bf16.mxu0 0
        %2619 = vmatpush1.bf16.xpose.msra.mxu0 0
        %2620 = vmatprep.subr.bf16.mxu0 0
        %2621 = vmatpush1.bf16.xpose.msra.mxu0 0
        %2622 = vmatprep.subr.bf16.mxu0 0
        %2623 = vmatpush1.bf16.xpose.msra.mxu0 0
        %2624 = vmatprep.subr.bf16.mxu0 0
        %2625 = vmatpush1.bf16.xpose.msra.mxu0 0
        %2626 = vmatprep.subr.bf16.mxu0 0
        %2627 = vmatpush1.bf16.xpose.msra.mxu0 %v2616
        %2628 = vmatprep.subr.bf16.mxu0 0
        %2629 = vmatpush1.bf16.xpose.msra.mxu0 %v2613
        %2630 = vmatprep.subr.bf16.mxu0 0
        %2631 = vmatpush1.bf16.xpose.msra.mxu0 %v2610
        %2632 = vmatprep.subr.bf16.mxu0 0
        %2633 = vmatpush1.bf16.xpose.msra.mxu0 %v2607
        %2634 = vmatprep.subr.bf16.mxu0 0
        %2635 = vmatpush2.bf16.xpose.msra.mxu0 0
        %2636 = vmatprep.subr.bf16.mxu0 0
        %2637 = vmatpush2.bf16.xpose.msra.mxu0 0
        %2638 = vmatprep.subr.bf16.mxu0 0
        %2639 = vmatpush2.bf16.xpose.msra.mxu0 0
        %2640 = vmatprep.subr.bf16.mxu0 0
        %2641 = vmatpush2.bf16.xpose.msra.mxu0 0
        %2642 = vmatprep.subr.bf16.mxu0 0
        %2643 = vmatpush2.bf16.xpose.msra.mxu0 0
        %2644 = vmatprep.subr.bf16.mxu0 0
        %2645 = vmatpush2.bf16.xpose.msra.mxu0 0
        %2646 = vmatprep.subr.bf16.mxu0 0
        %2647 = vmatpush2.bf16.xpose.msra.mxu0 0
        %2648 = vmatprep.subr.bf16.mxu0 0
        %2649 = vmatpush2.bf16.xpose.msra.mxu0 0
        %2650 = vmatprep.mubr.bf16.mxu0 0
        %2651 = vmatmul.mubr.bf16.gmra.mxu0 %v2595
        %v2652 = vpop.f32.mrf.mxu0
        %v2653 = vadd.f32 %v893, %v2652
        %v2654 = vpop.f32.mrf.mxu0
        %v2655 = vpop.f32.mrf.mxu0
        %v2656 = vadd.f32 %v894, %v2655
        %v2657 = vpop.f32.mrf.mxu0
        %2658 = vmatprep.mubr.bf16.mxu0 0
        %2659 = vmatmul.mubr.bf16.gmra.mxu0 %v2598
        %v2660 = vpop.f32.mrf.mxu0
        %v2661 = vadd.f32 %v895, %v2660
        %v2662 = vpop.f32.mrf.mxu0
        %v2663 = vpop.f32.mrf.mxu0
        %v2664 = vadd.f32 %v896, %v2663
        %v2665 = vpop.f32.mrf.mxu0
        %2666 = vmatprep.mubr.bf16.mxu0 0
        %2667 = vmatmul.mubr.bf16.gmra.mxu0 %v2601
        %v2668 = vpop.f32.mrf.mxu0
        %v2669 = vadd.f32 %v897, %v2668
        %v2670 = vpop.f32.mrf.mxu0
        %v2671 = vpop.f32.mrf.mxu0
        %v2672 = vadd.f32 %v898, %v2671
        %v2673 = vpop.f32.mrf.mxu0
        %2674 = vmatprep.mubr.bf16.mxu0 0
        %2675 = vmatmul.mubr.bf16.gmra.mxu0 %v2604
        %v2676 = vpop.f32.mrf.mxu0
        %v2677 = vadd.f32 %v899, %v2676
        %v2678 = vpop.f32.mrf.mxu0
        %v2679 = vpop.f32.mrf.mxu0
        %v2680 = vadd.f32 %v900, %v2679
        %v2681 = vpop.f32.mrf.mxu0
        %2682 = vdwg.mxu0
        %v2683 = vsel %vm1003, %v2653, -inf
        %2684 = vmax.xlane.f32.xlu0 %v2683
        %v2685 = vpop.xlane.xlu0 %2684
        %v2686 = vsel %vm1003, %v2656, -inf
        %2687 = vmax.xlane.f32.xlu0 %v2686
        %v2688 = vpop.xlane.xlu0 %2687
        %v2689 = vsel %vm1003, %v2661, -inf
        %2690 = vmax.xlane.f32.xlu0 %v2689
        %v2691 = vpop.xlane.xlu0 %2690
        %v2692 = vsel %vm1003, %v2664, -inf
        %2693 = vmax.xlane.f32.xlu0 %v2692
        %v2694 = vpop.xlane.xlu0 %2693
        %v2695 = vsel %vm1003, %v2669, -inf
        %2696 = vmax.xlane.f32.xlu0 %v2695
        %v2697 = vpop.xlane.xlu0 %2696
        %v2698 = vsel %vm1003, %v2672, -inf
        %2699 = vmax.xlane.f32.xlu0 %v2698
        %v2700 = vpop.xlane.xlu0 %2699
        %v2701 = vsel %vm1003, %v2677, -inf
        %2702 = vmax.xlane.f32.xlu0 %v2701
        %v2703 = vpop.xlane.xlu0 %2702
        %v2704 = vsel %vm1003, %v2680, -inf
        %2705 = vmax.xlane.f32.xlu0 %v2704
        %v2706 = vpop.xlane.xlu0 %2705
        %v2707 = vsub.f32 %v2653, %v2685
        %v2708 = vsub.f32 %v2656, %v2688
        %v2709 = vsub.f32 %v2661, %v2691
        %v2710 = vsub.f32 %v2664, %v2694
        %v2711 = vsub.f32 %v2669, %v2697
        %v2712 = vsub.f32 %v2672, %v2700
        %v2713 = vsub.f32 %v2677, %v2703
        %v2714 = vsub.f32 %v2680, %v2706
        %v2715 = vmul.f32 %v2707, 1.442695
        %v2716 = vpow.pop %v2715
        %v2717 = vmul.f32 %v2708, 1.442695
        %v2718 = vpow.pop %v2717
        %v2719 = vmul.f32 %v2709, 1.442695
        %v2720 = vpow.pop %v2719
        %v2721 = vmul.f32 %v2710, 1.442695
        %v2722 = vpow.pop %v2721
        %v2723 = vmul.f32 %v2711, 1.442695
        %v2724 = vpow.pop %v2723
        %v2725 = vmul.f32 %v2712, 1.442695
        %v2726 = vpow.pop %v2725
        %v2727 = vmul.f32 %v2713, 1.442695
        %v2728 = vpow.pop %v2727
        %v2729 = vmul.f32 %v2714, 1.442695
        %v2730 = vpow.pop %v2729
        %v2731 = vsel %vm1003, %v2716, 0.0
        %2732 = vadd.xlane.f32.xlu0 %v2731
        %v2733 = vpop.xlane.xlu0 %2732
        %v2734 = vsel %vm1003, %v2718, 0.0
        %2735 = vadd.xlane.f32.xlu0 %v2734
        %v2736 = vpop.xlane.xlu0 %2735
        %v2737 = vsel %vm1003, %v2720, 0.0
        %2738 = vadd.xlane.f32.xlu0 %v2737
        %v2739 = vpop.xlane.xlu0 %2738
        %v2740 = vsel %vm1003, %v2722, 0.0
        %2741 = vadd.xlane.f32.xlu0 %v2740
        %v2742 = vpop.xlane.xlu0 %2741
        %v2743 = vsel %vm1003, %v2724, 0.0
        %2744 = vadd.xlane.f32.xlu0 %v2743
        %v2745 = vpop.xlane.xlu0 %2744
        %v2746 = vsel %vm1003, %v2726, 0.0
        %2747 = vadd.xlane.f32.xlu0 %v2746
        %v2748 = vpop.xlane.xlu0 %2747
        %v2749 = vsel %vm1003, %v2728, 0.0
        %2750 = vadd.xlane.f32.xlu0 %v2749
        %v2751 = vpop.xlane.xlu0 %2750
        %v2752 = vsel %vm1003, %v2730, 0.0
        %2753 = vadd.xlane.f32.xlu0 %v2752
        %v2754 = vpop.xlane.xlu0 %2753
        %v2755 = vrcp.pop %v2733
        %v2756 = vrcp.pop %v2736
        %v2757 = vrcp.pop %v2739
        %v2758 = vrcp.pop %v2742
        %v2759 = vrcp.pop %v2745
        %v2760 = vrcp.pop %v2748
        %v2761 = vrcp.pop %v2751
        %v2762 = vrcp.pop %v2754
        %v2763 = vmul.f32 %v2716, %v2755
        %v2764 = vmul.f32 %v2718, %v2756
        %v2765 = vmul.f32 %v2720, %v2757
        %v2766 = vmul.f32 %v2722, %v2758
        %v2767 = vmul.f32 %v2724, %v2759
        %v2768 = vmul.f32 %v2726, %v2760
        %v2769 = vmul.f32 %v2728, %v2761
        %v2770 = vmul.f32 %v2730, %v2762
        %v2771 = vpack.c.bf16 %v2764, %v2763
        %v2772 = vpack.c.bf16 %v2766, %v2765
        %v2773 = vpack.c.bf16 %v2768, %v2767
        %v2774 = vpack.c.bf16 %v2770, %v2769
        %2779 = vrot.lane.b32.xlu0 %v2590, 96
        %v2780 = vpop.permute.xlu0 %2779
        %2781 = vrot.lane.b32.xlu0 %v2591, 96
        %v2782 = vpop.permute.xlu0 %2781
        %2783 = vrot.lane.b32.xlu0 %v2592, 96
        %v2784 = vpop.permute.xlu0 %2783
        %2785 = vrot.lane.b32.xlu0 %v2593, 96
        %v2786 = vpop.permute.xlu0 %2785
        %v2792 = vsel %vm1003, %v2771, 0
        %v2795 = vsel %vm1003, %v2772, 0
        %v2798 = vsel %vm1003, %v2773, 0
        %v2801 = vsel %vm1003, %v2774, 0
        %2803 = vmatprep.subr.bf16.mxu0 0
        %2804 = vmatpush1.bf16.msra.mxu0 0
        %2805 = vmatprep.subr.bf16.mxu0 0
        %2806 = vmatpush1.bf16.msra.mxu0 0
        %2807 = vmatprep.subr.bf16.mxu0 0
        %2808 = vmatpush1.bf16.msra.mxu0 0
        %2809 = vmatprep.subr.bf16.mxu0 0
        %2810 = vmatpush1.bf16.msra.mxu0 0
        %2811 = vmatprep.subr.bf16.mxu0 0
        %2812 = vmatpush1.bf16.msra.mxu0 %v2786
        %2813 = vmatprep.subr.bf16.mxu0 0
        %2814 = vmatpush1.bf16.msra.mxu0 %v2784
        %2815 = vmatprep.subr.bf16.mxu0 0
        %2816 = vmatpush1.bf16.msra.mxu0 %v2782
        %2817 = vmatprep.subr.bf16.mxu0 0
        %2818 = vmatpush1.bf16.msra.mxu0 %v2780
        %2819 = vmatprep.subr.bf16.mxu0 0
        %2820 = vmatpush2.bf16.msra.mxu0 0
        %2821 = vmatprep.subr.bf16.mxu0 0
        %2822 = vmatpush2.bf16.msra.mxu0 0
        %2823 = vmatprep.subr.bf16.mxu0 0
        %2824 = vmatpush2.bf16.msra.mxu0 0
        %2825 = vmatprep.subr.bf16.mxu0 0
        %2826 = vmatpush2.bf16.msra.mxu0 0
        %2827 = vmatprep.subr.bf16.mxu0 0
        %2828 = vmatpush2.bf16.msra.mxu0 0
        %2829 = vmatprep.subr.bf16.mxu0 0
        %2830 = vmatpush2.bf16.msra.mxu0 0
        %2831 = vmatprep.subr.bf16.mxu0 0
        %2832 = vmatpush2.bf16.msra.mxu0 0
        %2833 = vmatprep.subr.bf16.mxu0 0
        %2834 = vmatpush2.bf16.msra.mxu0 0
        %2835 = vmatprep.mubr.bf16.mxu0 0
        %2836 = vmatmul.mubr.bf16.gmra.mxu0 %v2792
        %v2837 = vpop.f32.mrf.mxu0
        %v2838 = vadd.f32 0.0, %v2837
        %v2839 = vpop.f32.mrf.mxu0
        %v2840 = vpop.f32.mrf.mxu0
        %v2841 = vadd.f32 0.0, %v2840
        %v2842 = vpop.f32.mrf.mxu0
        %2843 = vmatprep.mubr.bf16.mxu0 0
        %2844 = vmatmul.mubr.bf16.gmra.mxu0 %v2795
        %v2845 = vpop.f32.mrf.mxu0
        %v2846 = vadd.f32 0.0, %v2845
        %v2847 = vpop.f32.mrf.mxu0
        %v2848 = vpop.f32.mrf.mxu0
        %v2849 = vadd.f32 0.0, %v2848
        %v2850 = vpop.f32.mrf.mxu0
        %2851 = vmatprep.mubr.bf16.mxu0 0
        %2852 = vmatmul.mubr.bf16.gmra.mxu0 %v2798
        %v2853 = vpop.f32.mrf.mxu0
        %v2854 = vadd.f32 0.0, %v2853
        %v2855 = vpop.f32.mrf.mxu0
        %v2856 = vpop.f32.mrf.mxu0
        %v2857 = vadd.f32 0.0, %v2856
        %v2858 = vpop.f32.mrf.mxu0
        %2859 = vmatprep.mubr.bf16.mxu0 0
        %2860 = vmatmul.mubr.bf16.gmra.mxu0 %v2801
        %v2861 = vpop.f32.mrf.mxu0
        %v2862 = vadd.f32 0.0, %v2861
        %v2863 = vpop.f32.mrf.mxu0
        %v2864 = vpop.f32.mrf.mxu0
        %v2865 = vadd.f32 0.0, %v2864
        %v2866 = vpop.f32.mrf.mxu0
        %2867 = vdwg.mxu0
        %2872 = vrot.lane.b32.xlu0 %v2586, 120
        %v2873 = vpop.permute.xlu0 %2872
        %2874 = vrot.lane.b32.xlu0 %v2587, 120
        %v2875 = vpop.permute.xlu0 %2874
        %2876 = vrot.lane.b32.xlu0 %v2588, 120
        %v2877 = vpop.permute.xlu0 %2876
        %2878 = vrot.lane.b32.xlu0 %v2589, 120
        %v2879 = vpop.permute.xlu0 %2878
        %2880 = vrot.lane.b32.xlu0 %v2590, 120
        %v2881 = vpop.permute.xlu0 %2880
        %2882 = vrot.lane.b32.xlu0 %v2591, 120
        %v2883 = vpop.permute.xlu0 %2882
        %2884 = vrot.lane.b32.xlu0 %v2592, 120
        %v2885 = vpop.permute.xlu0 %2884
        %2886 = vrot.lane.b32.xlu0 %v2593, 120
        %v2887 = vpop.permute.xlu0 %2886
        %v2889 = vsel %vm913, %v2873, 0
        %v2892 = vsel %vm913, %v2875, 0
        %v2895 = vsel %vm913, %v2877, 0
        %v2898 = vsel %vm913, %v2879, 0
        %v2901 = vsel %vm913, %v2881, 0
        %v2904 = vsel %vm913, %v2883, 0
        %v2907 = vsel %vm913, %v2885, 0
        %v2910 = vsel %vm913, %v2887, 0
        %2912 = vmatprep.subr.bf16.mxu0 0
        %2913 = vmatpush1.bf16.xpose.msra.mxu0 0
        %2914 = vmatprep.subr.bf16.mxu0 0
        %2915 = vmatpush1.bf16.xpose.msra.mxu0 0
        %2916 = vmatprep.subr.bf16.mxu0 0
        %2917 = vmatpush1.bf16.xpose.msra.mxu0 0
        %2918 = vmatprep.subr.bf16.mxu0 0
        %2919 = vmatpush1.bf16.xpose.msra.mxu0 0
        %2920 = vmatprep.subr.bf16.mxu0 0
        %2921 = vmatpush1.bf16.xpose.msra.mxu0 %v2910
        %2922 = vmatprep.subr.bf16.mxu0 0
        %2923 = vmatpush1.bf16.xpose.msra.mxu0 %v2907
        %2924 = vmatprep.subr.bf16.mxu0 0
        %2925 = vmatpush1.bf16.xpose.msra.mxu0 %v2904
        %2926 = vmatprep.subr.bf16.mxu0 0
        %2927 = vmatpush1.bf16.xpose.msra.mxu0 %v2901
        %2928 = vmatprep.subr.bf16.mxu0 0
        %2929 = vmatpush2.bf16.xpose.msra.mxu0 0
        %2930 = vmatprep.subr.bf16.mxu0 0
        %2931 = vmatpush2.bf16.xpose.msra.mxu0 0
        %2932 = vmatprep.subr.bf16.mxu0 0
        %2933 = vmatpush2.bf16.xpose.msra.mxu0 0
        %2934 = vmatprep.subr.bf16.mxu0 0
        %2935 = vmatpush2.bf16.xpose.msra.mxu0 0
        %2936 = vmatprep.subr.bf16.mxu0 0
        %2937 = vmatpush2.bf16.xpose.msra.mxu0 0
        %2938 = vmatprep.subr.bf16.mxu0 0
        %2939 = vmatpush2.bf16.xpose.msra.mxu0 0
        %2940 = vmatprep.subr.bf16.mxu0 0
        %2941 = vmatpush2.bf16.xpose.msra.mxu0 0
        %2942 = vmatprep.subr.bf16.mxu0 0
        %2943 = vmatpush2.bf16.xpose.msra.mxu0 0
        %2944 = vmatprep.mubr.bf16.mxu0 0
        %2945 = vmatmul.mubr.bf16.gmra.mxu0 %v2889
        %v2946 = vpop.f32.mrf.mxu0
        %v2947 = vadd.f32 %v1186, %v2946
        %v2948 = vpop.f32.mrf.mxu0
        %v2949 = vpop.f32.mrf.mxu0
        %v2950 = vadd.f32 %v1187, %v2949
        %v2951 = vpop.f32.mrf.mxu0
        %2952 = vmatprep.mubr.bf16.mxu0 0
        %2953 = vmatmul.mubr.bf16.gmra.mxu0 %v2892
        %v2954 = vpop.f32.mrf.mxu0
        %v2955 = vadd.f32 %v1188, %v2954
        %v2956 = vpop.f32.mrf.mxu0
        %v2957 = vpop.f32.mrf.mxu0
        %v2958 = vadd.f32 %v1189, %v2957
        %v2959 = vpop.f32.mrf.mxu0
        %2960 = vmatprep.mubr.bf16.mxu0 0
        %2961 = vmatmul.mubr.bf16.gmra.mxu0 %v2895
        %v2962 = vpop.f32.mrf.mxu0
        %v2963 = vadd.f32 %v1190, %v2962
        %v2964 = vpop.f32.mrf.mxu0
        %v2965 = vpop.f32.mrf.mxu0
        %v2966 = vadd.f32 %v1191, %v2965
        %v2967 = vpop.f32.mrf.mxu0
        %2968 = vmatprep.mubr.bf16.mxu0 0
        %2969 = vmatmul.mubr.bf16.gmra.mxu0 %v2898
        %v2970 = vpop.f32.mrf.mxu0
        %v2971 = vadd.f32 %v1192, %v2970
        %v2972 = vpop.f32.mrf.mxu0
        %v2973 = vpop.f32.mrf.mxu0
        %v2974 = vadd.f32 %v1193, %v2973
        %v2975 = vpop.f32.mrf.mxu0
        %2976 = vdwg.mxu0
        %v2977 = vsel %vm1003, %v2947, -inf
        %2978 = vmax.xlane.f32.xlu0 %v2977
        %v2979 = vpop.xlane.xlu0 %2978
        %v2980 = vsel %vm1003, %v2950, -inf
        %2981 = vmax.xlane.f32.xlu0 %v2980
        %v2982 = vpop.xlane.xlu0 %2981
        %v2983 = vsel %vm1003, %v2955, -inf
        %2984 = vmax.xlane.f32.xlu0 %v2983
        %v2985 = vpop.xlane.xlu0 %2984
        %v2986 = vsel %vm1003, %v2958, -inf
        %2987 = vmax.xlane.f32.xlu0 %v2986
        %v2988 = vpop.xlane.xlu0 %2987
        %v2989 = vsel %vm1003, %v2963, -inf
        %2990 = vmax.xlane.f32.xlu0 %v2989
        %v2991 = vpop.xlane.xlu0 %2990
        %v2992 = vsel %vm1003, %v2966, -inf
        %2993 = vmax.xlane.f32.xlu0 %v2992
        %v2994 = vpop.xlane.xlu0 %2993
        %v2995 = vsel %vm1003, %v2971, -inf
        %2996 = vmax.xlane.f32.xlu0 %v2995
        %v2997 = vpop.xlane.xlu0 %2996
        %v2998 = vsel %vm1003, %v2974, -inf
        %2999 = vmax.xlane.f32.xlu0 %v2998
        %v3000 = vpop.xlane.xlu0 %2999
        %v3001 = vsub.f32 %v2947, %v2979
        %v3002 = vsub.f32 %v2950, %v2982
        %v3003 = vsub.f32 %v2955, %v2985
        %v3004 = vsub.f32 %v2958, %v2988
        %v3005 = vsub.f32 %v2963, %v2991
        %v3006 = vsub.f32 %v2966, %v2994
        %v3007 = vsub.f32 %v2971, %v2997
        %v3008 = vsub.f32 %v2974, %v3000
        %v3009 = vmul.f32 %v3001, 1.442695
        %v3010 = vpow.pop %v3009
        %v3011 = vmul.f32 %v3002, 1.442695
        %v3012 = vpow.pop %v3011
        %v3013 = vmul.f32 %v3003, 1.442695
        %v3014 = vpow.pop %v3013
        %v3015 = vmul.f32 %v3004, 1.442695
        %v3016 = vpow.pop %v3015
        %v3017 = vmul.f32 %v3005, 1.442695
        %v3018 = vpow.pop %v3017
        %v3019 = vmul.f32 %v3006, 1.442695
        %v3020 = vpow.pop %v3019
        %v3021 = vmul.f32 %v3007, 1.442695
        %v3022 = vpow.pop %v3021
        %v3023 = vmul.f32 %v3008, 1.442695
        %v3024 = vpow.pop %v3023
        %v3025 = vsel %vm1003, %v3010, 0.0
        %3026 = vadd.xlane.f32.xlu0 %v3025
        %v3027 = vpop.xlane.xlu0 %3026
        %v3028 = vsel %vm1003, %v3012, 0.0
        %3029 = vadd.xlane.f32.xlu0 %v3028
        %v3030 = vpop.xlane.xlu0 %3029
        %v3031 = vsel %vm1003, %v3014, 0.0
        %3032 = vadd.xlane.f32.xlu0 %v3031
        %v3033 = vpop.xlane.xlu0 %3032
        %v3034 = vsel %vm1003, %v3016, 0.0
        %3035 = vadd.xlane.f32.xlu0 %v3034
        %v3036 = vpop.xlane.xlu0 %3035
        %v3037 = vsel %vm1003, %v3018, 0.0
        %3038 = vadd.xlane.f32.xlu0 %v3037
        %v3039 = vpop.xlane.xlu0 %3038
        %v3040 = vsel %vm1003, %v3020, 0.0
        %3041 = vadd.xlane.f32.xlu0 %v3040
        %v3042 = vpop.xlane.xlu0 %3041
        %v3043 = vsel %vm1003, %v3022, 0.0
        %3044 = vadd.xlane.f32.xlu0 %v3043
        %v3045 = vpop.xlane.xlu0 %3044
        %v3046 = vsel %vm1003, %v3024, 0.0
        %3047 = vadd.xlane.f32.xlu0 %v3046
        %v3048 = vpop.xlane.xlu0 %3047
        %v3049 = vrcp.pop %v3027
        %v3050 = vrcp.pop %v3030
        %v3051 = vrcp.pop %v3033
        %v3052 = vrcp.pop %v3036
        %v3053 = vrcp.pop %v3039
        %v3054 = vrcp.pop %v3042
        %v3055 = vrcp.pop %v3045
        %v3056 = vrcp.pop %v3048
        %v3057 = vmul.f32 %v3010, %v3049
        %v3058 = vmul.f32 %v3012, %v3050
        %v3059 = vmul.f32 %v3014, %v3051
        %v3060 = vmul.f32 %v3016, %v3052
        %v3061 = vmul.f32 %v3018, %v3053
        %v3062 = vmul.f32 %v3020, %v3054
        %v3063 = vmul.f32 %v3022, %v3055
        %v3064 = vmul.f32 %v3024, %v3056
        %v3065 = vpack.c.bf16 %v3058, %v3057
        %v3066 = vpack.c.bf16 %v3060, %v3059
        %v3067 = vpack.c.bf16 %v3062, %v3061
        %v3068 = vpack.c.bf16 %v3064, %v3063
        %3069 = vrot.lane.b32.xlu0 %v2590, 88
        %v3070 = vpop.permute.xlu0 %3069
        %3071 = vrot.lane.b32.xlu0 %v2591, 88
        %v3072 = vpop.permute.xlu0 %3071
        %3073 = vrot.lane.b32.xlu0 %v2592, 88
        %v3074 = vpop.permute.xlu0 %3073
        %3075 = vrot.lane.b32.xlu0 %v2593, 88
        %v3076 = vpop.permute.xlu0 %3075
        %v3082 = vsel %vm1003, %v3065, 0
        %v3085 = vsel %vm1003, %v3066, 0
        %v3088 = vsel %vm1003, %v3067, 0
        %v3091 = vsel %vm1003, %v3068, 0
        %3093 = vmatprep.subr.bf16.mxu0 0
        %3094 = vmatpush1.bf16.msra.mxu0 0
        %3095 = vmatprep.subr.bf16.mxu0 0
        %3096 = vmatpush1.bf16.msra.mxu0 0
        %3097 = vmatprep.subr.bf16.mxu0 0
        %3098 = vmatpush1.bf16.msra.mxu0 0
        %3099 = vmatprep.subr.bf16.mxu0 0
        %3100 = vmatpush1.bf16.msra.mxu0 0
        %3101 = vmatprep.subr.bf16.mxu0 0
        %3102 = vmatpush1.bf16.msra.mxu0 %v3076
        %3103 = vmatprep.subr.bf16.mxu0 0
        %3104 = vmatpush1.bf16.msra.mxu0 %v3074
        %3105 = vmatprep.subr.bf16.mxu0 0
        %3106 = vmatpush1.bf16.msra.mxu0 %v3072
        %3107 = vmatprep.subr.bf16.mxu0 0
        %3108 = vmatpush1.bf16.msra.mxu0 %v3070
        %3109 = vmatprep.subr.bf16.mxu0 0
        %3110 = vmatpush2.bf16.msra.mxu0 0
        %3111 = vmatprep.subr.bf16.mxu0 0
        %3112 = vmatpush2.bf16.msra.mxu0 0
        %3113 = vmatprep.subr.bf16.mxu0 0
        %3114 = vmatpush2.bf16.msra.mxu0 0
        %3115 = vmatprep.subr.bf16.mxu0 0
        %3116 = vmatpush2.bf16.msra.mxu0 0
        %3117 = vmatprep.subr.bf16.mxu0 0
        %3118 = vmatpush2.bf16.msra.mxu0 0
        %3119 = vmatprep.subr.bf16.mxu0 0
        %3120 = vmatpush2.bf16.msra.mxu0 0
        %3121 = vmatprep.subr.bf16.mxu0 0
        %3122 = vmatpush2.bf16.msra.mxu0 0
        %3123 = vmatprep.subr.bf16.mxu0 0
        %3124 = vmatpush2.bf16.msra.mxu0 0
        %3125 = vmatprep.mubr.bf16.mxu0 0
        %3126 = vmatmul.mubr.bf16.gmra.mxu0 %v3082
        %v3127 = vpop.f32.mrf.mxu0
        %v3128 = vadd.f32 0.0, %v3127
        %v3129 = vpop.f32.mrf.mxu0
        %v3130 = vpop.f32.mrf.mxu0
        %v3131 = vadd.f32 0.0, %v3130
        %v3132 = vpop.f32.mrf.mxu0
        %3133 = vmatprep.mubr.bf16.mxu0 0
        %3134 = vmatmul.mubr.bf16.gmra.mxu0 %v3085
        %v3135 = vpop.f32.mrf.mxu0
        %v3136 = vadd.f32 0.0, %v3135
        %v3137 = vpop.f32.mrf.mxu0
        %v3138 = vpop.f32.mrf.mxu0
        %v3139 = vadd.f32 0.0, %v3138
        %v3140 = vpop.f32.mrf.mxu0
        %3141 = vmatprep.mubr.bf16.mxu0 0
        %3142 = vmatmul.mubr.bf16.gmra.mxu0 %v3088
        %v3143 = vpop.f32.mrf.mxu0
        %v3144 = vadd.f32 0.0, %v3143
        %v3145 = vpop.f32.mrf.mxu0
        %v3146 = vpop.f32.mrf.mxu0
        %v3147 = vadd.f32 0.0, %v3146
        %v3148 = vpop.f32.mrf.mxu0
        %3149 = vmatprep.mubr.bf16.mxu0 0
        %3150 = vmatmul.mubr.bf16.gmra.mxu0 %v3091
        %v3151 = vpop.f32.mrf.mxu0
        %v3152 = vadd.f32 0.0, %v3151
        %v3153 = vpop.f32.mrf.mxu0
        %v3154 = vpop.f32.mrf.mxu0
        %v3155 = vadd.f32 0.0, %v3154
        %v3156 = vpop.f32.mrf.mxu0
        %3157 = vdwg.mxu0
        %3158 = vrot.lane.b32.xlu0 %v2586, 112
        %v3159 = vpop.permute.xlu0 %3158
        %3160 = vrot.lane.b32.xlu0 %v2587, 112
        %v3161 = vpop.permute.xlu0 %3160
        %3162 = vrot.lane.b32.xlu0 %v2588, 112
        %v3163 = vpop.permute.xlu0 %3162
        %3164 = vrot.lane.b32.xlu0 %v2589, 112
        %v3165 = vpop.permute.xlu0 %3164
        %3166 = vrot.lane.b32.xlu0 %v2590, 112
        %v3167 = vpop.permute.xlu0 %3166
        %3168 = vrot.lane.b32.xlu0 %v2591, 112
        %v3169 = vpop.permute.xlu0 %3168
        %3170 = vrot.lane.b32.xlu0 %v2592, 112
        %v3171 = vpop.permute.xlu0 %3170
        %3172 = vrot.lane.b32.xlu0 %v2593, 112
        %v3173 = vpop.permute.xlu0 %3172
        %v3175 = vsel %vm913, %v3159, 0
        %v3178 = vsel %vm913, %v3161, 0
        %v3181 = vsel %vm913, %v3163, 0
        %v3184 = vsel %vm913, %v3165, 0
        %v3187 = vsel %vm913, %v3167, 0
        %v3190 = vsel %vm913, %v3169, 0
        %v3193 = vsel %vm913, %v3171, 0
        %v3196 = vsel %vm913, %v3173, 0
        %3198 = vmatprep.subr.bf16.mxu0 0
        %3199 = vmatpush1.bf16.xpose.msra.mxu0 0
        %3200 = vmatprep.subr.bf16.mxu0 0
        %3201 = vmatpush1.bf16.xpose.msra.mxu0 0
        %3202 = vmatprep.subr.bf16.mxu0 0
        %3203 = vmatpush1.bf16.xpose.msra.mxu0 0
        %3204 = vmatprep.subr.bf16.mxu0 0
        %3205 = vmatpush1.bf16.xpose.msra.mxu0 0
        %3206 = vmatprep.subr.bf16.mxu0 0
        %3207 = vmatpush1.bf16.xpose.msra.mxu0 %v3196
        %3208 = vmatprep.subr.bf16.mxu0 0
        %3209 = vmatpush1.bf16.xpose.msra.mxu0 %v3193
        %3210 = vmatprep.subr.bf16.mxu0 0
        %3211 = vmatpush1.bf16.xpose.msra.mxu0 %v3190
        %3212 = vmatprep.subr.bf16.mxu0 0
        %3213 = vmatpush1.bf16.xpose.msra.mxu0 %v3187
        %3214 = vmatprep.subr.bf16.mxu0 0
        %3215 = vmatpush2.bf16.xpose.msra.mxu0 0
        %3216 = vmatprep.subr.bf16.mxu0 0
        %3217 = vmatpush2.bf16.xpose.msra.mxu0 0
        %3218 = vmatprep.subr.bf16.mxu0 0
        %3219 = vmatpush2.bf16.xpose.msra.mxu0 0
        %3220 = vmatprep.subr.bf16.mxu0 0
        %3221 = vmatpush2.bf16.xpose.msra.mxu0 0
        %3222 = vmatprep.subr.bf16.mxu0 0
        %3223 = vmatpush2.bf16.xpose.msra.mxu0 0
        %3224 = vmatprep.subr.bf16.mxu0 0
        %3225 = vmatpush2.bf16.xpose.msra.mxu0 0
        %3226 = vmatprep.subr.bf16.mxu0 0
        %3227 = vmatpush2.bf16.xpose.msra.mxu0 0
        %3228 = vmatprep.subr.bf16.mxu0 0
        %3229 = vmatpush2.bf16.xpose.msra.mxu0 0
        %3230 = vmatprep.mubr.bf16.mxu0 0
        %3231 = vmatmul.mubr.bf16.gmra.mxu0 %v3175
        %v3232 = vpop.f32.mrf.mxu0
        %v3233 = vadd.f32 %v1481, %v3232
        %v3234 = vpop.f32.mrf.mxu0
        %v3235 = vpop.f32.mrf.mxu0
        %v3236 = vadd.f32 %v1482, %v3235
        %v3237 = vpop.f32.mrf.mxu0
        %3238 = vmatprep.mubr.bf16.mxu0 0
        %3239 = vmatmul.mubr.bf16.gmra.mxu0 %v3178
        %v3240 = vpop.f32.mrf.mxu0
        %v3241 = vadd.f32 %v1483, %v3240
        %v3242 = vpop.f32.mrf.mxu0
        %v3243 = vpop.f32.mrf.mxu0
        %v3244 = vadd.f32 %v1484, %v3243
        %v3245 = vpop.f32.mrf.mxu0
        %3246 = vmatprep.mubr.bf16.mxu0 0
        %3247 = vmatmul.mubr.bf16.gmra.mxu0 %v3181
        %v3248 = vpop.f32.mrf.mxu0
        %v3249 = vadd.f32 %v1485, %v3248
        %v3250 = vpop.f32.mrf.mxu0
        %v3251 = vpop.f32.mrf.mxu0
        %v3252 = vadd.f32 %v1486, %v3251
        %v3253 = vpop.f32.mrf.mxu0
        %3254 = vmatprep.mubr.bf16.mxu0 0
        %3255 = vmatmul.mubr.bf16.gmra.mxu0 %v3184
        %v3256 = vpop.f32.mrf.mxu0
        %v3257 = vadd.f32 %v1487, %v3256
        %v3258 = vpop.f32.mrf.mxu0
        %v3259 = vpop.f32.mrf.mxu0
        %v3260 = vadd.f32 %v1488, %v3259
        %v3261 = vpop.f32.mrf.mxu0
        %3262 = vdwg.mxu0
        %v3263 = vsel %vm1003, %v3233, -inf
        %3264 = vmax.xlane.f32.xlu0 %v3263
        %v3265 = vpop.xlane.xlu0 %3264
        %v3266 = vsel %vm1003, %v3236, -inf
        %3267 = vmax.xlane.f32.xlu0 %v3266
        %v3268 = vpop.xlane.xlu0 %3267
        %v3269 = vsel %vm1003, %v3241, -inf
        %3270 = vmax.xlane.f32.xlu0 %v3269
        %v3271 = vpop.xlane.xlu0 %3270
        %v3272 = vsel %vm1003, %v3244, -inf
        %3273 = vmax.xlane.f32.xlu0 %v3272
        %v3274 = vpop.xlane.xlu0 %3273
        %v3275 = vsel %vm1003, %v3249, -inf
        %3276 = vmax.xlane.f32.xlu0 %v3275
        %v3277 = vpop.xlane.xlu0 %3276
        %v3278 = vsel %vm1003, %v3252, -inf
        %3279 = vmax.xlane.f32.xlu0 %v3278
        %v3280 = vpop.xlane.xlu0 %3279
        %v3281 = vsel %vm1003, %v3257, -inf
        %3282 = vmax.xlane.f32.xlu0 %v3281
        %v3283 = vpop.xlane.xlu0 %3282
        %v3284 = vsel %vm1003, %v3260, -inf
        %3285 = vmax.xlane.f32.xlu0 %v3284
        %v3286 = vpop.xlane.xlu0 %3285
        %v3287 = vsub.f32 %v3233, %v3265
        %v3288 = vsub.f32 %v3236, %v3268
        %v3289 = vsub.f32 %v3241, %v3271
        %v3290 = vsub.f32 %v3244, %v3274
        %v3291 = vsub.f32 %v3249, %v3277
        %v3292 = vsub.f32 %v3252, %v3280
        %v3293 = vsub.f32 %v3257, %v3283
        %v3294 = vsub.f32 %v3260, %v3286
        %v3295 = vmul.f32 %v3287, 1.442695
        %v3296 = vpow.pop %v3295
        %v3297 = vmul.f32 %v3288, 1.442695
        %v3298 = vpow.pop %v3297
        %v3299 = vmul.f32 %v3289, 1.442695
        %v3300 = vpow.pop %v3299
        %v3301 = vmul.f32 %v3290, 1.442695
        %v3302 = vpow.pop %v3301
        %v3303 = vmul.f32 %v3291, 1.442695
        %v3304 = vpow.pop %v3303
        %v3305 = vmul.f32 %v3292, 1.442695
        %v3306 = vpow.pop %v3305
        %v3307 = vmul.f32 %v3293, 1.442695
        %v3308 = vpow.pop %v3307
        %v3309 = vmul.f32 %v3294, 1.442695
        %v3310 = vpow.pop %v3309
        %v3311 = vsel %vm1003, %v3296, 0.0
        %3312 = vadd.xlane.f32.xlu0 %v3311
        %v3313 = vpop.xlane.xlu0 %3312
        %v3314 = vsel %vm1003, %v3298, 0.0
        %3315 = vadd.xlane.f32.xlu0 %v3314
        %v3316 = vpop.xlane.xlu0 %3315
        %v3317 = vsel %vm1003, %v3300, 0.0
        %3318 = vadd.xlane.f32.xlu0 %v3317
        %v3319 = vpop.xlane.xlu0 %3318
        %v3320 = vsel %vm1003, %v3302, 0.0
        %3321 = vadd.xlane.f32.xlu0 %v3320
        %v3322 = vpop.xlane.xlu0 %3321
        %v3323 = vsel %vm1003, %v3304, 0.0
        %3324 = vadd.xlane.f32.xlu0 %v3323
        %v3325 = vpop.xlane.xlu0 %3324
        %v3326 = vsel %vm1003, %v3306, 0.0
        %3327 = vadd.xlane.f32.xlu0 %v3326
        %v3328 = vpop.xlane.xlu0 %3327
        %v3329 = vsel %vm1003, %v3308, 0.0
        %3330 = vadd.xlane.f32.xlu0 %v3329
        %v3331 = vpop.xlane.xlu0 %3330
        %v3332 = vsel %vm1003, %v3310, 0.0
        %3333 = vadd.xlane.f32.xlu0 %v3332
        %v3334 = vpop.xlane.xlu0 %3333
        %v3335 = vrcp.pop %v3313
        %v3336 = vrcp.pop %v3316
        %v3337 = vrcp.pop %v3319
        %v3338 = vrcp.pop %v3322
        %v3339 = vrcp.pop %v3325
        %v3340 = vrcp.pop %v3328
        %v3341 = vrcp.pop %v3331
        %v3342 = vrcp.pop %v3334
        %v3343 = vmul.f32 %v3296, %v3335
        %v3344 = vmul.f32 %v3298, %v3336
        %v3345 = vmul.f32 %v3300, %v3337
        %v3346 = vmul.f32 %v3302, %v3338
        %v3347 = vmul.f32 %v3304, %v3339
        %v3348 = vmul.f32 %v3306, %v3340
        %v3349 = vmul.f32 %v3308, %v3341
        %v3350 = vmul.f32 %v3310, %v3342
        %v3351 = vpack.c.bf16 %v3344, %v3343
        %v3352 = vpack.c.bf16 %v3346, %v3345
        %v3353 = vpack.c.bf16 %v3348, %v3347
        %v3354 = vpack.c.bf16 %v3350, %v3349
        %3355 = vrot.lane.b32.xlu0 %v2590, 80
        %v3356 = vpop.permute.xlu0 %3355
        %3357 = vrot.lane.b32.xlu0 %v2591, 80
        %v3358 = vpop.permute.xlu0 %3357
        %3359 = vrot.lane.b32.xlu0 %v2592, 80
        %v3360 = vpop.permute.xlu0 %3359
        %3361 = vrot.lane.b32.xlu0 %v2593, 80
        %v3362 = vpop.permute.xlu0 %3361
        %v3368 = vsel %vm1003, %v3351, 0
        %v3371 = vsel %vm1003, %v3352, 0
        %v3374 = vsel %vm1003, %v3353, 0
        %v3377 = vsel %vm1003, %v3354, 0
        %3379 = vmatprep.subr.bf16.mxu0 0
        %3380 = vmatpush1.bf16.msra.mxu0 0
        %3381 = vmatprep.subr.bf16.mxu0 0
        %3382 = vmatpush1.bf16.msra.mxu0 0
        %3383 = vmatprep.subr.bf16.mxu0 0
        %3384 = vmatpush1.bf16.msra.mxu0 0
        %3385 = vmatprep.subr.bf16.mxu0 0
        %3386 = vmatpush1.bf16.msra.mxu0 0
        %3387 = vmatprep.subr.bf16.mxu0 0
        %3388 = vmatpush1.bf16.msra.mxu0 %v3362
        %3389 = vmatprep.subr.bf16.mxu0 0
        %3390 = vmatpush1.bf16.msra.mxu0 %v3360
        %3391 = vmatprep.subr.bf16.mxu0 0
        %3392 = vmatpush1.bf16.msra.mxu0 %v3358
        %3393 = vmatprep.subr.bf16.mxu0 0
        %3394 = vmatpush1.bf16.msra.mxu0 %v3356
        %3395 = vmatprep.subr.bf16.mxu0 0
        %3396 = vmatpush2.bf16.msra.mxu0 0
        %3397 = vmatprep.subr.bf16.mxu0 0
        %3398 = vmatpush2.bf16.msra.mxu0 0
        %3399 = vmatprep.subr.bf16.mxu0 0
        %3400 = vmatpush2.bf16.msra.mxu0 0
        %3401 = vmatprep.subr.bf16.mxu0 0
        %3402 = vmatpush2.bf16.msra.mxu0 0
        %3403 = vmatprep.subr.bf16.mxu0 0
        %3404 = vmatpush2.bf16.msra.mxu0 0
        %3405 = vmatprep.subr.bf16.mxu0 0
        %3406 = vmatpush2.bf16.msra.mxu0 0
        %3407 = vmatprep.subr.bf16.mxu0 0
        %3408 = vmatpush2.bf16.msra.mxu0 0
        %3409 = vmatprep.subr.bf16.mxu0 0
        %3410 = vmatpush2.bf16.msra.mxu0 0
        %3411 = vmatprep.mubr.bf16.mxu0 0
        %3412 = vmatmul.mubr.bf16.gmra.mxu0 %v3368
        %v3413 = vpop.f32.mrf.mxu0
        %v3414 = vadd.f32 0.0, %v3413
        %v3415 = vpop.f32.mrf.mxu0
        %v3416 = vpop.f32.mrf.mxu0
        %v3417 = vadd.f32 0.0, %v3416
        %v3418 = vpop.f32.mrf.mxu0
        %3419 = vmatprep.mubr.bf16.mxu0 0
        %3420 = vmatmul.mubr.bf16.gmra.mxu0 %v3371
        %v3421 = vpop.f32.mrf.mxu0
        %v3422 = vadd.f32 0.0, %v3421
        %v3423 = vpop.f32.mrf.mxu0
        %v3424 = vpop.f32.mrf.mxu0
        %v3425 = vadd.f32 0.0, %v3424
        %v3426 = vpop.f32.mrf.mxu0
        %3427 = vmatprep.mubr.bf16.mxu0 0
        %3428 = vmatmul.mubr.bf16.gmra.mxu0 %v3374
        %v3429 = vpop.f32.mrf.mxu0
        %v3430 = vadd.f32 0.0, %v3429
        %v3431 = vpop.f32.mrf.mxu0
        %v3432 = vpop.f32.mrf.mxu0
        %v3433 = vadd.f32 0.0, %v3432
        %v3434 = vpop.f32.mrf.mxu0
        %3435 = vmatprep.mubr.bf16.mxu0 0
        %3436 = vmatmul.mubr.bf16.gmra.mxu0 %v3377
        %v3437 = vpop.f32.mrf.mxu0
        %v3438 = vadd.f32 0.0, %v3437
        %v3439 = vpop.f32.mrf.mxu0
        %v3440 = vpop.f32.mrf.mxu0
        %v3441 = vadd.f32 0.0, %v3440
        %v3442 = vpop.f32.mrf.mxu0
        %3443 = vdwg.mxu0
        %3444 = vrot.lane.b32.xlu0 %v2586, 104
        %v3445 = vpop.permute.xlu0 %3444
        %3446 = vrot.lane.b32.xlu0 %v2587, 104
        %v3447 = vpop.permute.xlu0 %3446
        %3448 = vrot.lane.b32.xlu0 %v2588, 104
        %v3449 = vpop.permute.xlu0 %3448
        %3450 = vrot.lane.b32.xlu0 %v2589, 104
        %v3451 = vpop.permute.xlu0 %3450
        %3452 = vrot.lane.b32.xlu0 %v2590, 104
        %v3453 = vpop.permute.xlu0 %3452
        %3454 = vrot.lane.b32.xlu0 %v2591, 104
        %v3455 = vpop.permute.xlu0 %3454
        %3456 = vrot.lane.b32.xlu0 %v2592, 104
        %v3457 = vpop.permute.xlu0 %3456
        %3458 = vrot.lane.b32.xlu0 %v2593, 104
        %v3459 = vpop.permute.xlu0 %3458
        %v3461 = vsel %vm913, %v3445, 0
        %v3464 = vsel %vm913, %v3447, 0
        %v3467 = vsel %vm913, %v3449, 0
        %v3470 = vsel %vm913, %v3451, 0
        %v3473 = vsel %vm913, %v3453, 0
        %v3476 = vsel %vm913, %v3455, 0
        %v3479 = vsel %vm913, %v3457, 0
        %v3482 = vsel %vm913, %v3459, 0
        %3484 = vmatprep.subr.bf16.mxu0 0
        %3485 = vmatpush1.bf16.xpose.msra.mxu0 0
        %3486 = vmatprep.subr.bf16.mxu0 0
        %3487 = vmatpush1.bf16.xpose.msra.mxu0 0
        %3488 = vmatprep.subr.bf16.mxu0 0
        %3489 = vmatpush1.bf16.xpose.msra.mxu0 0
        %3490 = vmatprep.subr.bf16.mxu0 0
        %3491 = vmatpush1.bf16.xpose.msra.mxu0 0
        %3492 = vmatprep.subr.bf16.mxu0 0
        %3493 = vmatpush1.bf16.xpose.msra.mxu0 %v3482
        %3494 = vmatprep.subr.bf16.mxu0 0
        %3495 = vmatpush1.bf16.xpose.msra.mxu0 %v3479
        %3496 = vmatprep.subr.bf16.mxu0 0
        %3497 = vmatpush1.bf16.xpose.msra.mxu0 %v3476
        %3498 = vmatprep.subr.bf16.mxu0 0
        %3499 = vmatpush1.bf16.xpose.msra.mxu0 %v3473
        %3500 = vmatprep.subr.bf16.mxu0 0
        %3501 = vmatpush2.bf16.xpose.msra.mxu0 0
        %3502 = vmatprep.subr.bf16.mxu0 0
        %3503 = vmatpush2.bf16.xpose.msra.mxu0 0
        %3504 = vmatprep.subr.bf16.mxu0 0
        %3505 = vmatpush2.bf16.xpose.msra.mxu0 0
        %3506 = vmatprep.subr.bf16.mxu0 0
        %3507 = vmatpush2.bf16.xpose.msra.mxu0 0
        %3508 = vmatprep.subr.bf16.mxu0 0
        %3509 = vmatpush2.bf16.xpose.msra.mxu0 0
        %3510 = vmatprep.subr.bf16.mxu0 0
        %3511 = vmatpush2.bf16.xpose.msra.mxu0 0
        %3512 = vmatprep.subr.bf16.mxu0 0
        %3513 = vmatpush2.bf16.xpose.msra.mxu0 0
        %3514 = vmatprep.subr.bf16.mxu0 0
        %3515 = vmatpush2.bf16.xpose.msra.mxu0 0
        %3516 = vmatprep.mubr.bf16.mxu0 0
        %3517 = vmatmul.mubr.bf16.gmra.mxu0 %v3461
        %v3518 = vpop.f32.mrf.mxu0
        %v3519 = vadd.f32 %v1776, %v3518
        %v3520 = vpop.f32.mrf.mxu0
        %v3521 = vpop.f32.mrf.mxu0
        %v3522 = vadd.f32 %v1777, %v3521
        %v3523 = vpop.f32.mrf.mxu0
        %3524 = vmatprep.mubr.bf16.mxu0 0
        %3525 = vmatmul.mubr.bf16.gmra.mxu0 %v3464
        %v3526 = vpop.f32.mrf.mxu0
        %v3527 = vadd.f32 %v1778, %v3526
        %v3528 = vpop.f32.mrf.mxu0
        %v3529 = vpop.f32.mrf.mxu0
        %v3530 = vadd.f32 %v1779, %v3529
        %v3531 = vpop.f32.mrf.mxu0
        %3532 = vmatprep.mubr.bf16.mxu0 0
        %3533 = vmatmul.mubr.bf16.gmra.mxu0 %v3467
        %v3534 = vpop.f32.mrf.mxu0
        %v3535 = vadd.f32 %v1780, %v3534
        %v3536 = vpop.f32.mrf.mxu0
        %v3537 = vpop.f32.mrf.mxu0
        %v3538 = vadd.f32 %v1781, %v3537
        %v3539 = vpop.f32.mrf.mxu0
        %3540 = vmatprep.mubr.bf16.mxu0 0
        %3541 = vmatmul.mubr.bf16.gmra.mxu0 %v3470
        %v3542 = vpop.f32.mrf.mxu0
        %v3543 = vadd.f32 %v1782, %v3542
        %v3544 = vpop.f32.mrf.mxu0
        %v3545 = vpop.f32.mrf.mxu0
        %v3546 = vadd.f32 %v1783, %v3545
        %v3547 = vpop.f32.mrf.mxu0
        %3548 = vdwg.mxu0
        %v3549 = vsel %vm1003, %v3519, -inf
        %3550 = vmax.xlane.f32.xlu0 %v3549
        %v3551 = vpop.xlane.xlu0 %3550
        %v3552 = vsel %vm1003, %v3522, -inf
        %3553 = vmax.xlane.f32.xlu0 %v3552
        %v3554 = vpop.xlane.xlu0 %3553
        %v3555 = vsel %vm1003, %v3527, -inf
        %3556 = vmax.xlane.f32.xlu0 %v3555
        %v3557 = vpop.xlane.xlu0 %3556
        %v3558 = vsel %vm1003, %v3530, -inf
        %3559 = vmax.xlane.f32.xlu0 %v3558
        %v3560 = vpop.xlane.xlu0 %3559
        %v3561 = vsel %vm1003, %v3535, -inf
        %3562 = vmax.xlane.f32.xlu0 %v3561
        %v3563 = vpop.xlane.xlu0 %3562
        %v3564 = vsel %vm1003, %v3538, -inf
        %3565 = vmax.xlane.f32.xlu0 %v3564
        %v3566 = vpop.xlane.xlu0 %3565
        %v3567 = vsel %vm1003, %v3543, -inf
        %3568 = vmax.xlane.f32.xlu0 %v3567
        %v3569 = vpop.xlane.xlu0 %3568
        %v3570 = vsel %vm1003, %v3546, -inf
        %3571 = vmax.xlane.f32.xlu0 %v3570
        %v3572 = vpop.xlane.xlu0 %3571
        %v3573 = vsub.f32 %v3519, %v3551
        %v3574 = vsub.f32 %v3522, %v3554
        %v3575 = vsub.f32 %v3527, %v3557
        %v3576 = vsub.f32 %v3530, %v3560
        %v3577 = vsub.f32 %v3535, %v3563
        %v3578 = vsub.f32 %v3538, %v3566
        %v3579 = vsub.f32 %v3543, %v3569
        %v3580 = vsub.f32 %v3546, %v3572
        %v3581 = vmul.f32 %v3573, 1.442695
        %v3582 = vpow.pop %v3581
        %v3583 = vmul.f32 %v3574, 1.442695
        %v3584 = vpow.pop %v3583
        %v3585 = vmul.f32 %v3575, 1.442695
        %v3586 = vpow.pop %v3585
        %v3587 = vmul.f32 %v3576, 1.442695
        %v3588 = vpow.pop %v3587
        %v3589 = vmul.f32 %v3577, 1.442695
        %v3590 = vpow.pop %v3589
        %v3591 = vmul.f32 %v3578, 1.442695
        %v3592 = vpow.pop %v3591
        %v3593 = vmul.f32 %v3579, 1.442695
        %v3594 = vpow.pop %v3593
        %v3595 = vmul.f32 %v3580, 1.442695
        %v3596 = vpow.pop %v3595
        %v3597 = vsel %vm1003, %v3582, 0.0
        %3598 = vadd.xlane.f32.xlu0 %v3597
        %v3599 = vpop.xlane.xlu0 %3598
        %v3600 = vsel %vm1003, %v3584, 0.0
        %3601 = vadd.xlane.f32.xlu0 %v3600
        %v3602 = vpop.xlane.xlu0 %3601
        %v3603 = vsel %vm1003, %v3586, 0.0
        %3604 = vadd.xlane.f32.xlu0 %v3603
        %v3605 = vpop.xlane.xlu0 %3604
        %v3606 = vsel %vm1003, %v3588, 0.0
        %3607 = vadd.xlane.f32.xlu0 %v3606
        %v3608 = vpop.xlane.xlu0 %3607
        %v3609 = vsel %vm1003, %v3590, 0.0
        %3610 = vadd.xlane.f32.xlu0 %v3609
        %v3611 = vpop.xlane.xlu0 %3610
        %v3612 = vsel %vm1003, %v3592, 0.0
        %3613 = vadd.xlane.f32.xlu0 %v3612
        %v3614 = vpop.xlane.xlu0 %3613
        %v3615 = vsel %vm1003, %v3594, 0.0
        %3616 = vadd.xlane.f32.xlu0 %v3615
        %v3617 = vpop.xlane.xlu0 %3616
        %v3618 = vsel %vm1003, %v3596, 0.0
        %3619 = vadd.xlane.f32.xlu0 %v3618
        %v3620 = vpop.xlane.xlu0 %3619
        %v3621 = vrcp.pop %v3599
        %v3622 = vrcp.pop %v3602
        %v3623 = vrcp.pop %v3605
        %v3624 = vrcp.pop %v3608
        %v3625 = vrcp.pop %v3611
        %v3626 = vrcp.pop %v3614
        %v3627 = vrcp.pop %v3617
        %v3628 = vrcp.pop %v3620
        %v3629 = vmul.f32 %v3582, %v3621
        %v3630 = vmul.f32 %v3584, %v3622
        %v3631 = vmul.f32 %v3586, %v3623
        %v3632 = vmul.f32 %v3588, %v3624
        %v3633 = vmul.f32 %v3590, %v3625
        %v3634 = vmul.f32 %v3592, %v3626
        %v3635 = vmul.f32 %v3594, %v3627
        %v3636 = vmul.f32 %v3596, %v3628
        %v3637 = vpack.c.bf16 %v3630, %v3629
        %v3638 = vpack.c.bf16 %v3632, %v3631
        %v3639 = vpack.c.bf16 %v3634, %v3633
        %v3640 = vpack.c.bf16 %v3636, %v3635
        %3641 = vrot.lane.b32.xlu0 %v2590, 72
        %v3642 = vpop.permute.xlu0 %3641
        %3643 = vrot.lane.b32.xlu0 %v2591, 72
        %v3644 = vpop.permute.xlu0 %3643
        %3645 = vrot.lane.b32.xlu0 %v2592, 72
        %v3646 = vpop.permute.xlu0 %3645
        %3647 = vrot.lane.b32.xlu0 %v2593, 72
        %v3648 = vpop.permute.xlu0 %3647
        %v3654 = vsel %vm1003, %v3637, 0
        %v3657 = vsel %vm1003, %v3638, 0
        %v3660 = vsel %vm1003, %v3639, 0
        %v3663 = vsel %vm1003, %v3640, 0
        %3665 = vmatprep.subr.bf16.mxu0 0
        %3666 = vmatpush1.bf16.msra.mxu0 0
        %3667 = vmatprep.subr.bf16.mxu0 0
        %3668 = vmatpush1.bf16.msra.mxu0 0
        %3669 = vmatprep.subr.bf16.mxu0 0
        %3670 = vmatpush1.bf16.msra.mxu0 0
        %3671 = vmatprep.subr.bf16.mxu0 0
        %3672 = vmatpush1.bf16.msra.mxu0 0
        %3673 = vmatprep.subr.bf16.mxu0 0
        %3674 = vmatpush1.bf16.msra.mxu0 %v3648
        %3675 = vmatprep.subr.bf16.mxu0 0
        %3676 = vmatpush1.bf16.msra.mxu0 %v3646
        %3677 = vmatprep.subr.bf16.mxu0 0
        %3678 = vmatpush1.bf16.msra.mxu0 %v3644
        %3679 = vmatprep.subr.bf16.mxu0 0
        %3680 = vmatpush1.bf16.msra.mxu0 %v3642
        %3681 = vmatprep.subr.bf16.mxu0 0
        %3682 = vmatpush2.bf16.msra.mxu0 0
        %3683 = vmatprep.subr.bf16.mxu0 0
        %3684 = vmatpush2.bf16.msra.mxu0 0
        %3685 = vmatprep.subr.bf16.mxu0 0
        %3686 = vmatpush2.bf16.msra.mxu0 0
        %3687 = vmatprep.subr.bf16.mxu0 0
        %3688 = vmatpush2.bf16.msra.mxu0 0
        %3689 = vmatprep.subr.bf16.mxu0 0
        %3690 = vmatpush2.bf16.msra.mxu0 0
        %3691 = vmatprep.subr.bf16.mxu0 0
        %3692 = vmatpush2.bf16.msra.mxu0 0
        %3693 = vmatprep.subr.bf16.mxu0 0
        %3694 = vmatpush2.bf16.msra.mxu0 0
        %3695 = vmatprep.subr.bf16.mxu0 0
        %3696 = vmatpush2.bf16.msra.mxu0 0
        %3697 = vmatprep.mubr.bf16.mxu0 0
        %3698 = vmatmul.mubr.bf16.gmra.mxu0 %v3654
        %v3699 = vpop.f32.mrf.mxu0
        %v3700 = vadd.f32 0.0, %v3699
        %v3701 = vpop.f32.mrf.mxu0
        %v3702 = vpop.f32.mrf.mxu0
        %v3703 = vadd.f32 0.0, %v3702
        %v3704 = vpop.f32.mrf.mxu0
        %3705 = vmatprep.mubr.bf16.mxu0 0
        %3706 = vmatmul.mubr.bf16.gmra.mxu0 %v3657
        %v3707 = vpop.f32.mrf.mxu0
        %v3708 = vadd.f32 0.0, %v3707
        %v3709 = vpop.f32.mrf.mxu0
        %v3710 = vpop.f32.mrf.mxu0
        %v3711 = vadd.f32 0.0, %v3710
        %v3712 = vpop.f32.mrf.mxu0
        %3713 = vmatprep.mubr.bf16.mxu0 0
        %3714 = vmatmul.mubr.bf16.gmra.mxu0 %v3660
        %v3715 = vpop.f32.mrf.mxu0
        %v3716 = vadd.f32 0.0, %v3715
        %v3717 = vpop.f32.mrf.mxu0
        %v3718 = vpop.f32.mrf.mxu0
        %v3719 = vadd.f32 0.0, %v3718
        %v3720 = vpop.f32.mrf.mxu0
        %3721 = vmatprep.mubr.bf16.mxu0 0
        %3722 = vmatmul.mubr.bf16.gmra.mxu0 %v3663
        %v3723 = vpop.f32.mrf.mxu0
        %v3724 = vadd.f32 0.0, %v3723
        %v3725 = vpop.f32.mrf.mxu0
        %v3726 = vpop.f32.mrf.mxu0
        %v3727 = vadd.f32 0.0, %v3726
        %v3728 = vpop.f32.mrf.mxu0
        %3729 = vdwg.mxu0
        %3738 = vrot.lane.b32.xlu0 %v3128, 8
        %v3739 = vpop.permute.xlu0 %3738
        %3740 = vrot.lane.b32.xlu0 %v3131, 8
        %v3741 = vpop.permute.xlu0 %3740
        %3742 = vrot.lane.b32.xlu0 %v3136, 8
        %v3743 = vpop.permute.xlu0 %3742
        %3744 = vrot.lane.b32.xlu0 %v3139, 8
        %v3745 = vpop.permute.xlu0 %3744
        %3746 = vrot.lane.b32.xlu0 %v3144, 8
        %v3747 = vpop.permute.xlu0 %3746
        %3748 = vrot.lane.b32.xlu0 %v3147, 8
        %v3749 = vpop.permute.xlu0 %3748
        %3750 = vrot.lane.b32.xlu0 %v3152, 8
        %v3751 = vpop.permute.xlu0 %3750
        %3752 = vrot.lane.b32.xlu0 %v3155, 8
        %v3753 = vpop.permute.xlu0 %3752
        %3770 = vrot.lane.b32.xlu0 %v3414, 16
        %v3771 = vpop.permute.xlu0 %3770
        %3772 = vrot.lane.b32.xlu0 %v3417, 16
        %v3773 = vpop.permute.xlu0 %3772
        %3774 = vrot.lane.b32.xlu0 %v3422, 16
        %v3775 = vpop.permute.xlu0 %3774
        %3776 = vrot.lane.b32.xlu0 %v3425, 16
        %v3777 = vpop.permute.xlu0 %3776
        %3778 = vrot.lane.b32.xlu0 %v3430, 16
        %v3779 = vpop.permute.xlu0 %3778
        %3780 = vrot.lane.b32.xlu0 %v3433, 16
        %v3781 = vpop.permute.xlu0 %3780
        %3782 = vrot.lane.b32.xlu0 %v3438, 16
        %v3783 = vpop.permute.xlu0 %3782
        %3784 = vrot.lane.b32.xlu0 %v3441, 16
        %v3785 = vpop.permute.xlu0 %3784
        %3802 = vrot.lane.b32.xlu0 %v3700, 24
        %v3803 = vpop.permute.xlu0 %3802
        %3804 = vrot.lane.b32.xlu0 %v3703, 24
        %v3805 = vpop.permute.xlu0 %3804
        %3806 = vrot.lane.b32.xlu0 %v3708, 24
        %v3807 = vpop.permute.xlu0 %3806
        %3808 = vrot.lane.b32.xlu0 %v3711, 24
        %v3809 = vpop.permute.xlu0 %3808
        %3810 = vrot.lane.b32.xlu0 %v3716, 24
        %v3811 = vpop.permute.xlu0 %3810
        %3812 = vrot.lane.b32.xlu0 %v3719, 24
        %v3813 = vpop.permute.xlu0 %3812
        %3814 = vrot.lane.b32.xlu0 %v3724, 24
        %v3815 = vpop.permute.xlu0 %3814
        %3816 = vrot.lane.b32.xlu0 %v3727, 24
        %v3817 = vpop.permute.xlu0 %3816
        %v3826 = vsel %vm913, %v2838, %v3739
        %v3827 = vsel %vm913, %v2841, %v3741
        %v3828 = vsel %vm913, %v2846, %v3743
        %v3829 = vsel %vm913, %v2849, %v3745
        %v3830 = vsel %vm913, %v2854, %v3747
        %v3831 = vsel %vm913, %v2857, %v3749
        %v3832 = vsel %vm913, %v2862, %v3751
        %v3833 = vsel %vm913, %v2865, %v3753
        %v3834 = vsel %vm2174, %v3826, %v3771
        %v3835 = vsel %vm2174, %v3827, %v3773
        %v3836 = vsel %vm2174, %v3828, %v3775
        %v3837 = vsel %vm2174, %v3829, %v3777
        %v3838 = vsel %vm2174, %v3830, %v3779
        %v3839 = vsel %vm2174, %v3831, %v3781
        %v3840 = vsel %vm2174, %v3832, %v3783
        %v3841 = vsel %vm2174, %v3833, %v3785
        %v3842 = vsel %vm2183, %v3834, %v3803
        %v3843 = vsel %vm2183, %v3835, %v3805
        %v3844 = vsel %vm2183, %v3836, %v3807
        %v3845 = vsel %vm2183, %v3837, %v3809
        %v3846 = vsel %vm2183, %v3838, %v3811
        %v3847 = vsel %vm2183, %v3839, %v3813
        %v3848 = vsel %vm2183, %v3840, %v3815
        %v3849 = vsel %vm2183, %v3841, %v3817
        %v3850 = vadd.f32 %v2192, %v3842
        %v3851 = vadd.f32 %v2193, %v3843
        %v3852 = vadd.f32 %v2194, %v3844
        %v3853 = vadd.f32 %v2195, %v3845
        %v3854 = vadd.f32 %v2196, %v3846
        %v3855 = vadd.f32 %v2197, %v3847
        %v3856 = vadd.f32 %v2198, %v3848
        %v3857 = vadd.f32 %v2199, %v3849
        %v3858 = vsel %vm649, %v3850, 0.0
        %3859 = vadd.xlane.f32.xlu0 %v3858
        %v3860 = vpop.xlane.xlu0 %3859
        %v3861 = vsel %vm649, %v3851, 0.0
        %3862 = vadd.xlane.f32.xlu0 %v3861
        %v3863 = vpop.xlane.xlu0 %3862
        %v3864 = vsel %vm649, %v3852, 0.0
        %3865 = vadd.xlane.f32.xlu0 %v3864
        %v3866 = vpop.xlane.xlu0 %3865
        %v3867 = vsel %vm649, %v3853, 0.0
        %3868 = vadd.xlane.f32.xlu0 %v3867
        %v3869 = vpop.xlane.xlu0 %3868
        %v3870 = vsel %vm649, %v3854, 0.0
        %3871 = vadd.xlane.f32.xlu0 %v3870
        %v3872 = vpop.xlane.xlu0 %3871
        %v3873 = vsel %vm649, %v3855, 0.0
        %3874 = vadd.xlane.f32.xlu0 %v3873
        %v3875 = vpop.xlane.xlu0 %3874
        %v3876 = vsel %vm649, %v3856, 0.0
        %3877 = vadd.xlane.f32.xlu0 %v3876
        %v3878 = vpop.xlane.xlu0 %3877
        %v3879 = vsel %vm649, %v3857, 0.0
        %3880 = vadd.xlane.f32.xlu0 %v3879
        %v3881 = vpop.xlane.xlu0 %3880
        %v3882 = vmul.f32 %v3860, %v674
        %v3883 = vmul.f32 %v3863, %v674
        %v3884 = vmul.f32 %v3866, %v674
        %v3885 = vmul.f32 %v3869, %v674
        %v3886 = vmul.f32 %v3872, %v674
        %v3887 = vmul.f32 %v3875, %v674
        %v3888 = vmul.f32 %v3878, %v674
        %v3889 = vmul.f32 %v3881, %v674
        %v3890 = vsub.f32 %v3850, %v3882
        %v3891 = vsub.f32 %v3851, %v3883
        %v3892 = vsub.f32 %v3852, %v3884
        %v3893 = vsub.f32 %v3853, %v3885
        %v3894 = vsub.f32 %v3854, %v3886
        %v3895 = vsub.f32 %v3855, %v3887
        %v3896 = vsub.f32 %v3856, %v3888
        %v3897 = vsub.f32 %v3857, %v3889
        %v3898 = vmul.f32 %v3890, %v3890
        %v3899 = vmul.f32 %v3891, %v3891
        %v3900 = vmul.f32 %v3892, %v3892
        %v3901 = vmul.f32 %v3893, %v3893
        %v3902 = vmul.f32 %v3894, %v3894
        %v3903 = vmul.f32 %v3895, %v3895
        %v3904 = vmul.f32 %v3896, %v3896
        %v3905 = vmul.f32 %v3897, %v3897
        %v3906 = vsel %vm649, %v3898, 0.0
        %3907 = vadd.xlane.f32.xlu0 %v3906
        %v3908 = vpop.xlane.xlu0 %3907
        %v3909 = vsel %vm649, %v3899, 0.0
        %3910 = vadd.xlane.f32.xlu0 %v3909
        %v3911 = vpop.xlane.xlu0 %3910
        %v3912 = vsel %vm649, %v3900, 0.0
        %3913 = vadd.xlane.f32.xlu0 %v3912
        %v3914 = vpop.xlane.xlu0 %3913
        %v3915 = vsel %vm649, %v3901, 0.0
        %3916 = vadd.xlane.f32.xlu0 %v3915
        %v3917 = vpop.xlane.xlu0 %3916
        %v3918 = vsel %vm649, %v3902, 0.0
        %3919 = vadd.xlane.f32.xlu0 %v3918
        %v3920 = vpop.xlane.xlu0 %3919
        %v3921 = vsel %vm649, %v3903, 0.0
        %3922 = vadd.xlane.f32.xlu0 %v3921
        %v3923 = vpop.xlane.xlu0 %3922
        %v3924 = vsel %vm649, %v3904, 0.0
        %3925 = vadd.xlane.f32.xlu0 %v3924
        %v3926 = vpop.xlane.xlu0 %3925
        %v3927 = vsel %vm649, %v3905, 0.0
        %3928 = vadd.xlane.f32.xlu0 %v3927
        %v3929 = vpop.xlane.xlu0 %3928
        %v3930 = vmul.f32 %v3908, %v674
        %v3931 = vmul.f32 %v3911, %v674
        %v3932 = vmul.f32 %v3914, %v674
        %v3933 = vmul.f32 %v3917, %v674
        %v3934 = vmul.f32 %v3920, %v674
        %v3935 = vmul.f32 %v3923, %v674
        %v3936 = vmul.f32 %v3926, %v674
        %v3937 = vmul.f32 %v3929, %v674
        %v3938 = vadd.f32 %v3930, 1e-05
        %v3939 = vadd.f32 %v3931, 1e-05
        %v3940 = vadd.f32 %v3932, 1e-05
        %v3941 = vadd.f32 %v3933, 1e-05
        %v3942 = vadd.f32 %v3934, 1e-05
        %v3943 = vadd.f32 %v3935, 1e-05
        %v3944 = vadd.f32 %v3936, 1e-05
        %v3945 = vadd.f32 %v3937, 1e-05
        %v3946 = vrsqrt.pop %v3938
        %v3947 = vrsqrt.pop %v3939
        %v3948 = vrsqrt.pop %v3940
        %v3949 = vrsqrt.pop %v3941
        %v3950 = vrsqrt.pop %v3942
        %v3951 = vrsqrt.pop %v3943
        %v3952 = vrsqrt.pop %v3944
        %v3953 = vrsqrt.pop %v3945
        %v3954 = vmul.f32 %v3890, %v3946
        %v3955 = vmul.f32 %v3891, %v3947
        %v3956 = vmul.f32 %v3892, %v3948
        %v3957 = vmul.f32 %v3893, %v3949
        %v3958 = vmul.f32 %v3894, %v3950
        %v3959 = vmul.f32 %v3895, %v3951
        %v3960 = vmul.f32 %v3896, %v3952
        %v3961 = vmul.f32 %v3897, %v3953
        %v3962 = vld [vmem:[%s12] sm:$0x1]
        %v3964 = vlaneseq
        %v3965 = vshrl.u32 %v3964, 7
        %v3966 = vsub.s32 0, %v3965
        %v3967 = vrot.slane %v3962, %v3966
        %v3969 = vmul.f32 %v3954, %v3967
        %v3970 = vmul.f32 %v3955, %v3967
        %v3971 = vmul.f32 %v3956, %v3967
        %v3972 = vmul.f32 %v3957, %v3967
        %v3973 = vmul.f32 %v3958, %v3967
        %v3974 = vmul.f32 %v3959, %v3967
        %v3975 = vmul.f32 %v3960, %v3967
        %v3976 = vmul.f32 %v3961, %v3967
        %v3977 = vld [vmem:[%s13] sm:$0x1]
        %v3979 = vlaneseq
        %v3980 = vshrl.u32 %v3979, 7
        %v3981 = vsub.s32 0, %v3980
        %v3982 = vrot.slane %v3977, %v3981
        %v3984 = vadd.f32 %v3969, %v3982
        %v3985 = vadd.f32 %v3970, %v3982
        %v3986 = vadd.f32 %v3971, %v3982
        %v3987 = vadd.f32 %v3972, %v3982
        %v3988 = vadd.f32 %v3973, %v3982
        %v3989 = vadd.f32 %v3974, %v3982
        %v3990 = vadd.f32 %v3975, %v3982
        %v3991 = vadd.f32 %v3976, %v3982
        %v3992 = vpack.c.bf16 %v3985, %v3984
        %v3993 = vpack.c.bf16 %v3987, %v3986
        %v3994 = vpack.c.bf16 %v3989, %v3988
        %v3995 = vpack.c.bf16 %v3991, %v3990
        %v3996 = vld [vmem:[%s14] sm:$0xf]
        %v3997 = vld [vmem:[%s14 + $0x4] sm:$0xf]
        %v3998 = vld [vmem:[%s14 + $0x8] sm:$0xf]
        %v3999 = vld [vmem:[%s14 + $0xc] sm:$0xf]
        %v4000 = vld [vmem:[%s15] sm:$0x1]
        %v4002 = vlaneseq
        %v4003 = vshrl.u32 %v4002, 7
        %v4004 = vsub.s32 0, %v4003
        %v4005 = vrot.slane %v4000, %v4004
        %v4011 = vunpack.c.l.b16 %v3996
        %v4012 = vunpack.c.l.b16 %v3997
        %v4013 = vunpack.c.l.b16 %v3998
        %v4014 = vunpack.c.l.b16 %v3999
        %v4015 = vpack.c.b16 %v4012, %v4011
        %v4016 = vpack.c.b16 %v4014, %v4013
        %v4020 = vsel %vm649, %v3992, 0
        %v4023 = vsel %vm649, %v3993, 0
        %v4026 = vsel %vm649, %v3994, 0
        %v4029 = vsel %vm649, %v3995, 0
        %4031 = vmatprep.subr.bf16.mxu0 0
        %4032 = vmatpush1.bf16.msra.mxu0 0
        %4033 = vmatprep.subr.bf16.mxu0 0
        %4034 = vmatpush1.bf16.msra.mxu0 0
        %4035 = vmatprep.subr.bf16.mxu0 0
        %4036 = vmatpush1.bf16.msra.mxu0 0
        %4037 = vmatprep.subr.bf16.mxu0 0
        %4038 = vmatpush1.bf16.msra.mxu0 0
        %4039 = vmatprep.subr.bf16.mxu0 0
        %4040 = vmatpush1.bf16.msra.mxu0 0
        %4041 = vmatprep.subr.bf16.mxu0 0
        %4042 = vmatpush1.bf16.msra.mxu0 0
        %4043 = vmatprep.subr.bf16.mxu0 0
        %4044 = vmatpush1.bf16.msra.mxu0 %v4016
        %4045 = vmatprep.subr.bf16.mxu0 0
        %4046 = vmatpush1.bf16.msra.mxu0 %v4015
        %4047 = vmatprep.subr.bf16.mxu0 0
        %4048 = vmatpush2.bf16.msra.mxu0 0
        %4049 = vmatprep.subr.bf16.mxu0 0
        %4050 = vmatpush2.bf16.msra.mxu0 0
        %4051 = vmatprep.subr.bf16.mxu0 0
        %4052 = vmatpush2.bf16.msra.mxu0 0
        %4053 = vmatprep.subr.bf16.mxu0 0
        %4054 = vmatpush2.bf16.msra.mxu0 0
        %4055 = vmatprep.subr.bf16.mxu0 0
        %4056 = vmatpush2.bf16.msra.mxu0 0
        %4057 = vmatprep.subr.bf16.mxu0 0
        %4058 = vmatpush2.bf16.msra.mxu0 0
        %4059 = vmatprep.subr.bf16.mxu0 0
        %4060 = vmatpush2.bf16.msra.mxu0 0
        %4061 = vmatprep.subr.bf16.mxu0 0
        %4062 = vmatpush2.bf16.msra.mxu0 0
        %4063 = vmatprep.mubr.bf16.mxu0 0
        %4064 = vmatmul.mubr.bf16.gmra.mxu0 %v4020
        %v4065 = vpop.f32.mrf.mxu0
        %v4066 = vadd.f32 %v4005, %v4065
        %v4067 = vpop.f32.mrf.mxu0
        %v4068 = vpop.f32.mrf.mxu0
        %v4069 = vadd.f32 %v4005, %v4068
        %v4070 = vpop.f32.mrf.mxu0
        %4071 = vmatprep.mubr.bf16.mxu0 0
        %4072 = vmatmul.mubr.bf16.gmra.mxu0 %v4023
        %v4073 = vpop.f32.mrf.mxu0
        %v4074 = vadd.f32 %v4005, %v4073
        %v4075 = vpop.f32.mrf.mxu0
        %v4076 = vpop.f32.mrf.mxu0
        %v4077 = vadd.f32 %v4005, %v4076
        %v4078 = vpop.f32.mrf.mxu0
        %4079 = vmatprep.mubr.bf16.mxu0 0
        %4080 = vmatmul.mubr.bf16.gmra.mxu0 %v4026
        %v4081 = vpop.f32.mrf.mxu0
        %v4082 = vadd.f32 %v4005, %v4081
        %v4083 = vpop.f32.mrf.mxu0
        %v4084 = vpop.f32.mrf.mxu0
        %v4085 = vadd.f32 %v4005, %v4084
        %v4086 = vpop.f32.mrf.mxu0
        %4087 = vmatprep.mubr.bf16.mxu0 0
        %4088 = vmatmul.mubr.bf16.gmra.mxu0 %v4029
        %v4089 = vpop.f32.mrf.mxu0
        %v4090 = vadd.f32 %v4005, %v4089
        %v4091 = vpop.f32.mrf.mxu0
        %v4092 = vpop.f32.mrf.mxu0
        %v4093 = vadd.f32 %v4005, %v4092
        %v4094 = vpop.f32.mrf.mxu0
        %4095 = vdwg.mxu0
        %4096 = vst.msk [vmem:[%s639] sm:$0xff] %vm649, %v4066
        %4097 = vst.msk [vmem:[%s639 + $0x8] sm:$0xff] %vm649, %v4069
        %4098 = vst.msk [vmem:[%s639 + $0x10] sm:$0xff] %vm649, %v4074
        %4099 = vst.msk [vmem:[%s639 + $0x18] sm:$0xff] %vm649, %v4077
        %4100 = vst.msk [vmem:[%s639 + $0x20] sm:$0xff] %vm649, %v4082
        %4101 = vst.msk [vmem:[%s639 + $0x28] sm:$0xff] %vm649, %v4085
        %4102 = vst.msk [vmem:[%s639 + $0x30] sm:$0xff] %vm649, %v4090
        %4103 = vst.msk [vmem:[%s639 + $0x38] sm:$0xff] %vm649, %v4093
        %p4104 = scmp.lt.s32.totalorder %s29, 1
        %s4105 = scalar_select %p4104, %s29, 1
        %s4106 = smul.addr %s4105, 8
        %s4107 = smul.addr %s4106, 8
        %s4108 = scalar_lea.vmem %s17, %s4107
        // Predicated region
        $region93: #{nca2d_diffusion_forward.1} parent=87 // pred_check
          %p4109 = pneg %p434
        $region94: #{nca2d_diffusion_forward.1} parent=87 // pred_check_branch
          %4111 = sbr.rel (%p4109) target = $region96
        $region95: #{nca2d_diffusion_forward.1} parent=87 // pred_region
          _
        $region96: #{nca2d_diffusion_forward.1} parent=87 // pred_fallthru
          _
      $region88: #{nca2d_diffusion_forward.1} parent=5 // pred_fallthru
        _
      %p4112 = scmp.le.s32.totalorder 2, %s24
      // Predicated region
      $region97: #{nca2d_diffusion_forward.1} parent=5 // pred_check
        %p4113 = pneg %p4112
      $region98: #{nca2d_diffusion_forward.1} parent=5 // pred_check_branch
        %4115 = sbr.rel (%p4113) target = $region100
      $region99: #{nca2d_diffusion_forward.1} parent=5 // pred_region
        %s4116 = ssub.s32 %s24, 2
        // Predicated region
        $region101: #{nca2d_diffusion_forward.1} parent=99 // pred_check
          %p4117 = pneg %p440
        $region102: #{nca2d_diffusion_forward.1} parent=99 // pred_check_branch
          %4119 = sbr.rel (%p4117) target = $region104
        $region103: #{nca2d_diffusion_forward.1} parent=99 // pred_region
          %p4120 = scmp.lt.s32.totalorder %s30, 1
          %s4121 = scalar_select %p4120, %s30, 1
          %s4122 = smul.addr %s4121, 8
          %s4123 = smul.addr %s4122, 8
          %s4124 = scalar_lea.vmem %s17, %s4123
        $region104: #{nca2d_diffusion_forward.1} parent=99 // pred_fallthru
          _
      $region100: #{nca2d_diffusion_forward.1} parent=5 // pred_fallthru
        _
    $region6: #{nca2d_diffusion_forward.1} parent=1 // loop_footer
      %s28 = sadd.s32 1, %s24
    $region7: #{nca2d_diffusion_forward.1} parent=1 // loop_footer_branch
      %23 = sbr.rel target = $region3
    $region8: #{nca2d_diffusion_forward.1} parent=1 // loop_exit
      _
    %4125 = vsyncpa [#allocation3], 1
    %s4126 = scalar_lea.sflag [#allocation3], 1
    %4127 = vsyncpa %s4126, 1

</llo_original>
